<compile_context>
chip_gen: v7x
topology: tpu7x:2x2x1
jax: 0.10.0
libtpu: 0.0.40
codegen_flags: <defaults>
</compile_context>

<pallas_src>
import functools
import math

import jax
import jax.numpy as jnp
import numpy as np
from jax.experimental import pallas as pl
from jax.experimental.pallas import tpu as pltpu


def _round_up(x, m):
    return pl.cdiv(x, m) * m


def _vmem_block_bytes(shape, itemsize):
    r, c = shape
    return int(_round_up(r, 8)) * int(_round_up(c, 128)) * itemsize


def _interaction_kernel(atom_ref, force_ref, dir_ref, dist_ref, ei_row_ref, ei_col_ref,
                        w1a_ref, b1a_ref, w1b_ref, b1b_ref, we_ref,
                        wqa_ref, wqb_ref, wu3_ref,
                        out_ref, node_bf_ref, payload_ref, acc_ref, *, n_edges):
    f32 = jnp.float32
    bf16 = jnp.bfloat16
    n_pad, f_pad = atom_ref.shape
    tile_e = dist_ref.shape[0]
    t = pl.program_id(0)

    def bdot(a, b):
        # bf16 MXU operands, f32 accumulation.
        return jnp.dot(a.astype(bf16), b.astype(bf16), preferred_element_type=f32)

    def silu(x):
        return x * jax.nn.sigmoid(x)

    # ---- one-time phase (grid step 0): node-part MLP + accumulator init ----
    @pl.when(t == 0)
    def _init():
        h = silu(bdot(atom_ref[...], w1a_ref[...]) + b1a_ref[...])
        mn = bdot(h, w1b_ref[...]) + b1b_ref[...]              # message_nodepart(atom_node)
        node_bf_ref[:, :f_pad] = mn.astype(bf16)               # packed node slab: [mn | force_xyz]
        node_bf_ref[:, f_pad:] = force_ref[...].astype(bf16)
        acc_ref[...] = jnp.zeros_like(acc_ref)

    # ---- per-edge-tile phase ----
    idx_row = ei_row_ref[...]                                  # (2, tE)  int32
    idx_col = ei_col_ref[...]                                  # (tE, 2)  int32
    lane_nodes = jax.lax.broadcasted_iota(jnp.int32, (tile_e, n_pad), 1)
    sub_nodes = jax.lax.broadcasted_iota(jnp.int32, (n_pad, tile_e), 0)
    lane_edges = jax.lax.broadcasted_iota(jnp.int32, (n_pad, tile_e), 1)
    valid = (lane_edges + t * tile_e) < n_edges                # mask padded edges in scatter

    g0 = (idx_col[:, 0:1] == lane_nodes).astype(bf16)          # (tE, N) gather by edge_index[0]
    g1 = (idx_col[:, 1:2] == lane_nodes).astype(bf16)          # (tE, N) gather by edge_index[1]
    s0 = ((idx_row[0:1, :] == sub_nodes) & valid).astype(bf16)  # (N, tE) scatter-add on edge_index[0]

    mn_i = bdot(g0, node_bf_ref[:, :f_pad])                    # (tE, F)   nodepart[ei0]
    gj = bdot(g1, node_bf_ref[...])                            # (tE, 4F)  [nodepart | force][ei1]
    mn_j = gj[:, :f_pad]
    fj = gj[:, f_pad:]                                         # (tE, 3F)

    edgepart = bdot(dist_ref[...], we_ref[...])                # (tE, F)   message_edgepart
    message = edgepart * mn_i * mn_j                           # (tE, F)   f32
    payload_ref[:, :f_pad] = message.astype(bf16)

    # fused equiv_message1/equiv_message2 inv-parts: 2 matmuls, 1 silu issue
    q12 = bdot(silu(bdot(message, wqa_ref[...])), wqb_ref[...])   # (tE, 2F)
    q1 = q12[:, :f_pad]
    q2 = q12[:, f_pad:]

    dirs = dir_ref[...]                                        # (tE, 3)
    for d in range(3):
        payload_ref[:, (d + 1) * f_pad:(d + 2) * f_pad] = (
            q1 * dirs[:, d:d + 1] + q2 * fj[:, d * f_pad:(d + 1) * f_pad]).astype(bf16)

    acc_ref[...] += bdot(s0, payload_ref[...])                 # (N, 4F) scatter-add on the MXU

    # ---- finalize (last grid step) ----
    @pl.when(t == pl.num_programs(0) - 1)
    def _finalize():
        acc = acc_ref[...]
        atom_new = atom_ref[...] + acc[:, :f_pad]              # atom_node + inv_update1
        force_new = force_ref[...] + acc[:, f_pad:]            # force_node + force_update (N, 3F)
        u = bdot(force_new, wu3_ref[...])                      # equiv_update, block-diag -> one matmul
        prod = force_new * u
        inv2 = prod[:, :f_pad] + prod[:, f_pad:2 * f_pad] + prod[:, 2 * f_pad:]
        # TODO(synk): optional LayerNorm (layer_norm=True) would go here.
        out_ref[:, :f_pad] = atom_new + inv2
        out_ref[:, f_pad:] = force_new


def init_params(key, n_features=32, n_basis=16):
    F, B = n_features, n_basis
    ks = jax.random.split(key, 10)

    def lin(k, fan_in, shape):
        bound = 1.0 / math.sqrt(fan_in)
        return jax.random.uniform(k, shape, jnp.float32, -bound, bound)

    # weights stored (in, out) so forward is x @ W + b  (== torch Linear)
    return {
        'w1a': lin(ks[0], F, (F, F)), 'b1a': lin(ks[1], F, (F,)),
        'w1b': lin(ks[2], F, (F, F)), 'b1b': lin(ks[3], F, (F,)),
        'we': lin(ks[4], B, (B, F)),
        'wq1a': lin(ks[5], F, (F, F)), 'wq1b': lin(ks[6], F, (F, F)),
        'wq2a': lin(ks[7], F, (F, F)), 'wq2b': lin(ks[8], F, (F, F)),
        'wu': lin(ks[9], F, (F, F)),
    }


def interactionnet_forward(params, atom_node, force_node, disp_node,
                           dir_edge, dist_edge, edge_index, *, tile_e=512):
    N, F = atom_node.shape
    E, B = dist_edge.shape
    f32, bf16 = jnp.float32, jnp.bfloat16

    F_pad = _round_up(F, 128)
    B_pad = _round_up(B, 8)
    N_pad = _round_up(N, 8)
    # big edge tiles (per-step overhead >> per-tile compute at these shapes);
    # clamp so small problems run in exactly one grid step.
    tile_e = min(_round_up(tile_e, 128), _round_up(E, 128))
    E_pad = _round_up(E, tile_e)
    n_tiles = E_pad // tile_e

    def pad2(x, r, c):
        return jnp.pad(x, ((0, r - x.shape[0]), (0, c - x.shape[1])))

    # -------- inputs: lane-dense node arrays, lean streamed edge arrays --------
    atom_p = pad2(atom_node.astype(f32), N_pad, F_pad)
    force_p = jnp.pad(force_node.astype(f32),
                      ((0, N_pad - N), (0, 0), (0, F_pad - F))).reshape(N_pad, 3 * F_pad)
    dir_p = jnp.pad(dir_edge.astype(f32), ((0, E_pad - E), (0, 0)))          # (E_pad, 3), no lane pad
    dist_p = pad2(dist_edge, E_pad, B_pad).astype(bf16)                      # (E_pad, B_pad) bf16
    ei_row = jnp.pad(edge_index.astype(jnp.int32), ((0, 0), (0, E_pad - E)))  # (2, E_pad)
    ei_col = jnp.transpose(ei_row)                                           # (E_pad, 2)

    # -------- weights: padded bf16 MXU operands (biases stay f32) --------
    def wpad(w):
        return pad2(w, F_pad, F_pad)

    w1a = wpad(params['w1a']).astype(bf16)
    w1b = wpad(params['w1b']).astype(bf16)
    wqa = jnp.concatenate([wpad(params['wq1a']), wpad(params['wq2a'])], axis=1).astype(bf16)
    wqb = jax.scipy.linalg.block_diag(wpad(params['wq1b']), wpad(params['wq2b'])).astype(bf16)
    we = pad2(params['we'], B_pad, F_pad).astype(bf16)
    wu_p = wpad(params['wu'])
    wu3 = jax.scipy.linalg.block_diag(wu_p, wu_p, wu_p).astype(bf16)          # (3F, 3F)
    b1a = jnp.pad(params['b1a'], (0, F_pad - F)).reshape(1, F_pad).astype(f32)
    b1b = jnp.pad(params['b1b'], (0, F_pad - F)).reshape(1, F_pad).astype(f32)

    const = lambda t: (0, 0)
    grid_spec = pltpu.PrefetchScalarGridSpec(
        num_scalar_prefetch=0,
        grid=(n_tiles,),
        in_specs=[
            pl.BlockSpec((N_pad, F_pad), const),                 # atom_node (resident)
            pl.BlockSpec((N_pad, 3 * F_pad), const),             # force_node, xyz stacked (resident)
            pl.BlockSpec((tile_e, 3), lambda t: (t, 0)),         # dir_edge (E, 3) streamed
            pl.BlockSpec((tile_e, B_pad), lambda t: (t, 0)),     # dist_edge (bf16) streamed
            pl.BlockSpec((2, tile_e), lambda t: (0, t)),         # edge_index, row layout
            pl.BlockSpec((tile_e, 2), lambda t: (t, 0)),         # edge_index, col layout
            pl.BlockSpec((F_pad, F_pad), const),                 # w1a
            pl.BlockSpec((1, F_pad), const),                     # b1a
            pl.BlockSpec((F_pad, F_pad), const),                 # w1b
            pl.BlockSpec((1, F_pad), const),                     # b1b
            pl.BlockSpec((B_pad, F_pad), const),                 # we
            pl.BlockSpec((F_pad, 2 * F_pad), const),             # wqa = [wq1a | wq2a]
            pl.BlockSpec((2 * F_pad, 2 * F_pad), const),         # wqb = blkdiag(wq1b, wq2b)
            pl.BlockSpec((3 * F_pad, 3 * F_pad), const),         # wu3 (block-diag equiv_update)
        ],
        out_specs=pl.BlockSpec((N_pad, 4 * F_pad), const),       # packed [atom | force_xyz]
        scratch_shapes=[
            pltpu.VMEM((N_pad, 4 * F_pad), bf16),                # node slab [nodepart | force] (gathers)
            pltpu.VMEM((tile_e, 4 * F_pad), bf16),               # payload staging (concat-free)
            pltpu.VMEM((N_pad, 4 * F_pad), f32),                 # scatter accumulator
        ],
    )

    # ----- VMEM budget derived from actual block sizes (v7x has only 64 MiB) -----
    resident_bytes = (
        _vmem_block_bytes((N_pad, F_pad), 4) + _vmem_block_bytes((N_pad, 3 * F_pad), 4)
        + 2 * _vmem_block_bytes((F_pad, F_pad), 2)
        + 2 * _vmem_block_bytes((1, F_pad), 4)
        + _vmem_block_bytes((B_pad, F_pad), 2)
        + _vmem_block_bytes((F_pad, 2 * F_pad), 2)
        + _vmem_block_bytes((2 * F_pad, 2 * F_pad), 2)
        + _vmem_block_bytes((3 * F_pad, 3 * F_pad), 2)
        + _vmem_block_bytes((N_pad, 4 * F_pad), 4))              # output block
    streamed_bytes = (
        _vmem_block_bytes((tile_e, 3), 4) + _vmem_block_bytes((tile_e, B_pad), 2)
        + _vmem_block_bytes((2, tile_e), 4) + _vmem_block_bytes((tile_e, 2), 4))
    scratch_bytes = (_vmem_block_bytes((N_pad, 4 * F_pad), 2)
                     + _vmem_block_bytes((tile_e, 4 * F_pad), 2)
                     + _vmem_block_bytes((N_pad, 4 * F_pad), 4))
    vmem_limit = 2 * (resident_bytes + streamed_bytes) + scratch_bytes + (16 << 20)
    vmem_limit = int(min(max(vmem_limit, 32 << 20), 96 << 20))

    flops = (4 * N_pad * F_pad * F_pad                           # node MLP (2 matmuls)
             + 2 * E_pad * (N_pad * F_pad                        # g0 gather
                            + 4 * N_pad * F_pad                  # fused g1 gather
                            + B_pad * F_pad                      # edgepart
                            + 4 * F_pad * F_pad                  # fused q-MLP (2 matmuls)
                            + 4 * N_pad * F_pad)                 # scatter
             + 2 * N_pad * 9 * F_pad * F_pad)                    # equiv_update
    transcendentals = N_pad * F_pad + 2 * E_pad * F_pad
    inputs = (atom_p, force_p, dir_p, dist_p, ei_row, ei_col,
              w1a, b1a, w1b, b1b, we, wqa, wqb, wu3)
    bytes_accessed = sum(int(x.size) * x.dtype.itemsize for x in inputs)
    bytes_accessed += N_pad * 4 * F_pad * 4

    kernel = functools.partial(_interaction_kernel, n_edges=E)
    out = pl.pallas_call(
        kernel,
        out_shape=jax.ShapeDtypeStruct((N_pad, 4 * F_pad), f32),
        grid_spec=grid_spec,
        compiler_params=pltpu.CompilerParams(
            dimension_semantics=("arbitrary",),          # edge axis is a scatter reduction
            vmem_limit_bytes=vmem_limit),
        cost_estimate=pl.CostEstimate(flops=int(flops),
                                      transcendentals=int(transcendentals),
                                      bytes_accessed=int(bytes_accessed)),
    )(*inputs)

    atom_out = out[:N, :F]
    force_out = out[:, F_pad:].reshape(N_pad, 3, F_pad)[:N, :, :F]
    return atom_out, force_out, disp_node


def interaction_reference(params, atom_node, force_node, disp_node, dir_edge, dist_edge, edge_index):
    """Pure-JAX f32 reference of InteractionNet.forward (layer_norm=False)."""
    silu = lambda x: x * jax.nn.sigmoid(x)
    N = atom_node.shape[0]
    i0, i1 = edge_index[0], edge_index[1]
    mn = silu(atom_node @ params['w1a'] + params['b1a']) @ params['w1b'] + params['b1b']
    me = dist_edge @ params['we']
    message = me * mn[i0] * mn[i1]
    atom_new = atom_node + jax.ops.segment_sum(message, i0, num_segments=N)
    q1 = silu(message @ params['wq1a']) @ params['wq1b']
    q2 = silu(message @ params['wq2a']) @ params['wq2b']
    eq1 = q1[:, None, :] * dir_edge[:, :, None]
    eq2 = q2[:, None, :] * force_node[i1]
    force_new = force_node + jax.ops.segment_sum(eq1 + eq2, i0, num_segments=N)
    inv2 = jnp.sum(force_new * (force_new @ params['wu']), axis=1)
    return atom_new + inv2, force_new, disp_node


if __name__ == "__main__":
    key = jax.random.PRNGKey(0)
    kp, ka, kf, kd, kb, ke = jax.random.split(key, 6)

    N, E, F, B = 8, 16, 32, 16                       # nodes, edges, n_features, n_basis
    params = init_params(kp, F, B)

    atom_node = jax.random.normal(ka, (N, F), jnp.float32)
    force_node = 0.1 * jax.random.normal(kf, (N, 3, F), jnp.float32)
    disp_node = jnp.zeros((N, 3, F), jnp.float32)
    d = jax.random.normal(kd, (E, 3), jnp.float32)
    dir_edge = d / jnp.linalg.norm(d, axis=-1, keepdims=True)
    dist_edge = jax.random.uniform(kb, (E, B), jnp.float32)
    edge_index = jax.random.randint(ke, (2, E), 0, N, dtype=jnp.int32)

    atom_out, force_out, disp_out = interactionnet_forward(
        params, atom_node, force_node, disp_node, dir_edge, dist_edge, edge_index)
    jax.block_until_ready(atom_out)
    jax.block_until_ready(force_out)

    a_ref, f_ref, _ = interaction_reference(
        params, atom_node, force_node, disp_node, dir_edge, dist_edge, edge_index)
    np.testing.assert_allclose(np.asarray(atom_out), np.asarray(a_ref), rtol=5e-2, atol=5e-2)
    np.testing.assert_allclose(np.asarray(force_out), np.asarray(f_ref), rtol=5e-2, atol=5e-2)
    assert atom_out.shape == (N, F) and force_out.shape == (N, 3, F)
    print("KERNEL_OK")
</pallas_src>

<mosaic_0001>
module attributes {stable_mosaic.version = 11 : i64} {
  func.func @_interaction_kernel(%arg0: i32, %arg1: memref<8x128xf32, #tpu.memory_space<vmem>>, %arg2: memref<8x384xf32, #tpu.memory_space<vmem>>, %arg3: memref<128x3xf32, #tpu.memory_space<vmem>>, %arg4: memref<128x16xbf16, #tpu.memory_space<vmem>>, %arg5: memref<2x128xi32, #tpu.memory_space<vmem>>, %arg6: memref<128x2xi32, #tpu.memory_space<vmem>>, %arg7: memref<128x128xbf16, #tpu.memory_space<vmem>>, %arg8: memref<1x128xf32, #tpu.memory_space<vmem>>, %arg9: memref<128x128xbf16, #tpu.memory_space<vmem>>, %arg10: memref<1x128xf32, #tpu.memory_space<vmem>>, %arg11: memref<16x128xbf16, #tpu.memory_space<vmem>>, %arg12: memref<128x256xbf16, #tpu.memory_space<vmem>>, %arg13: memref<256x256xbf16, #tpu.memory_space<vmem>>, %arg14: memref<384x384xbf16, #tpu.memory_space<vmem>>, %arg15: memref<8x512xf32, #tpu.memory_space<vmem>>, %arg16: memref<8x512xbf16, #tpu.memory_space<vmem>>, %arg17: memref<128x512xbf16, #tpu.memory_space<vmem>>, %arg18: memref<8x512xf32, #tpu.memory_space<vmem>>) attributes {dimension_semantics = [#tpu.dimension_semantics<arbitrary>], iteration_bounds = array<i64: 1>, scalar_prefetch = 0 : i64, scratch_operands = 3 : i64, tpu.core_type = #tpu.core_type<tc>, window_params = [{pipeline_mode = #tpu.pipeline_mode<synchronous>, transform_indices = @transform_0, window_bounds = array<i64: 8, 128>}, {pipeline_mode = #tpu.pipeline_mode<synchronous>, transform_indices = @transform_1, window_bounds = array<i64: 8, 384>}, {transform_indices = @transform_2, window_bounds = array<i64: 128, 3>}, {transform_indices = @transform_3, window_bounds = array<i64: 128, 16>}, {transform_indices = @transform_4, window_bounds = array<i64: 2, 128>}, {transform_indices = @transform_5, window_bounds = array<i64: 128, 2>}, {pipeline_mode = #tpu.pipeline_mode<synchronous>, transform_indices = @transform_6, window_bounds = array<i64: 128, 128>}, {pipeline_mode = #tpu.pipeline_mode<synchronous>, transform_indices = @transform_7, window_bounds = array<i64: 1, 128>}, {pipeline_mode = #tpu.pipeline_mode<synchronous>, transform_indices = @transform_8, window_bounds = array<i64: 128, 128>}, {pipeline_mode = #tpu.pipeline_mode<synchronous>, transform_indices = @transform_9, window_bounds = array<i64: 1, 128>}, {pipeline_mode = #tpu.pipeline_mode<synchronous>, transform_indices = @transform_10, window_bounds = array<i64: 16, 128>}, {pipeline_mode = #tpu.pipeline_mode<synchronous>, transform_indices = @transform_11, window_bounds = array<i64: 128, 256>}, {pipeline_mode = #tpu.pipeline_mode<synchronous>, transform_indices = @transform_12, window_bounds = array<i64: 256, 256>}, {pipeline_mode = #tpu.pipeline_mode<synchronous>, transform_indices = @transform_13, window_bounds = array<i64: 384, 384>}, {pipeline_mode = #tpu.pipeline_mode<synchronous>, transform_indices = @transform_14, window_bounds = array<i64: 8, 512>}]} {
    %c0_i32 = arith.constant 0 : i32
    %0 = arith.cmpi eq, %arg0, %c0_i32 : i32
    %1 = arith.extui %0 : i1 to i32
    %c0_i32_0 = arith.constant 0 : i32
    %2 = arith.cmpi ne, %1, %c0_i32_0 : i32
    scf.if %2 {
      %c0_37 = arith.constant 0 : index
      %c0_38 = arith.constant 0 : index
      %92 = vector.load %arg1[%c0_37, %c0_38] : memref<8x128xf32, #tpu.memory_space<vmem>>, vector<8x128xf32>
      %c0_39 = arith.constant 0 : index
      %c0_40 = arith.constant 0 : index
      %93 = vector.load %arg7[%c0_39, %c0_40] : memref<128x128xbf16, #tpu.memory_space<vmem>>, vector<128x128xbf16>
      %94 = arith.truncf %92 : vector<8x128xf32> to vector<8x128xbf16>
      %cst_41 = arith.constant dense<0.000000e+00> : vector<8x128xf32>
      %95 = tpu.matmul %94, %93, %cst_41 {dimension_numbers = #tpu.dot_dimension_numbers<[1], [0], [0], [1], [0, 0, 1, 1], [], []>} : vector<8x128xbf16>, vector<128x128xbf16>, vector<8x128xf32> -> vector<8x128xf32>
      %c0_42 = arith.constant 0 : index
      %c0_43 = arith.constant 0 : index
      %96 = vector.load %arg8[%c0_42, %c0_43] : memref<1x128xf32, #tpu.memory_space<vmem>>, vector<1x128xf32>
      %97 = vector.broadcast %96 : vector<1x128xf32> to vector<8x128xf32>
      %98 = arith.addf %95, %97 : vector<8x128xf32>
      %99 = arith.negf %98 : vector<8x128xf32>
      %100 = math.exp %99 : vector<8x128xf32>
      %cst_44 = arith.constant 1.000000e+00 : f32
      %101 = vector.broadcast %cst_44 : f32 to vector<8x128xf32>
      %102 = arith.addf %101, %100 : vector<8x128xf32>
      %103 = arith.divf %101, %102 : vector<8x128xf32>
      %104 = arith.mulf %98, %103 : vector<8x128xf32>
      %c0_45 = arith.constant 0 : index
      %c0_46 = arith.constant 0 : index
      %105 = vector.load %arg9[%c0_45, %c0_46] : memref<128x128xbf16, #tpu.memory_space<vmem>>, vector<128x128xbf16>
      %106 = arith.truncf %104 : vector<8x128xf32> to vector<8x128xbf16>
      %cst_47 = arith.constant dense<0.000000e+00> : vector<8x128xf32>
      %107 = tpu.matmul %106, %105, %cst_47 {dimension_numbers = #tpu.dot_dimension_numbers<[1], [0], [0], [1], [0, 0, 1, 1], [], []>} : vector<8x128xbf16>, vector<128x128xbf16>, vector<8x128xf32> -> vector<8x128xf32>
      %c0_48 = arith.constant 0 : index
      %c0_49 = arith.constant 0 : index
      %108 = vector.load %arg10[%c0_48, %c0_49] : memref<1x128xf32, #tpu.memory_space<vmem>>, vector<1x128xf32>
      %109 = vector.broadcast %108 : vector<1x128xf32> to vector<8x128xf32>
      %110 = arith.addf %107, %109 : vector<8x128xf32>
      %111 = arith.truncf %110 : vector<8x128xf32> to vector<8x128xbf16>
      %c0_50 = arith.constant 0 : index
      %c0_51 = arith.constant 0 : index
      %112 = vector.load %arg16[%c0_50, %c0_51] : memref<8x512xbf16, #tpu.memory_space<vmem>>, vector<8x128xbf16>
      tpu.vector_store %arg16[%c0_50, %c0_51], %111 {strides = array<i32>} : memref<8x512xbf16, #tpu.memory_space<vmem>>, vector<8x128xbf16>,
      %c0_52 = arith.constant 0 : index
      %c0_53 = arith.constant 0 : index
      %113 = vector.load %arg2[%c0_52, %c0_53] : memref<8x384xf32, #tpu.memory_space<vmem>>, vector<8x384xf32>
      %114 = arith.truncf %113 : vector<8x384xf32> to vector<8x384xbf16>
      %c0_54 = arith.constant 0 : index
      %c128_55 = arith.constant 128 : index
      %115 = vector.load %arg16[%c0_54, %c128_55] : memref<8x512xbf16, #tpu.memory_space<vmem>>, vector<8x384xbf16>
      tpu.vector_store %arg16[%c0_54, %c128_55], %114 {strides = array<i32>} : memref<8x512xbf16, #tpu.memory_space<vmem>>, vector<8x384xbf16>,
      %cst_56 = arith.constant 0.000000e+00 : f32
      %116 = vector.broadcast %cst_56 : f32 to vector<8x512xf32>
      %c0_57 = arith.constant 0 : index
      %c0_58 = arith.constant 0 : index
      %117 = vector.load %arg18[%c0_57, %c0_58] : memref<8x512xf32, #tpu.memory_space<vmem>>, vector<8x512xf32>
      tpu.vector_store %arg18[%c0_57, %c0_58], %116 {strides = array<i32>} : memref<8x512xf32, #tpu.memory_space<vmem>>, vector<8x512xf32>,
    } else {
    }
    %c0 = arith.constant 0 : index
    %c0_1 = arith.constant 0 : index
    %3 = vector.load %arg5[%c0, %c0_1] : memref<2x128xi32, #tpu.memory_space<vmem>>, vector<2x128xi32>
    %c0_2 = arith.constant 0 : index
    %c0_3 = arith.constant 0 : index
    %4 = vector.load %arg6[%c0_2, %c0_3] : memref<128x2xi32, #tpu.memory_space<vmem>>, vector<128x2xi32>
    %5 = tpu.iota {dimensions = array<i32: 1>} : vector<128x8xi32>
    %6 = tpu.iota {dimensions = array<i32: 0>} : vector<8x128xi32>
    %7 = tpu.iota {dimensions = array<i32: 1>} : vector<8x128xi32>
    %c128_i32 = arith.constant 128 : i32
    %8 = arith.muli %arg0, %c128_i32 : i32
    %9 = vector.broadcast %8 : i32 to vector<8x128xi32>
    %10 = arith.addi %7, %9 : vector<8x128xi32>
    %c16_i32 = arith.constant 16 : i32
    %11 = vector.broadcast %c16_i32 : i32 to vector<8x128xi32>
    %12 = arith.cmpi slt, %10, %11 : vector<8x128xi32>
    %13 = vector.extract_strided_slice %4 {offsets = [0, 0], sizes = [128, 1], strides = [1, 1]} : vector<128x2xi32> to vector<128x1xi32>
    %14 = vector.broadcast %13 : vector<128x1xi32> to vector<128x8xi32>
    %15 = arith.cmpi eq, %14, %5 : vector<128x8xi32>
    %16 = arith.extui %15 : vector<128x8xi1> to vector<128x8xi32>
    %17 = arith.sitofp %16 : vector<128x8xi32> to vector<128x8xf32>
    %18 = arith.truncf %17 : vector<128x8xf32> to vector<128x8xbf16>
    %19 = vector.extract_strided_slice %4 {offsets = [0, 1], sizes = [128, 1], strides = [1, 1]} : vector<128x2xi32> to vector<128x1xi32>
    %20 = vector.broadcast %19 : vector<128x1xi32> to vector<128x8xi32>
    %21 = arith.cmpi eq, %20, %5 : vector<128x8xi32>
    %22 = arith.extui %21 : vector<128x8xi1> to vector<128x8xi32>
    %23 = arith.sitofp %22 : vector<128x8xi32> to vector<128x8xf32>
    %24 = arith.truncf %23 : vector<128x8xf32> to vector<128x8xbf16>
    %25 = vector.extract_strided_slice %3 {offsets = [0, 0], sizes = [1, 128], strides = [1, 1]} : vector<2x128xi32> to vector<1x128xi32>
    %26 = vector.broadcast %25 : vector<1x128xi32> to vector<8x128xi32>
    %27 = arith.cmpi eq, %26, %6 : vector<8x128xi32>
    %28 = arith.andi %27, %12 : vector<8x128xi1>
    %29 = arith.extui %28 : vector<8x128xi1> to vector<8x128xi32>
    %30 = arith.sitofp %29 : vector<8x128xi32> to vector<8x128xf32>
    %31 = arith.truncf %30 : vector<8x128xf32> to vector<8x128xbf16>
    %c0_4 = arith.constant 0 : index
    %c0_5 = arith.constant 0 : index
    %32 = vector.load %arg16[%c0_4, %c0_5] : memref<8x512xbf16, #tpu.memory_space<vmem>>, vector<8x128xbf16>
    %cst = arith.constant dense<0.000000e+00> : vector<128x128xf32>
    %33 = tpu.matmul %18, %32, %cst {dimension_numbers = #tpu.dot_dimension_numbers<[1], [0], [0], [1], [0, 0, 1, 1], [], []>} : vector<128x8xbf16>, vector<8x128xbf16>, vector<128x128xf32> -> vector<128x128xf32>
    %c0_6 = arith.constant 0 : index
    %c0_7 = arith.constant 0 : index
    %34 = vector.load %arg16[%c0_6, %c0_7] : memref<8x512xbf16, #tpu.memory_space<vmem>>, vector<8x512xbf16>
    %cst_8 = arith.constant dense<0.000000e+00> : vector<128x512xf32>
    %35 = tpu.matmul %24, %34, %cst_8 {dimension_numbers = #tpu.dot_dimension_numbers<[1], [0], [0], [1], [0, 0, 1, 1], [], []>} : vector<128x8xbf16>, vector<8x512xbf16>, vector<128x512xf32> -> vector<128x512xf32>
    %36 = vector.extract_strided_slice %35 {offsets = [0, 0], sizes = [128, 128], strides = [1, 1]} : vector<128x512xf32> to vector<128x128xf32>
    %37 = vector.extract_strided_slice %35 {offsets = [0, 128], sizes = [128, 384], strides = [1, 1]} : vector<128x512xf32> to vector<128x384xf32>
    %c0_9 = arith.constant 0 : index
    %c0_10 = arith.constant 0 : index
    %38 = vector.load %arg4[%c0_9, %c0_10] : memref<128x16xbf16, #tpu.memory_space<vmem>>, vector<128x16xbf16>
    %c0_11 = arith.constant 0 : index
    %c0_12 = arith.constant 0 : index
    %39 = vector.load %arg11[%c0_11, %c0_12] : memref<16x128xbf16, #tpu.memory_space<vmem>>, vector<16x128xbf16>
    %cst_13 = arith.constant dense<0.000000e+00> : vector<128x128xf32>
    %40 = tpu.matmul %38, %39, %cst_13 {dimension_numbers = #tpu.dot_dimension_numbers<[1], [0], [0], [1], [0, 0, 1, 1], [], []>} : vector<128x16xbf16>, vector<16x128xbf16>, vector<128x128xf32> -> vector<128x128xf32>
    %41 = arith.mulf %40, %33 : vector<128x128xf32>
    %42 = arith.mulf %41, %36 : vector<128x128xf32>
    %43 = arith.truncf %42 : vector<128x128xf32> to vector<128x128xbf16>
    %c0_14 = arith.constant 0 : index
    %c0_15 = arith.constant 0 : index
    %44 = vector.load %arg17[%c0_14, %c0_15] : memref<128x512xbf16, #tpu.memory_space<vmem>>, vector<128x128xbf16>
    tpu.vector_store %arg17[%c0_14, %c0_15], %43 {strides = array<i32>} : memref<128x512xbf16, #tpu.memory_space<vmem>>, vector<128x128xbf16>,
    %c0_16 = arith.constant 0 : index
    %c0_17 = arith.constant 0 : index
    %45 = vector.load %arg12[%c0_16, %c0_17] : memref<128x256xbf16, #tpu.memory_space<vmem>>, vector<128x256xbf16>
    %46 = arith.truncf %42 : vector<128x128xf32> to vector<128x128xbf16>
    %cst_18 = arith.constant dense<0.000000e+00> : vector<128x256xf32>
    %47 = tpu.matmul %46, %45, %cst_18 {dimension_numbers = #tpu.dot_dimension_numbers<[1], [0], [0], [1], [0, 0, 1, 1], [], []>} : vector<128x128xbf16>, vector<128x256xbf16>, vector<128x256xf32> -> vector<128x256xf32>
    %48 = arith.negf %47 : vector<128x256xf32>
    %49 = math.exp %48 : vector<128x256xf32>
    %cst_19 = arith.constant 1.000000e+00 : f32
    %50 = vector.broadcast %cst_19 : f32 to vector<128x256xf32>
    %51 = arith.addf %50, %49 : vector<128x256xf32>
    %52 = arith.divf %50, %51 : vector<128x256xf32>
    %53 = arith.mulf %47, %52 : vector<128x256xf32>
    %c0_20 = arith.constant 0 : index
    %c0_21 = arith.constant 0 : index
    %54 = vector.load %arg13[%c0_20, %c0_21] : memref<256x256xbf16, #tpu.memory_space<vmem>>, vector<256x256xbf16>
    %55 = arith.truncf %53 : vector<128x256xf32> to vector<128x256xbf16>
    %cst_22 = arith.constant dense<0.000000e+00> : vector<128x256xf32>
    %56 = tpu.matmul %55, %54, %cst_22 {dimension_numbers = #tpu.dot_dimension_numbers<[1], [0], [0], [1], [0, 0, 1, 1], [], []>} : vector<128x256xbf16>, vector<256x256xbf16>, vector<128x256xf32> -> vector<128x256xf32>
    %57 = vector.extract_strided_slice %56 {offsets = [0, 0], sizes = [128, 128], strides = [1, 1]} : vector<128x256xf32> to vector<128x128xf32>
    %58 = vector.extract_strided_slice %56 {offsets = [0, 128], sizes = [128, 128], strides = [1, 1]} : vector<128x256xf32> to vector<128x128xf32>
    %c0_23 = arith.constant 0 : index
    %c0_24 = arith.constant 0 : index
    %59 = vector.load %arg3[%c0_23, %c0_24] : memref<128x3xf32, #tpu.memory_space<vmem>>, vector<128x3xf32>
    %60 = vector.extract_strided_slice %59 {offsets = [0, 0], sizes = [128, 1], strides = [1, 1]} : vector<128x3xf32> to vector<128x1xf32>
    %61 = vector.broadcast %60 : vector<128x1xf32> to vector<128x128xf32>
    %62 = arith.mulf %57, %61 : vector<128x128xf32>
    %63 = vector.extract_strided_slice %37 {offsets = [0, 0], sizes = [128, 128], strides = [1, 1]} : vector<128x384xf32> to vector<128x128xf32>
    %64 = arith.mulf %58, %63 : vector<128x128xf32>
    %65 = arith.addf %62, %64 : vector<128x128xf32>
    %66 = arith.truncf %65 : vector<128x128xf32> to vector<128x128xbf16>
    %c0_25 = arith.constant 0 : index
    %c128 = arith.constant 128 : index
    %67 = vector.load %arg17[%c0_25, %c128] : memref<128x512xbf16, #tpu.memory_space<vmem>>, vector<128x128xbf16>
    tpu.vector_store %arg17[%c0_25, %c128], %66 {strides = array<i32>} : memref<128x512xbf16, #tpu.memory_space<vmem>>, vector<128x128xbf16>,
    %68 = vector.extract_strided_slice %59 {offsets = [0, 1], sizes = [128, 1], strides = [1, 1]} : vector<128x3xf32> to vector<128x1xf32>
    %69 = vector.broadcast %68 : vector<128x1xf32> to vector<128x128xf32>
    %70 = arith.mulf %57, %69 : vector<128x128xf32>
    %71 = vector.extract_strided_slice %37 {offsets = [0, 128], sizes = [128, 128], strides = [1, 1]} : vector<128x384xf32> to vector<128x128xf32>
    %72 = arith.mulf %58, %71 : vector<128x128xf32>
    %73 = arith.addf %70, %72 : vector<128x128xf32>
    %74 = arith.truncf %73 : vector<128x128xf32> to vector<128x128xbf16>
    %c0_26 = arith.constant 0 : index
    %c256 = arith.constant 256 : index
    %75 = vector.load %arg17[%c0_26, %c256] : memref<128x512xbf16, #tpu.memory_space<vmem>>, vector<128x128xbf16>
    tpu.vector_store %arg17[%c0_26, %c256], %74 {strides = array<i32>} : memref<128x512xbf16, #tpu.memory_space<vmem>>, vector<128x128xbf16>,
    %76 = vector.extract_strided_slice %59 {offsets = [0, 2], sizes = [128, 1], strides = [1, 1]} : vector<128x3xf32> to vector<128x1xf32>
    %77 = vector.broadcast %76 : vector<128x1xf32> to vector<128x128xf32>
    %78 = arith.mulf %57, %77 : vector<128x128xf32>
    %79 = vector.extract_strided_slice %37 {offsets = [0, 256], sizes = [128, 128], strides = [1, 1]} : vector<128x384xf32> to vector<128x128xf32>
    %80 = arith.mulf %58, %79 : vector<128x128xf32>
    %81 = arith.addf %78, %80 : vector<128x128xf32>
    %82 = arith.truncf %81 : vector<128x128xf32> to vector<128x128xbf16>
    %c0_27 = arith.constant 0 : index
    %c384 = arith.constant 384 : index
    %83 = vector.load %arg17[%c0_27, %c384] : memref<128x512xbf16, #tpu.memory_space<vmem>>, vector<128x128xbf16>
    tpu.vector_store %arg17[%c0_27, %c384], %82 {strides = array<i32>} : memref<128x512xbf16, #tpu.memory_space<vmem>>, vector<128x128xbf16>,
    %c0_28 = arith.constant 0 : index
    %c0_29 = arith.constant 0 : index
    %84 = vector.load %arg18[%c0_28, %c0_29] : memref<8x512xf32, #tpu.memory_space<vmem>>, vector<8x512xf32>
    %c0_30 = arith.constant 0 : index
    %c0_31 = arith.constant 0 : index
    %85 = vector.load %arg17[%c0_30, %c0_31] : memref<128x512xbf16, #tpu.memory_space<vmem>>, vector<128x512xbf16>
    %cst_32 = arith.constant dense<0.000000e+00> : vector<8x512xf32>
    %86 = tpu.matmul %31, %85, %cst_32 {dimension_numbers = #tpu.dot_dimension_numbers<[1], [0], [0], [1], [0, 0, 1, 1], [], []>} : vector<8x128xbf16>, vector<128x512xbf16>, vector<8x512xf32> -> vector<8x512xf32>
    %87 = arith.addf %84, %86 : vector<8x512xf32>
    %c0_33 = arith.constant 0 : index
    %c0_34 = arith.constant 0 : index
    %88 = vector.load %arg18[%c0_33, %c0_34] : memref<8x512xf32, #tpu.memory_space<vmem>>, vector<8x512xf32>
    tpu.vector_store %arg18[%c0_33, %c0_34], %87 {strides = array<i32>} : memref<8x512xf32, #tpu.memory_space<vmem>>, vector<8x512xf32>,
    %c0_i32_35 = arith.constant 0 : i32
    %89 = arith.cmpi eq, %arg0, %c0_i32_35 : i32
    %90 = arith.extui %89 : i1 to i32
    %c0_i32_36 = arith.constant 0 : i32
    %91 = arith.cmpi ne, %90, %c0_i32_36 : i32
    scf.if %91 {
      %c0_37 = arith.constant 0 : index
      %c0_38 = arith.constant 0 : index
      %92 = vector.load %arg18[%c0_37, %c0_38] : memref<8x512xf32, #tpu.memory_space<vmem>>, vector<8x512xf32>
      %c0_39 = arith.constant 0 : index
      %c0_40 = arith.constant 0 : index
      %93 = vector.load %arg1[%c0_39, %c0_40] : memref<8x128xf32, #tpu.memory_space<vmem>>, vector<8x128xf32>
      %94 = vector.extract_strided_slice %92 {offsets = [0, 0], sizes = [8, 128], strides = [1, 1]} : vector<8x512xf32> to vector<8x128xf32>
      %95 = arith.addf %93, %94 : vector<8x128xf32>
      %c0_41 = arith.constant 0 : index
      %c0_42 = arith.constant 0 : index
      %96 = vector.load %arg2[%c0_41, %c0_42] : memref<8x384xf32, #tpu.memory_space<vmem>>, vector<8x384xf32>
      %97 = vector.extract_strided_slice %92 {offsets = [0, 128], sizes = [8, 384], strides = [1, 1]} : vector<8x512xf32> to vector<8x384xf32>
      %98 = arith.addf %96, %97 : vector<8x384xf32>
      %c0_43 = arith.constant 0 : index
      %c0_44 = arith.constant 0 : index
      %99 = vector.load %arg14[%c0_43, %c0_44] : memref<384x384xbf16, #tpu.memory_space<vmem>>, vector<384x384xbf16>
      %100 = arith.truncf %98 : vector<8x384xf32> to vector<8x384xbf16>
      %cst_45 = arith.constant dense<0.000000e+00> : vector<8x384xf32>
      %101 = tpu.matmul %100, %99, %cst_45 {dimension_numbers = #tpu.dot_dimension_numbers<[1], [0], [0], [1], [0, 0, 1, 1], [], []>} : vector<8x384xbf16>, vector<384x384xbf16>, vector<8x384xf32> -> vector<8x384xf32>
      %102 = arith.mulf %98, %101 : vector<8x384xf32>
      %103 = vector.extract_strided_slice %102 {offsets = [0, 0], sizes = [8, 128], strides = [1, 1]} : vector<8x384xf32> to vector<8x128xf32>
      %104 = vector.extract_strided_slice %102 {offsets = [0, 128], sizes = [8, 128], strides = [1, 1]} : vector<8x384xf32> to vector<8x128xf32>
      %105 = arith.addf %103, %104 : vector<8x128xf32>
      %106 = vector.extract_strided_slice %102 {offsets = [0, 256], sizes = [8, 128], strides = [1, 1]} : vector<8x384xf32> to vector<8x128xf32>
      %107 = arith.addf %105, %106 : vector<8x128xf32>
      %108 = arith.addf %95, %107 : vector<8x128xf32>
      %c0_46 = arith.constant 0 : index
      %c0_47 = arith.constant 0 : index
      %109 = vector.load %arg15[%c0_46, %c0_47] : memref<8x512xf32, #tpu.memory_space<vmem>>, vector<8x128xf32>
      tpu.vector_store %arg15[%c0_46, %c0_47], %108 {strides = array<i32>} : memref<8x512xf32, #tpu.memory_space<vmem>>, vector<8x128xf32>,
      %c0_48 = arith.constant 0 : index
      %c128_49 = arith.constant 128 : index
      %110 = vector.load %arg15[%c0_48, %c128_49] : memref<8x512xf32, #tpu.memory_space<vmem>>, vector<8x384xf32>
      tpu.vector_store %arg15[%c0_48, %c128_49], %98 {strides = array<i32>} : memref<8x512xf32, #tpu.memory_space<vmem>>, vector<8x384xf32>,
    } else {
    }
    return
  }
  func.func @transform_0(%arg0: i32) -> (i32, i32) {
    %c0_i32 = arith.constant 0 : i32
    %c0_i32_0 = arith.constant 0 : i32
    %c0_i32_1 = arith.constant 0 : i32
    return %c0_i32, %c0_i32_0 : i32, i32
  }
  func.func @transform_1(%arg0: i32) -> (i32, i32) {
    %c0_i32 = arith.constant 0 : i32
    %c0_i32_0 = arith.constant 0 : i32
    %c0_i32_1 = arith.constant 0 : i32
    return %c0_i32, %c0_i32_0 : i32, i32
  }
  func.func @transform_2(%arg0: i32) -> (i32, i32) {
    %c0_i32 = arith.constant 0 : i32
    %c0_i32_0 = arith.constant 0 : i32
    return %arg0, %c0_i32 : i32, i32
  }
  func.func @transform_3(%arg0: i32) -> (i32, i32) {
    %c0_i32 = arith.constant 0 : i32
    %c0_i32_0 = arith.constant 0 : i32
    return %arg0, %c0_i32 : i32, i32
  }
  func.func @transform_4(%arg0: i32) -> (i32, i32) {
    %c0_i32 = arith.constant 0 : i32
    %c0_i32_0 = arith.constant 0 : i32
    return %c0_i32, %arg0 : i32, i32
  }
  func.func @transform_5(%arg0: i32) -> (i32, i32) {
    %c0_i32 = arith.constant 0 : i32
    %c0_i32_0 = arith.constant 0 : i32
    return %arg0, %c0_i32 : i32, i32
  }
  func.func @transform_6(%arg0: i32) -> (i32, i32) {
    %c0_i32 = arith.constant 0 : i32
    %c0_i32_0 = arith.constant 0 : i32
    %c0_i32_1 = arith.constant 0 : i32
    return %c0_i32, %c0_i32_0 : i32, i32
  }
  func.func @transform_7(%arg0: i32) -> (i32, i32) {
    %c0_i32 = arith.constant 0 : i32
    %c0_i32_0 = arith.constant 0 : i32
    %c0_i32_1 = arith.constant 0 : i32
    return %c0_i32, %c0_i32_0 : i32, i32
  }
  func.func @transform_8(%arg0: i32) -> (i32, i32) {
    %c0_i32 = arith.constant 0 : i32
    %c0_i32_0 = arith.constant 0 : i32
    %c0_i32_1 = arith.constant 0 : i32
    return %c0_i32, %c0_i32_0 : i32, i32
  }
  func.func @transform_9(%arg0: i32) -> (i32, i32) {
    %c0_i32 = arith.constant 0 : i32
    %c0_i32_0 = arith.constant 0 : i32
    %c0_i32_1 = arith.constant 0 : i32
    return %c0_i32, %c0_i32_0 : i32, i32
  }
  func.func @transform_10(%arg0: i32) -> (i32, i32) {
    %c0_i32 = arith.constant 0 : i32
    %c0_i32_0 = arith.constant 0 : i32
    %c0_i32_1 = arith.constant 0 : i32
    return %c0_i32, %c0_i32_0 : i32, i32
  }
  func.func @transform_11(%arg0: i32) -> (i32, i32) {
    %c0_i32 = arith.constant 0 : i32
    %c0_i32_0 = arith.constant 0 : i32
    %c0_i32_1 = arith.constant 0 : i32
    return %c0_i32, %c0_i32_0 : i32, i32
  }
  func.func @transform_12(%arg0: i32) -> (i32, i32) {
    %c0_i32 = arith.constant 0 : i32
    %c0_i32_0 = arith.constant 0 : i32
    %c0_i32_1 = arith.constant 0 : i32
    return %c0_i32, %c0_i32_0 : i32, i32
  }
  func.func @transform_13(%arg0: i32) -> (i32, i32) {
    %c0_i32 = arith.constant 0 : i32
    %c0_i32_0 = arith.constant 0 : i32
    %c0_i32_1 = arith.constant 0 : i32
    return %c0_i32, %c0_i32_0 : i32, i32
  }
  func.func @transform_14(%arg0: i32) -> (i32, i32) {
    %c0_i32 = arith.constant 0 : i32
    %c0_i32_0 = arith.constant 0 : i32
    %c0_i32_1 = arith.constant 0 : i32
    return %c0_i32, %c0_i32_0 : i32, i32
  }
}

</mosaic_0001>

<llo_original>
// kernel: tpu_custom_call.1
$region0: #{tpu_custom_call.1}
  #allocation0 [shape = 'u32[]', space=smem, size = 0x4, offset = 0x4, fixed_abs, tag = 'smem constant byte address 0x4 - core index']
  #allocation1 [shape = 'u32[144,128]{1,0:T(1,128)}', space=vmem, size = 0x12000, scoped, tag = 'internal scratch']
  #allocation2 [shape = 'bf16[8,512]{1,0:T(8,128)(2,1)}', space=vmem, size = 0x2000, scoped, tag = 'scratch operand']
  #allocation3 [shape = 'bf16[128,512]{1,0:T(16,128)(2,1)}', space=vmem, size = 0x20000, scoped, tag = 'scratch operand']
  #allocation4 [shape = 'f32[8,512]{1,0:T(8,128)}', space=vmem, size = 0x4000, scoped, tag = 'scratch operand']
  %s0 = inlined_call_operand.vmem [shape: f32[8,128], index: 0, kind: input, shape index: {}]
  %s1 = inlined_call_operand.vmem [shape: f32[8,384], index: 1, kind: input, shape index: {}]
  %s2 = inlined_call_operand.vmem [shape: f32[128,3], index: 2, kind: input, shape index: {}]
  %s3 = inlined_call_operand.vmem [shape: bf16[128,16], index: 3, kind: input, shape index: {}]
  %s4 = inlined_call_operand.vmem [shape: s32[2,128], index: 4, kind: input, shape index: {}]
  %s5 = inlined_call_operand.vmem [shape: s32[128,2], index: 5, kind: input, shape index: {}]
  %s6 = inlined_call_operand.vmem [shape: bf16[128,128], index: 6, kind: input, shape index: {}]
  %s7 = inlined_call_operand.vmem [shape: f32[1,128], index: 7, kind: input, shape index: {}]
  %s8 = inlined_call_operand.hbm [shape: bf16[128,128], index: 8, kind: input, shape index: {}]
  %s9 = inlined_call_operand.vmem [shape: f32[1,128], index: 9, kind: input, shape index: {}]
  %s10 = inlined_call_operand.vmem [shape: bf16[16,128], index: 10, kind: input, shape index: {}]
  %s11 = inlined_call_operand.hbm [shape: bf16[128,256], index: 11, kind: input, shape index: {}]
  %s12 = inlined_call_operand.vmem [shape: bf16[256,256], index: 12, kind: input, shape index: {}]
  %s13 = inlined_call_operand.hbm [shape: bf16[384,384], index: 13, kind: input, shape index: {}]
  %s14 = inlined_call_operand.hbm [shape: f32[8,512], index: 14, kind: output, shape index: {}]
  %s15 = sld [smem:[#allocation0]]
  $region86: #{tpu_custom_call.1} parent=0
    _
  %s17 = ssub.s32 1, %s15
  %s18 = scalar_select 0, %s17, %s15
  $region1: #{tpu_custom_call.1} parent=0
    #allocation5 [shape = 'u8[32768]{0}', space=vmem, size = 0x8000, scoped, tag = 'input window, operand 8, single buffered']
    #allocation6 [shape = 's32[1]{0}', space=sflag, size = 0x4, scoped, tag = 'scoped memory for tpu_custom_call.1']
    #allocation7 [shape = 's32[1]{0}', space=sflag, size = 0x4, scoped, tag = 'scoped memory for tpu_custom_call.1']
    #allocation8 [shape = 'u8[65536]{0}', space=vmem, size = 0x10000, scoped, tag = 'input window, operand 11, single buffered']
    #allocation9 [shape = 's32[1]{0}', space=sflag, size = 0x4, scoped, tag = 'scoped memory for tpu_custom_call.1']
    #allocation10 [shape = 'u8[294912]{0}', space=vmem, size = 0x48000, scoped, tag = 'input window, operand 13, single buffered']
    #allocation11 [shape = 'u8[16384]{0}', space=vmem, size = 0x4000, scoped, tag = 'output window, operand 0, single buffered']
    %19 = vsyncpa [#allocation6], 0
    %20 = vsyncpa [#allocation9], 0
    %21 = vsyncpa [#allocation7], 0
    // Predicated region
    $region2: #{tpu_custom_call.1} parent=1 // pred_check
      _
    $region3: #{tpu_custom_call.1} parent=1 // pred_check_branch
      %23 = sbr.rel (0) target = $region5
    $region4: #{tpu_custom_call.1} parent=1 // pred_region
      _
    $region5: #{tpu_custom_call.1} parent=1 // pred_fallthru
      _
    // Predicated region
    $region6: #{tpu_custom_call.1} parent=1 // pred_check
      _
    $region7: #{tpu_custom_call.1} parent=1 // pred_check_branch
      %25 = sbr.rel (0) target = $region9
    $region8: #{tpu_custom_call.1} parent=1 // pred_region
      _
    $region9: #{tpu_custom_call.1} parent=1 // pred_fallthru
      _
    // Predicated region
    $region10: #{tpu_custom_call.1} parent=1 // pred_check
      _
    $region11: #{tpu_custom_call.1} parent=1 // pred_check_branch
      %27 = sbr.rel (0) target = $region13
    $region12: #{tpu_custom_call.1} parent=1 // pred_region
      _
    $region13: #{tpu_custom_call.1} parent=1 // pred_fallthru
      _
    // Predicated region
    $region14: #{tpu_custom_call.1} parent=1 // pred_check
      _
    $region15: #{tpu_custom_call.1} parent=1 // pred_check_branch
      %29 = sbr.rel (0) target = $region17
    $region16: #{tpu_custom_call.1} parent=1 // pred_region
      _
    $region17: #{tpu_custom_call.1} parent=1 // pred_fallthru
      _
    // Predicated region
    $region18: #{tpu_custom_call.1} parent=1 // pred_check
      _
    $region19: #{tpu_custom_call.1} parent=1 // pred_check_branch
      %31 = sbr.rel (0) target = $region21
    $region20: #{tpu_custom_call.1} parent=1 // pred_region
      _
    $region21: #{tpu_custom_call.1} parent=1 // pred_fallthru
      _
    // Predicated region
    $region22: #{tpu_custom_call.1} parent=1 // pred_check
      _
    $region23: #{tpu_custom_call.1} parent=1 // pred_check_branch
      %33 = sbr.rel (0) target = $region25
    $region24: #{tpu_custom_call.1} parent=1 // pred_region
      _
    $region25: #{tpu_custom_call.1} parent=1 // pred_fallthru
      _
    // Predicated region
    $region26: #{tpu_custom_call.1} parent=1 // pred_check
      _
    $region27: #{tpu_custom_call.1} parent=1 // pred_check_branch
      %35 = sbr.rel (0) target = $region29
    $region28: #{tpu_custom_call.1} parent=1 // pred_region
      _
    $region29: #{tpu_custom_call.1} parent=1 // pred_fallthru
      _
    // Predicated region
    $region30: #{tpu_custom_call.1} parent=1 // pred_check
      _
    $region31: #{tpu_custom_call.1} parent=1 // pred_check_branch
      %37 = sbr.rel (0) target = $region33
    $region32: #{tpu_custom_call.1} parent=1 // pred_region
      _
    $region33: #{tpu_custom_call.1} parent=1 // pred_fallthru
      _
    // Predicated region
    $region34: #{tpu_custom_call.1} parent=1 // pred_check
      _
    $region35: #{tpu_custom_call.1} parent=1 // pred_check_branch
      %39 = sbr.rel (0) target = $region37
    $region36: #{tpu_custom_call.1} parent=1 // pred_region
      %s41 = ssub.s32 1024, 1024
      %42 = vsyncadd [#allocation6], %s41
      %s43 = sshll.u32 [#allocation5], 4
      %s44 = int_to_ptr.vmem [resolvable:$true] %s43
      %49 = dma.hbm_to_vmem [thread:$0]  %s8, 1024, %s44, [#allocation6], 64, 64, 4
    $region37: #{tpu_custom_call.1} parent=1 // pred_fallthru
      _
    // Predicated region
    $region38: #{tpu_custom_call.1} parent=1 // pred_check
      _
    $region39: #{tpu_custom_call.1} parent=1 // pred_check_branch
      %51 = sbr.rel (0) target = $region41
    $region40: #{tpu_custom_call.1} parent=1 // pred_region
      _
    $region41: #{tpu_custom_call.1} parent=1 // pred_fallthru
      _
    // Predicated region
    $region42: #{tpu_custom_call.1} parent=1 // pred_check
      _
    $region43: #{tpu_custom_call.1} parent=1 // pred_check_branch
      %53 = sbr.rel (0) target = $region45
    $region44: #{tpu_custom_call.1} parent=1 // pred_region
      _
    $region45: #{tpu_custom_call.1} parent=1 // pred_fallthru
      _
    // Predicated region
    $region46: #{tpu_custom_call.1} parent=1 // pred_check
      _
    $region47: #{tpu_custom_call.1} parent=1 // pred_check_branch
      %55 = sbr.rel (0) target = $region49
    $region48: #{tpu_custom_call.1} parent=1 // pred_region
      %s57 = ssub.s32 2048, 2048
      %58 = vsyncadd [#allocation9], %s57
      %s59 = sshll.u32 [#allocation8], 4
      %s60 = int_to_ptr.vmem [resolvable:$true] %s59
      %65 = dma.hbm_to_vmem [thread:$0]  %s11, 2048, %s60, [#allocation9], 128, 128, 8
    $region49: #{tpu_custom_call.1} parent=1 // pred_fallthru
      _
    // Predicated region
    $region50: #{tpu_custom_call.1} parent=1 // pred_check
      _
    $region51: #{tpu_custom_call.1} parent=1 // pred_check_branch
      %67 = sbr.rel (0) target = $region53
    $region52: #{tpu_custom_call.1} parent=1 // pred_region
      _
    $region53: #{tpu_custom_call.1} parent=1 // pred_fallthru
      _
    // Predicated region
    $region54: #{tpu_custom_call.1} parent=1 // pred_check
      _
    $region55: #{tpu_custom_call.1} parent=1 // pred_check_branch
      %69 = sbr.rel (0) target = $region57
    $region56: #{tpu_custom_call.1} parent=1 // pred_region
      %s71 = ssub.s32 9216, 9216
      %72 = vsyncadd [#allocation9], %s71
      %s73 = sshll.u32 [#allocation10], 4
      %s74 = int_to_ptr.vmem [resolvable:$true] %s73
      %79 = dma.hbm_to_vmem [thread:$0]  %s13, 9216, %s74, [#allocation9], 192, 192, 12
    $region57: #{tpu_custom_call.1} parent=1 // pred_fallthru
      _
    // Predicated region
    $region58: #{tpu_custom_call.1} parent=1 // pred_check
      _
    $region59: #{tpu_custom_call.1} parent=1 // pred_check_branch
      %81 = sbr.rel (0) target = $region61
    $region60: #{tpu_custom_call.1} parent=1 // pred_region
      %82 = dma.done [#allocation6], 1024
    $region61: #{tpu_custom_call.1} parent=1 // pred_fallthru
      _
    // Predicated region
    $region62: #{tpu_custom_call.1} parent=1 // pred_check
      _
    $region63: #{tpu_custom_call.1} parent=1 // pred_check_branch
      %84 = sbr.rel (0) target = $region65
    $region64: #{tpu_custom_call.1} parent=1 // pred_region
      %85 = dma.done [#allocation9], 2048
    $region65: #{tpu_custom_call.1} parent=1 // pred_fallthru
      _
    // Predicated region
    $region66: #{tpu_custom_call.1} parent=1 // pred_check
      _
    $region67: #{tpu_custom_call.1} parent=1 // pred_check_branch
      %87 = sbr.rel (0) target = $region69
    $region68: #{tpu_custom_call.1} parent=1 // pred_region
      %88 = dma.done [#allocation9], 9216
    $region69: #{tpu_custom_call.1} parent=1 // pred_fallthru
      _
    %p90 = scmp.eq.s32.totalorder 0, 0
    // Predicated region
    $region70: #{tpu_custom_call.1} parent=1 // pred_check
      %p91 = pneg %p90
    $region71: #{tpu_custom_call.1} parent=1 // pred_check_branch
      %93 = sbr.rel (%p91) target = $region73
    $region72: #{tpu_custom_call.1} parent=1 // pred_region
      %v94 = vld [vmem:[%s0] sm:$0xff]
      %v95 = vld [vmem:[%s6] sm:$0xf]
      %v96 = vld [vmem:[%s6 + $0x4] sm:$0xf]
      %v97 = vld [vmem:[%s6 + $0x8] sm:$0xf]
      %v98 = vld [vmem:[%s6 + $0xc] sm:$0xf]
      %v99 = vld [vmem:[%s6 + $0x10] sm:$0xf]
      %v100 = vld [vmem:[%s6 + $0x14] sm:$0xf]
      %v101 = vld [vmem:[%s6 + $0x18] sm:$0xf]
      %v102 = vld [vmem:[%s6 + $0x1c] sm:$0xf]
      %v103 = vld [vmem:[%s6 + $0x20] sm:$0xf]
      %v104 = vld [vmem:[%s6 + $0x24] sm:$0xf]
      %v105 = vld [vmem:[%s6 + $0x28] sm:$0xf]
      %v106 = vld [vmem:[%s6 + $0x2c] sm:$0xf]
      %v107 = vld [vmem:[%s6 + $0x30] sm:$0xf]
      %v108 = vld [vmem:[%s6 + $0x34] sm:$0xf]
      %v109 = vld [vmem:[%s6 + $0x38] sm:$0xf]
      %v110 = vld [vmem:[%s6 + $0x3c] sm:$0xf]
      %v111 = vpack.c.bf16 %v94, %v94
      %v112 = vld [vmem:[%s7] sm:$0x1]
      %v114 = vlaneseq
      %v115 = vshrl.u32 %v114, 7
      %v116 = vsub.s32 0, %v115
      %v117 = vrot.slane %v112, %v116
      %v135 = vunpack.c.l.b16 %v95
      %v136 = vunpack.c.l.b16 %v96
      %v137 = vunpack.c.l.b16 %v97
      %v138 = vunpack.c.l.b16 %v98
      %v139 = vunpack.c.l.b16 %v99
      %v140 = vunpack.c.l.b16 %v100
      %v141 = vunpack.c.l.b16 %v101
      %v142 = vunpack.c.l.b16 %v102
      %v143 = vunpack.c.l.b16 %v103
      %v144 = vunpack.c.l.b16 %v104
      %v145 = vunpack.c.l.b16 %v105
      %v146 = vunpack.c.l.b16 %v106
      %v147 = vunpack.c.l.b16 %v107
      %v148 = vunpack.c.l.b16 %v108
      %v149 = vunpack.c.l.b16 %v109
      %v150 = vunpack.c.l.b16 %v110
      %v151 = vpack.c.b16 %v136, %v135
      %v152 = vpack.c.b16 %v138, %v137
      %v153 = vpack.c.b16 %v140, %v139
      %v154 = vpack.c.b16 %v142, %v141
      %v155 = vpack.c.b16 %v144, %v143
      %v156 = vpack.c.b16 %v146, %v145
      %v157 = vpack.c.b16 %v148, %v147
      %v158 = vpack.c.b16 %v150, %v149
      %167 = vmatprep.subr.bf16.mxu0 0
      %168 = vmatpush1.bf16.msra.mxu0 %v151
      %169 = vmatprep.subr.bf16.mxu0 0
      %170 = vmatpush1.bf16.msra.mxu0 %v152
      %171 = vmatprep.subr.bf16.mxu0 0
      %172 = vmatpush1.bf16.msra.mxu0 %v153
      %173 = vmatprep.subr.bf16.mxu0 0
      %174 = vmatpush1.bf16.msra.mxu0 %v154
      %175 = vmatprep.subr.bf16.mxu0 0
      %176 = vmatpush1.bf16.msra.mxu0 %v155
      %177 = vmatprep.subr.bf16.mxu0 0
      %178 = vmatpush1.bf16.msra.mxu0 %v156
      %179 = vmatprep.subr.bf16.mxu0 0
      %180 = vmatpush1.bf16.msra.mxu0 %v157
      %181 = vmatprep.subr.bf16.mxu0 0
      %182 = vmatpush1.bf16.msra.mxu0 %v158
      %183 = vmatprep.subr.bf16.mxu0 0
      %184 = vmatpush1.bf16.msra.mxu0 0
      %185 = vmatprep.subr.bf16.mxu0 0
      %186 = vmatpush1.bf16.msra.mxu0 0
      %187 = vmatprep.subr.bf16.mxu0 0
      %188 = vmatpush1.bf16.msra.mxu0 0
      %189 = vmatprep.subr.bf16.mxu0 0
      %190 = vmatpush1.bf16.msra.mxu0 0
      %191 = vmatprep.subr.bf16.mxu0 0
      %192 = vmatpush1.bf16.msra.mxu0 0
      %193 = vmatprep.subr.bf16.mxu0 0
      %194 = vmatpush1.bf16.msra.mxu0 0
      %195 = vmatprep.subr.bf16.mxu0 0
      %196 = vmatpush1.bf16.msra.mxu0 0
      %197 = vmatprep.subr.bf16.mxu0 0
      %198 = vmatpush1.bf16.msra.mxu0 0
      %199 = vmatprep.mubr.bf16.mxu0 0
      %200 = vmatmul.mubr.bf16.gmra.mrb[0].mxu0 %v111
      %v201 = vpop.f32.mrb[0].mxu0
      %v202 = vadd.f32 %v117, %v201
      %v203 = vpop.f32.mrb[0].mxu0
      %v204 = vpop.f32.mrb[0].mxu0
      %v205 = vpop.f32.mrb[0].mxu0
      %206 = vdwg.mxu0
      %v207 = vxor.u32 %v202, 2147483648
      %v208 = vmul.f32 %v207, 1.442695
      %v209 = vpow.pop %v208
      %v210 = vadd.f32 %v209, 1.0
      %v211 = vrcp.pop %v210
      %v212 = vmul.f32 1.0, %v211
      %v213 = vmul.f32 %v202, %v212
      %v214 = vld [vmem:[#allocation5] sm:$0xf]
      %v215 = vld [vmem:[#allocation5 + $0x4] sm:$0xf]
      %v216 = vld [vmem:[#allocation5 + $0x8] sm:$0xf]
      %v217 = vld [vmem:[#allocation5 + $0xc] sm:$0xf]
      %v218 = vld [vmem:[#allocation5 + $0x10] sm:$0xf]
      %v219 = vld [vmem:[#allocation5 + $0x14] sm:$0xf]
      %v220 = vld [vmem:[#allocation5 + $0x18] sm:$0xf]
      %v221 = vld [vmem:[#allocation5 + $0x1c] sm:$0xf]
      %v222 = vld [vmem:[#allocation5 + $0x20] sm:$0xf]
      %v223 = vld [vmem:[#allocation5 + $0x24] sm:$0xf]
      %v224 = vld [vmem:[#allocation5 + $0x28] sm:$0xf]
      %v225 = vld [vmem:[#allocation5 + $0x2c] sm:$0xf]
      %v226 = vld [vmem:[#allocation5 + $0x30] sm:$0xf]
      %v227 = vld [vmem:[#allocation5 + $0x34] sm:$0xf]
      %v228 = vld [vmem:[#allocation5 + $0x38] sm:$0xf]
      %v229 = vld [vmem:[#allocation5 + $0x3c] sm:$0xf]
      %v230 = vpack.c.bf16 %v213, %v213
      %v231 = vld [vmem:[%s9] sm:$0x1]
      %v233 = vlaneseq
      %v234 = vshrl.u32 %v233, 7
      %v235 = vsub.s32 0, %v234
      %v236 = vrot.slane %v231, %v235
      %v254 = vunpack.c.l.b16 %v214
      %v255 = vunpack.c.l.b16 %v215
      %v256 = vunpack.c.l.b16 %v216
      %v257 = vunpack.c.l.b16 %v217
      %v258 = vunpack.c.l.b16 %v218
      %v259 = vunpack.c.l.b16 %v219
      %v260 = vunpack.c.l.b16 %v220
      %v261 = vunpack.c.l.b16 %v221
      %v262 = vunpack.c.l.b16 %v222
      %v263 = vunpack.c.l.b16 %v223
      %v264 = vunpack.c.l.b16 %v224
      %v265 = vunpack.c.l.b16 %v225
      %v266 = vunpack.c.l.b16 %v226
      %v267 = vunpack.c.l.b16 %v227
      %v268 = vunpack.c.l.b16 %v228
      %v269 = vunpack.c.l.b16 %v229
      %v270 = vpack.c.b16 %v255, %v254
      %v271 = vpack.c.b16 %v257, %v256
      %v272 = vpack.c.b16 %v259, %v258
      %v273 = vpack.c.b16 %v261, %v260
      %v274 = vpack.c.b16 %v263, %v262
      %v275 = vpack.c.b16 %v265, %v264
      %v276 = vpack.c.b16 %v267, %v266
      %v277 = vpack.c.b16 %v269, %v268
      %286 = vmatprep.subr.bf16.mxu0 0
      %287 = vmatpush1.bf16.msra.mxu0 %v270
      %288 = vmatprep.subr.bf16.mxu0 0
      %289 = vmatpush1.bf16.msra.mxu0 %v271
      %290 = vmatprep.subr.bf16.mxu0 0
      %291 = vmatpush1.bf16.msra.mxu0 %v272
      %292 = vmatprep.subr.bf16.mxu0 0
      %293 = vmatpush1.bf16.msra.mxu0 %v273
      %294 = vmatprep.subr.bf16.mxu0 0
      %295 = vmatpush1.bf16.msra.mxu0 %v274
      %296 = vmatprep.subr.bf16.mxu0 0
      %297 = vmatpush1.bf16.msra.mxu0 %v275
      %298 = vmatprep.subr.bf16.mxu0 0
      %299 = vmatpush1.bf16.msra.mxu0 %v276
      %300 = vmatprep.subr.bf16.mxu0 0
      %301 = vmatpush1.bf16.msra.mxu0 %v277
      %302 = vmatprep.subr.bf16.mxu0 0
      %303 = vmatpush1.bf16.msra.mxu0 0
      %304 = vmatprep.subr.bf16.mxu0 0
      %305 = vmatpush1.bf16.msra.mxu0 0
      %306 = vmatprep.subr.bf16.mxu0 0
      %307 = vmatpush1.bf16.msra.mxu0 0
      %308 = vmatprep.subr.bf16.mxu0 0
      %309 = vmatpush1.bf16.msra.mxu0 0
      %310 = vmatprep.subr.bf16.mxu0 0
      %311 = vmatpush1.bf16.msra.mxu0 0
      %312 = vmatprep.subr.bf16.mxu0 0
      %313 = vmatpush1.bf16.msra.mxu0 0
      %314 = vmatprep.subr.bf16.mxu0 0
      %315 = vmatpush1.bf16.msra.mxu0 0
      %316 = vmatprep.subr.bf16.mxu0 0
      %317 = vmatpush1.bf16.msra.mxu0 0
      %318 = vmatprep.mubr.bf16.mxu0 0
      %319 = vmatmul.mubr.bf16.gmra.mrb[0].mxu0 %v230
      %v320 = vpop.f32.mrb[0].mxu0
      %v321 = vadd.f32 %v236, %v320
      %v322 = vpop.f32.mrb[0].mxu0
      %v323 = vpop.f32.mrb[0].mxu0
      %v324 = vpop.f32.mrb[0].mxu0
      %325 = vdwg.mxu0
      %v326 = vpack.c.bf16 %v321, %v321
      %327 = vst [vmem:[#allocation2] sm:$0xf] %v326
      %v328 = vld [vmem:[%s1] sm:$0xff]
      %v329 = vld [vmem:[%s1 + $0x8] sm:$0xff]
      %v330 = vld [vmem:[%s1 + $0x10] sm:$0xff]
      %v331 = vpack.c.bf16 %v328, %v328
      %v332 = vpack.c.bf16 %v329, %v329
      %v333 = vpack.c.bf16 %v330, %v330
      %v337 = vunpack.c.l.b16 %v331
      %v338 = vunpack.c.l.b16 %v332
      %v339 = vunpack.c.l.b16 %v333
      %v340 = vpack.c.b16 %v338, %v337
      %v341 = vpack.c.b16 %v339, %v339
      %344 = vst [vmem:[#allocation2 + $0x4] sm:$0xff] %v340
      %345 = vst [vmem:[#allocation2 + $0xc] sm:$0xf] %v341
      %346 = vst [vmem:[#allocation4] sm:$0xff] 0.0
      %347 = vst [vmem:[#allocation4 + $0x8] sm:$0xff] 0.0
      %348 = vst [vmem:[#allocation4 + $0x10] sm:$0xff] 0.0
      %349 = vst [vmem:[#allocation4 + $0x18] sm:$0xff] 0.0
    $region73: #{tpu_custom_call.1} parent=1 // pred_fallthru
      _
    %v350 = vld [vmem:[%s4] sm:$0x3]
    %v351 = vld [vmem:[%s5] sm:$0xff]
    %v352 = vld [vmem:[%s5 + $0x8] sm:$0xff]
    %v353 = vld [vmem:[%s5 + $0x10] sm:$0xff]
    %v354 = vld [vmem:[%s5 + $0x18] sm:$0xff]
    %v355 = vld [vmem:[%s5 + $0x20] sm:$0xff]
    %v356 = vld [vmem:[%s5 + $0x28] sm:$0xff]
    %v357 = vld [vmem:[%s5 + $0x30] sm:$0xff]
    %v358 = vld [vmem:[%s5 + $0x38] sm:$0xff]
    %v359 = vld [vmem:[%s5 + $0x40] sm:$0xff]
    %v360 = vld [vmem:[%s5 + $0x48] sm:$0xff]
    %v361 = vld [vmem:[%s5 + $0x50] sm:$0xff]
    %v362 = vld [vmem:[%s5 + $0x58] sm:$0xff]
    %v363 = vld [vmem:[%s5 + $0x60] sm:$0xff]
    %v364 = vld [vmem:[%s5 + $0x68] sm:$0xff]
    %v365 = vld [vmem:[%s5 + $0x70] sm:$0xff]
    %v366 = vld [vmem:[%s5 + $0x78] sm:$0xff]
    %v367 = vlaneseq
    %v368 = vand.u32 %v367, 127
    %v369 = vlaneseq
    %v370 = vshrl.u32 %v369, 7
    %s371 = smul.u32 0, 128
    %v372 = vstv %s371
    %v373 = vadd.s32 %v368, %v372
    %vm374 = vcmp.lt.s32.totalorder %v373, 16
    %375 = vset.pattern.permute.xlu0 0
    %376 = vperm.xlu0 %375, %v351
    %v377 = vpop.permute.xlu0 %376
    %378 = vset.pattern.permute.xlu0 0
    %379 = vperm.xlu0 %378, %v352
    %v380 = vpop.permute.xlu0 %379
    %381 = vset.pattern.permute.xlu0 0
    %382 = vperm.xlu0 %381, %v353
    %v383 = vpop.permute.xlu0 %382
    %384 = vset.pattern.permute.xlu0 0
    %385 = vperm.xlu0 %384, %v354
    %v386 = vpop.permute.xlu0 %385
    %387 = vset.pattern.permute.xlu0 0
    %388 = vperm.xlu0 %387, %v355
    %v389 = vpop.permute.xlu0 %388
    %390 = vset.pattern.permute.xlu0 0
    %391 = vperm.xlu0 %390, %v356
    %v392 = vpop.permute.xlu0 %391
    %393 = vset.pattern.permute.xlu0 0
    %394 = vperm.xlu0 %393, %v357
    %v395 = vpop.permute.xlu0 %394
    %396 = vset.pattern.permute.xlu0 0
    %397 = vperm.xlu0 %396, %v358
    %v398 = vpop.permute.xlu0 %397
    %399 = vset.pattern.permute.xlu0 0
    %400 = vperm.xlu0 %399, %v359
    %v401 = vpop.permute.xlu0 %400
    %402 = vset.pattern.permute.xlu0 0
    %403 = vperm.xlu0 %402, %v360
    %v404 = vpop.permute.xlu0 %403
    %405 = vset.pattern.permute.xlu0 0
    %406 = vperm.xlu0 %405, %v361
    %v407 = vpop.permute.xlu0 %406
    %408 = vset.pattern.permute.xlu0 0
    %409 = vperm.xlu0 %408, %v362
    %v410 = vpop.permute.xlu0 %409
    %411 = vset.pattern.permute.xlu0 0
    %412 = vperm.xlu0 %411, %v363
    %v413 = vpop.permute.xlu0 %412
    %414 = vset.pattern.permute.xlu0 0
    %415 = vperm.xlu0 %414, %v364
    %v416 = vpop.permute.xlu0 %415
    %417 = vset.pattern.permute.xlu0 0
    %418 = vperm.xlu0 %417, %v365
    %v419 = vpop.permute.xlu0 %418
    %420 = vset.pattern.permute.xlu0 0
    %421 = vperm.xlu0 %420, %v366
    %v422 = vpop.permute.xlu0 %421
    %vm423 = vcmp.eq.s32.totalorder %v377, %v368
    %vm424 = vcmp.eq.s32.totalorder %v380, %v368
    %vm425 = vcmp.eq.s32.totalorder %v383, %v368
    %vm426 = vcmp.eq.s32.totalorder %v386, %v368
    %vm427 = vcmp.eq.s32.totalorder %v389, %v368
    %vm428 = vcmp.eq.s32.totalorder %v392, %v368
    %vm429 = vcmp.eq.s32.totalorder %v395, %v368
    %vm430 = vcmp.eq.s32.totalorder %v398, %v368
    %vm431 = vcmp.eq.s32.totalorder %v401, %v368
    %vm432 = vcmp.eq.s32.totalorder %v404, %v368
    %vm433 = vcmp.eq.s32.totalorder %v407, %v368
    %vm434 = vcmp.eq.s32.totalorder %v410, %v368
    %vm435 = vcmp.eq.s32.totalorder %v413, %v368
    %vm436 = vcmp.eq.s32.totalorder %v416, %v368
    %vm437 = vcmp.eq.s32.totalorder %v419, %v368
    %vm438 = vcmp.eq.s32.totalorder %v422, %v368
    %v439 = vsel %vm423, 1, 0
    %v440 = vsel %vm424, 1, 0
    %v441 = vsel %vm425, 1, 0
    %v442 = vsel %vm426, 1, 0
    %v443 = vsel %vm427, 1, 0
    %v444 = vsel %vm428, 1, 0
    %v445 = vsel %vm429, 1, 0
    %v446 = vsel %vm430, 1, 0
    %v447 = vsel %vm431, 1, 0
    %v448 = vsel %vm432, 1, 0
    %v449 = vsel %vm433, 1, 0
    %v450 = vsel %vm434, 1, 0
    %v451 = vsel %vm435, 1, 0
    %v452 = vsel %vm436, 1, 0
    %v453 = vsel %vm437, 1, 0
    %v454 = vsel %vm438, 1, 0
    %v455 = vcvt.s32.f32 %v439
    %v456 = vcvt.s32.f32 %v440
    %v457 = vcvt.s32.f32 %v441
    %v458 = vcvt.s32.f32 %v442
    %v459 = vcvt.s32.f32 %v443
    %v460 = vcvt.s32.f32 %v444
    %v461 = vcvt.s32.f32 %v445
    %v462 = vcvt.s32.f32 %v446
    %v463 = vcvt.s32.f32 %v447
    %v464 = vcvt.s32.f32 %v448
    %v465 = vcvt.s32.f32 %v449
    %v466 = vcvt.s32.f32 %v450
    %v467 = vcvt.s32.f32 %v451
    %v468 = vcvt.s32.f32 %v452
    %v469 = vcvt.s32.f32 %v453
    %v470 = vcvt.s32.f32 %v454
    %v471 = vpack.c.bf16 %v456, %v455
    %v472 = vpack.c.bf16 %v458, %v457
    %v473 = vpack.c.bf16 %v460, %v459
    %v474 = vpack.c.bf16 %v462, %v461
    %v475 = vpack.c.bf16 %v464, %v463
    %v476 = vpack.c.bf16 %v466, %v465
    %v477 = vpack.c.bf16 %v468, %v467
    %v478 = vpack.c.bf16 %v470, %v469
    %479 = vset.pattern.permute.xlu0 1
    %480 = vperm.xlu0 %479, %v351
    %v481 = vpop.permute.xlu0 %480
    %482 = vset.pattern.permute.xlu0 1
    %483 = vperm.xlu0 %482, %v352
    %v484 = vpop.permute.xlu0 %483
    %485 = vset.pattern.permute.xlu0 1
    %486 = vperm.xlu0 %485, %v353
    %v487 = vpop.permute.xlu0 %486
    %488 = vset.pattern.permute.xlu0 1
    %489 = vperm.xlu0 %488, %v354
    %v490 = vpop.permute.xlu0 %489
    %491 = vset.pattern.permute.xlu0 1
    %492 = vperm.xlu0 %491, %v355
    %v493 = vpop.permute.xlu0 %492
    %494 = vset.pattern.permute.xlu0 1
    %495 = vperm.xlu0 %494, %v356
    %v496 = vpop.permute.xlu0 %495
    %497 = vset.pattern.permute.xlu0 1
    %498 = vperm.xlu0 %497, %v357
    %v499 = vpop.permute.xlu0 %498
    %500 = vset.pattern.permute.xlu0 1
    %501 = vperm.xlu0 %500, %v358
    %v502 = vpop.permute.xlu0 %501
    %503 = vset.pattern.permute.xlu0 1
    %504 = vperm.xlu0 %503, %v359
    %v505 = vpop.permute.xlu0 %504
    %506 = vset.pattern.permute.xlu0 1
    %507 = vperm.xlu0 %506, %v360
    %v508 = vpop.permute.xlu0 %507
    %509 = vset.pattern.permute.xlu0 1
    %510 = vperm.xlu0 %509, %v361
    %v511 = vpop.permute.xlu0 %510
    %512 = vset.pattern.permute.xlu0 1
    %513 = vperm.xlu0 %512, %v362
    %v514 = vpop.permute.xlu0 %513
    %515 = vset.pattern.permute.xlu0 1
    %516 = vperm.xlu0 %515, %v363
    %v517 = vpop.permute.xlu0 %516
    %518 = vset.pattern.permute.xlu0 1
    %519 = vperm.xlu0 %518, %v364
    %v520 = vpop.permute.xlu0 %519
    %521 = vset.pattern.permute.xlu0 1
    %522 = vperm.xlu0 %521, %v365
    %v523 = vpop.permute.xlu0 %522
    %524 = vset.pattern.permute.xlu0 1
    %525 = vperm.xlu0 %524, %v366
    %v526 = vpop.permute.xlu0 %525
    %vm527 = vcmp.eq.s32.totalorder %v481, %v368
    %vm528 = vcmp.eq.s32.totalorder %v484, %v368
    %vm529 = vcmp.eq.s32.totalorder %v487, %v368
    %vm530 = vcmp.eq.s32.totalorder %v490, %v368
    %vm531 = vcmp.eq.s32.totalorder %v493, %v368
    %vm532 = vcmp.eq.s32.totalorder %v496, %v368
    %vm533 = vcmp.eq.s32.totalorder %v499, %v368
    %vm534 = vcmp.eq.s32.totalorder %v502, %v368
    %vm535 = vcmp.eq.s32.totalorder %v505, %v368
    %vm536 = vcmp.eq.s32.totalorder %v508, %v368
    %vm537 = vcmp.eq.s32.totalorder %v511, %v368
    %vm538 = vcmp.eq.s32.totalorder %v514, %v368
    %vm539 = vcmp.eq.s32.totalorder %v517, %v368
    %vm540 = vcmp.eq.s32.totalorder %v520, %v368
    %vm541 = vcmp.eq.s32.totalorder %v523, %v368
    %vm542 = vcmp.eq.s32.totalorder %v526, %v368
    %v543 = vsel %vm527, 1, 0
    %v544 = vsel %vm528, 1, 0
    %v545 = vsel %vm529, 1, 0
    %v546 = vsel %vm530, 1, 0
    %v547 = vsel %vm531, 1, 0
    %v548 = vsel %vm532, 1, 0
    %v549 = vsel %vm533, 1, 0
    %v550 = vsel %vm534, 1, 0
    %v551 = vsel %vm535, 1, 0
    %v552 = vsel %vm536, 1, 0
    %v553 = vsel %vm537, 1, 0
    %v554 = vsel %vm538, 1, 0
    %v555 = vsel %vm539, 1, 0
    %v556 = vsel %vm540, 1, 0
    %v557 = vsel %vm541, 1, 0
    %v558 = vsel %vm542, 1, 0
    %v559 = vcvt.s32.f32 %v543
    %v560 = vcvt.s32.f32 %v544
    %v561 = vcvt.s32.f32 %v545
    %v562 = vcvt.s32.f32 %v546
    %v563 = vcvt.s32.f32 %v547
    %v564 = vcvt.s32.f32 %v548
    %v565 = vcvt.s32.f32 %v549
    %v566 = vcvt.s32.f32 %v550
    %v567 = vcvt.s32.f32 %v551
    %v568 = vcvt.s32.f32 %v552
    %v569 = vcvt.s32.f32 %v553
    %v570 = vcvt.s32.f32 %v554
    %v571 = vcvt.s32.f32 %v555
    %v572 = vcvt.s32.f32 %v556
    %v573 = vcvt.s32.f32 %v557
    %v574 = vcvt.s32.f32 %v558
    %v575 = vpack.c.bf16 %v560, %v559
    %v576 = vpack.c.bf16 %v562, %v561
    %v577 = vpack.c.bf16 %v564, %v563
    %v578 = vpack.c.bf16 %v566, %v565
    %v579 = vpack.c.bf16 %v568, %v567
    %v580 = vpack.c.bf16 %v570, %v569
    %v581 = vpack.c.bf16 %v572, %v571
    %v582 = vpack.c.bf16 %v574, %v573
    %v583 = vlaneseq
    %v584 = vshrl.u32 %v583, 7
    %v585 = vsub.s32 0, %v584
    %v586 = vrot.slane %v350, %v585
    %vm587 = vcmp.eq.s32.totalorder %v586, %v370
    %vm588 = vmand %vm587, %vm374
    %v589 = vsel %vm588, 1, 0
    %v590 = vcvt.s32.f32 %v589
    %v591 = vpack.c.bf16 %v590, %v590
    %v592 = vld [vmem:[#allocation2] sm:$0xf]
    %vm593 = vcmask 64512
    %v595 = vsel %vm593, %v471, 0
    %v598 = vsel %vm593, %v472, 0
    %v601 = vsel %vm593, %v473, 0
    %v604 = vsel %vm593, %v474, 0
    %v607 = vsel %vm593, %v475, 0
    %v610 = vsel %vm593, %v476, 0
    %v613 = vsel %vm593, %v477, 0
    %v616 = vsel %vm593, %v478, 0
    %vm618 = vcmask 1043456
    %v620 = vsel %vm618, %v592, 0
    %622 = vmatprep.subr.bf16.mxu0 0
    %623 = vmatpush1.bf16.msra.mxu0 %v620
    %624 = vmatprep.subr.bf16.mxu0 0
    %625 = vmatpush1.bf16.msra.mxu0 0
    %626 = vmatprep.subr.bf16.mxu0 0
    %627 = vmatpush1.bf16.msra.mxu0 0
    %628 = vmatprep.subr.bf16.mxu0 0
    %629 = vmatpush1.bf16.msra.mxu0 0
    %630 = vmatprep.subr.bf16.mxu0 0
    %631 = vmatpush1.bf16.msra.mxu0 0
    %632 = vmatprep.subr.bf16.mxu0 0
    %633 = vmatpush1.bf16.msra.mxu0 0
    %634 = vmatprep.subr.bf16.mxu0 0
    %635 = vmatpush1.bf16.msra.mxu0 0
    %636 = vmatprep.subr.bf16.mxu0 0
    %637 = vmatpush1.bf16.msra.mxu0 0
    %638 = vmatprep.subr.bf16.mxu0 0
    %639 = vmatpush1.bf16.msra.mxu0 0
    %640 = vmatprep.subr.bf16.mxu0 0
    %641 = vmatpush1.bf16.msra.mxu0 0
    %642 = vmatprep.subr.bf16.mxu0 0
    %643 = vmatpush1.bf16.msra.mxu0 0
    %644 = vmatprep.subr.bf16.mxu0 0
    %645 = vmatpush1.bf16.msra.mxu0 0
    %646 = vmatprep.subr.bf16.mxu0 0
    %647 = vmatpush1.bf16.msra.mxu0 0
    %648 = vmatprep.subr.bf16.mxu0 0
    %649 = vmatpush1.bf16.msra.mxu0 0
    %650 = vmatprep.subr.bf16.mxu0 0
    %651 = vmatpush1.bf16.msra.mxu0 0
    %652 = vmatprep.subr.bf16.mxu0 0
    %653 = vmatpush1.bf16.msra.mxu0 0
    %654 = vmatprep.mubr.bf16.mxu0 0
    %655 = vmatmul.mubr.bf16.gmra.mrb[0].mxu0 %v595
    %v656 = vpop.f32.mrb[0].mxu0
    %v657 = vadd.f32 0.0, %v656
    %v658 = vpop.f32.mrb[0].mxu0
    %v659 = vpop.f32.mrb[0].mxu0
    %v660 = vadd.f32 0.0, %v659
    %v661 = vpop.f32.mrb[0].mxu0
    %662 = vmatprep.mubr.bf16.mxu0 0
    %663 = vmatmul.mubr.bf16.gmra.mrb[0].mxu0 %v598
    %v664 = vpop.f32.mrb[0].mxu0
    %v665 = vadd.f32 0.0, %v664
    %v666 = vpop.f32.mrb[0].mxu0
    %v667 = vpop.f32.mrb[0].mxu0
    %v668 = vadd.f32 0.0, %v667
    %v669 = vpop.f32.mrb[0].mxu0
    %670 = vmatprep.mubr.bf16.mxu0 0
    %671 = vmatmul.mubr.bf16.gmra.mrb[0].mxu0 %v601
    %v672 = vpop.f32.mrb[0].mxu0
    %v673 = vadd.f32 0.0, %v672
    %v674 = vpop.f32.mrb[0].mxu0
    %v675 = vpop.f32.mrb[0].mxu0
    %v676 = vadd.f32 0.0, %v675
    %v677 = vpop.f32.mrb[0].mxu0
    %678 = vmatprep.mubr.bf16.mxu0 0
    %679 = vmatmul.mubr.bf16.gmra.mrb[0].mxu0 %v604
    %v680 = vpop.f32.mrb[0].mxu0
    %v681 = vadd.f32 0.0, %v680
    %v682 = vpop.f32.mrb[0].mxu0
    %v683 = vpop.f32.mrb[0].mxu0
    %v684 = vadd.f32 0.0, %v683
    %v685 = vpop.f32.mrb[0].mxu0
    %686 = vmatprep.mubr.bf16.mxu0 0
    %687 = vmatmul.mubr.bf16.gmra.mrb[0].mxu0 %v607
    %v688 = vpop.f32.mrb[0].mxu0
    %v689 = vadd.f32 0.0, %v688
    %v690 = vpop.f32.mrb[0].mxu0
    %v691 = vpop.f32.mrb[0].mxu0
    %v692 = vadd.f32 0.0, %v691
    %v693 = vpop.f32.mrb[0].mxu0
    %694 = vmatprep.mubr.bf16.mxu0 0
    %695 = vmatmul.mubr.bf16.gmra.mrb[0].mxu0 %v610
    %v696 = vpop.f32.mrb[0].mxu0
    %v697 = vadd.f32 0.0, %v696
    %v698 = vpop.f32.mrb[0].mxu0
    %v699 = vpop.f32.mrb[0].mxu0
    %v700 = vadd.f32 0.0, %v699
    %v701 = vpop.f32.mrb[0].mxu0
    %702 = vmatprep.mubr.bf16.mxu0 0
    %703 = vmatmul.mubr.bf16.gmra.mrb[0].mxu0 %v613
    %v704 = vpop.f32.mrb[0].mxu0
    %v705 = vadd.f32 0.0, %v704
    %v706 = vpop.f32.mrb[0].mxu0
    %v707 = vpop.f32.mrb[0].mxu0
    %v708 = vadd.f32 0.0, %v707
    %v709 = vpop.f32.mrb[0].mxu0
    %710 = vmatprep.mubr.bf16.mxu0 0
    %711 = vmatmul.mubr.bf16.gmra.mrb[0].mxu0 %v616
    %v712 = vpop.f32.mrb[0].mxu0
    %v713 = vadd.f32 0.0, %v712
    %v714 = vpop.f32.mrb[0].mxu0
    %v715 = vpop.f32.mrb[0].mxu0
    %v716 = vadd.f32 0.0, %v715
    %v717 = vpop.f32.mrb[0].mxu0
    %718 = vdwg.mxu0
    %v719 = vld [vmem:[#allocation2] sm:$0xff]
    %v720 = vld [vmem:[#allocation2 + $0x8] sm:$0xff]
    %v723 = vunpack.c.l.b16 %v719
    %v724 = vunpack.c.h.b16 %v719
    %v725 = vunpack.c.l.b16 %v720
    %v726 = vunpack.c.h.b16 %v720
    %v727 = vpack.c.b16 %v723, %v723
    %v728 = vpack.c.b16 %v724, %v724
    %v729 = vpack.c.b16 %v725, %v725
    %v730 = vpack.c.b16 %v726, %v726
    %v732 = vsel %vm593, %v575, 0
    %v735 = vsel %vm593, %v576, 0
    %v738 = vsel %vm593, %v577, 0
    %v741 = vsel %vm593, %v578, 0
    %v744 = vsel %vm593, %v579, 0
    %v747 = vsel %vm593, %v580, 0
    %v750 = vsel %vm593, %v581, 0
    %v753 = vsel %vm593, %v582, 0
    %v756 = vsel %vm618, %v727, 0
    %v759 = vsel %vm618, %v728, 0
    %v762 = vsel %vm618, %v729, 0
    %v765 = vsel %vm618, %v730, 0
    %767 = vmatprep.subr.bf16.mxu0 %v759
    %768 = vmatpush1.bf16.msra.mxu0 %v756
    %769 = vmatprep.subr.bf16.mxu0 0
    %770 = vmatpush1.bf16.msra.mxu0 0
    %771 = vmatprep.subr.bf16.mxu0 0
    %772 = vmatpush1.bf16.msra.mxu0 0
    %773 = vmatprep.subr.bf16.mxu0 0
    %774 = vmatpush1.bf16.msra.mxu0 0
    %775 = vmatprep.subr.bf16.mxu0 0
    %776 = vmatpush1.bf16.msra.mxu0 0
    %777 = vmatprep.subr.bf16.mxu0 0
    %778 = vmatpush1.bf16.msra.mxu0 0
    %779 = vmatprep.subr.bf16.mxu0 0
    %780 = vmatpush1.bf16.msra.mxu0 0
    %781 = vmatprep.subr.bf16.mxu0 0
    %782 = vmatpush1.bf16.msra.mxu0 0
    %783 = vmatprep.subr.bf16.mxu0 0
    %784 = vmatpush1.bf16.msra.mxu0 0
    %785 = vmatprep.subr.bf16.mxu0 0
    %786 = vmatpush1.bf16.msra.mxu0 0
    %787 = vmatprep.subr.bf16.mxu0 0
    %788 = vmatpush1.bf16.msra.mxu0 0
    %789 = vmatprep.subr.bf16.mxu0 0
    %790 = vmatpush1.bf16.msra.mxu0 0
    %791 = vmatprep.subr.bf16.mxu0 0
    %792 = vmatpush1.bf16.msra.mxu0 0
    %793 = vmatprep.subr.bf16.mxu0 0
    %794 = vmatpush1.bf16.msra.mxu0 0
    %795 = vmatprep.subr.bf16.mxu0 0
    %796 = vmatpush1.bf16.msra.mxu0 0
    %797 = vmatprep.subr.bf16.mxu0 0
    %798 = vmatpush1.bf16.msra.mxu0 0
    %799 = vmatprep.mubr.bf16.mxu0 0
    %800 = vmatmul.mubr.bf16.gmra.mrb[0].mxu0 %v732
    %v801 = vpop.f32.mrb[0].mxu0
    %v802 = vadd.f32 0.0, %v801
    %v803 = vpop.f32.mrb[0].mxu0
    %v804 = vadd.f32 0.0, %v803
    %v805 = vpop.f32.mrb[0].mxu0
    %v806 = vadd.f32 0.0, %v805
    %v807 = vpop.f32.mrb[0].mxu0
    %v808 = vadd.f32 0.0, %v807
    %809 = vmatprep.mubr.bf16.mxu0 0
    %810 = vmatmul.mubr.bf16.gmra.mrb[0].mxu0 %v735
    %v811 = vpop.f32.mrb[0].mxu0
    %v812 = vadd.f32 0.0, %v811
    %v813 = vpop.f32.mrb[0].mxu0
    %v814 = vadd.f32 0.0, %v813
    %v815 = vpop.f32.mrb[0].mxu0
    %v816 = vadd.f32 0.0, %v815
    %v817 = vpop.f32.mrb[0].mxu0
    %v818 = vadd.f32 0.0, %v817
    %819 = vmatprep.mubr.bf16.mxu0 0
    %820 = vmatmul.mubr.bf16.gmra.mrb[0].mxu0 %v738
    %v821 = vpop.f32.mrb[0].mxu0
    %v822 = vadd.f32 0.0, %v821
    %v823 = vpop.f32.mrb[0].mxu0
    %v824 = vadd.f32 0.0, %v823
    %v825 = vpop.f32.mrb[0].mxu0
    %v826 = vadd.f32 0.0, %v825
    %v827 = vpop.f32.mrb[0].mxu0
    %v828 = vadd.f32 0.0, %v827
    %829 = vmatprep.mubr.bf16.mxu0 0
    %830 = vmatmul.mubr.bf16.gmra.mrb[0].mxu0 %v741
    %v831 = vpop.f32.mrb[0].mxu0
    %v832 = vadd.f32 0.0, %v831
    %v833 = vpop.f32.mrb[0].mxu0
    %v834 = vadd.f32 0.0, %v833
    %v835 = vpop.f32.mrb[0].mxu0
    %v836 = vadd.f32 0.0, %v835
    %v837 = vpop.f32.mrb[0].mxu0
    %v838 = vadd.f32 0.0, %v837
    %839 = vmatprep.mubr.bf16.mxu0 0
    %840 = vmatmul.mubr.bf16.gmra.mrb[0].mxu0 %v744
    %v841 = vpop.f32.mrb[0].mxu0
    %v842 = vadd.f32 0.0, %v841
    %v843 = vpop.f32.mrb[0].mxu0
    %v844 = vadd.f32 0.0, %v843
    %v845 = vpop.f32.mrb[0].mxu0
    %v846 = vadd.f32 0.0, %v845
    %v847 = vpop.f32.mrb[0].mxu0
    %v848 = vadd.f32 0.0, %v847
    %849 = vmatprep.mubr.bf16.mxu0 0
    %850 = vmatmul.mubr.bf16.gmra.mrb[0].mxu0 %v747
    %v851 = vpop.f32.mrb[0].mxu0
    %v852 = vadd.f32 0.0, %v851
    %v853 = vpop.f32.mrb[0].mxu0
    %v854 = vadd.f32 0.0, %v853
    %v855 = vpop.f32.mrb[0].mxu0
    %v856 = vadd.f32 0.0, %v855
    %v857 = vpop.f32.mrb[0].mxu0
    %v858 = vadd.f32 0.0, %v857
    %859 = vmatprep.mubr.bf16.mxu0 0
    %860 = vmatmul.mubr.bf16.gmra.mrb[0].mxu0 %v750
    %v861 = vpop.f32.mrb[0].mxu0
    %v862 = vadd.f32 0.0, %v861
    %v863 = vpop.f32.mrb[0].mxu0
    %v864 = vadd.f32 0.0, %v863
    %v865 = vpop.f32.mrb[0].mxu0
    %v866 = vadd.f32 0.0, %v865
    %v867 = vpop.f32.mrb[0].mxu0
    %v868 = vadd.f32 0.0, %v867
    %869 = vmatprep.mubr.bf16.mxu0 0
    %870 = vmatmul.mubr.bf16.gmra.mrb[0].mxu0 %v753
    %v871 = vpop.f32.mrb[0].mxu0
    %v872 = vadd.f32 0.0, %v871
    %v873 = vpop.f32.mrb[0].mxu0
    %v874 = vadd.f32 0.0, %v873
    %v875 = vpop.f32.mrb[0].mxu0
    %v876 = vadd.f32 0.0, %v875
    %v877 = vpop.f32.mrb[0].mxu0
    %v878 = vadd.f32 0.0, %v877
    %879 = vdwg.mxu0
    %880 = vmatprep.subr.bf16.mxu0 %v765
    %881 = vmatpush1.bf16.msra.mxu0 %v762
    %882 = vmatprep.subr.bf16.mxu0 0
    %883 = vmatpush1.bf16.msra.mxu0 0
    %884 = vmatprep.subr.bf16.mxu0 0
    %885 = vmatpush1.bf16.msra.mxu0 0
    %886 = vmatprep.subr.bf16.mxu0 0
    %887 = vmatpush1.bf16.msra.mxu0 0
    %888 = vmatprep.subr.bf16.mxu0 0
    %889 = vmatpush1.bf16.msra.mxu0 0
    %890 = vmatprep.subr.bf16.mxu0 0
    %891 = vmatpush1.bf16.msra.mxu0 0
    %892 = vmatprep.subr.bf16.mxu0 0
    %893 = vmatpush1.bf16.msra.mxu0 0
    %894 = vmatprep.subr.bf16.mxu0 0
    %895 = vmatpush1.bf16.msra.mxu0 0
    %896 = vmatprep.subr.bf16.mxu0 0
    %897 = vmatpush1.bf16.msra.mxu0 0
    %898 = vmatprep.subr.bf16.mxu0 0
    %899 = vmatpush1.bf16.msra.mxu0 0
    %900 = vmatprep.subr.bf16.mxu0 0
    %901 = vmatpush1.bf16.msra.mxu0 0
    %902 = vmatprep.subr.bf16.mxu0 0
    %903 = vmatpush1.bf16.msra.mxu0 0
    %904 = vmatprep.subr.bf16.mxu0 0
    %905 = vmatpush1.bf16.msra.mxu0 0
    %906 = vmatprep.subr.bf16.mxu0 0
    %907 = vmatpush1.bf16.msra.mxu0 0
    %908 = vmatprep.subr.bf16.mxu0 0
    %909 = vmatpush1.bf16.msra.mxu0 0
    %910 = vmatprep.subr.bf16.mxu0 0
    %911 = vmatpush1.bf16.msra.mxu0 0
    %912 = vmatprep.mubr.bf16.mxu0 0
    %913 = vmatmul.mubr.bf16.gmra.mrb[0].mxu0 %v732
    %v914 = vpop.f32.mrb[0].mxu0
    %v915 = vadd.f32 0.0, %v914
    %v916 = vpop.f32.mrb[0].mxu0
    %v917 = vadd.f32 0.0, %v916
    %v918 = vpop.f32.mrb[0].mxu0
    %v919 = vadd.f32 0.0, %v918
    %v920 = vpop.f32.mrb[0].mxu0
    %v921 = vadd.f32 0.0, %v920
    %922 = vmatprep.mubr.bf16.mxu0 0
    %923 = vmatmul.mubr.bf16.gmra.mrb[0].mxu0 %v735
    %v924 = vpop.f32.mrb[0].mxu0
    %v925 = vadd.f32 0.0, %v924
    %v926 = vpop.f32.mrb[0].mxu0
    %v927 = vadd.f32 0.0, %v926
    %v928 = vpop.f32.mrb[0].mxu0
    %v929 = vadd.f32 0.0, %v928
    %v930 = vpop.f32.mrb[0].mxu0
    %v931 = vadd.f32 0.0, %v930
    %932 = vmatprep.mubr.bf16.mxu0 0
    %933 = vmatmul.mubr.bf16.gmra.mrb[0].mxu0 %v738
    %v934 = vpop.f32.mrb[0].mxu0
    %v935 = vadd.f32 0.0, %v934
    %v936 = vpop.f32.mrb[0].mxu0
    %v937 = vadd.f32 0.0, %v936
    %v938 = vpop.f32.mrb[0].mxu0
    %v939 = vadd.f32 0.0, %v938
    %v940 = vpop.f32.mrb[0].mxu0
    %v941 = vadd.f32 0.0, %v940
    %942 = vmatprep.mubr.bf16.mxu0 0
    %943 = vmatmul.mubr.bf16.gmra.mrb[0].mxu0 %v741
    %v944 = vpop.f32.mrb[0].mxu0
    %v945 = vadd.f32 0.0, %v944
    %v946 = vpop.f32.mrb[0].mxu0
    %v947 = vadd.f32 0.0, %v946
    %v948 = vpop.f32.mrb[0].mxu0
    %v949 = vadd.f32 0.0, %v948
    %v950 = vpop.f32.mrb[0].mxu0
    %v951 = vadd.f32 0.0, %v950
    %952 = vmatprep.mubr.bf16.mxu0 0
    %953 = vmatmul.mubr.bf16.gmra.mrb[0].mxu0 %v744
    %v954 = vpop.f32.mrb[0].mxu0
    %v955 = vadd.f32 0.0, %v954
    %v956 = vpop.f32.mrb[0].mxu0
    %v957 = vadd.f32 0.0, %v956
    %v958 = vpop.f32.mrb[0].mxu0
    %v959 = vadd.f32 0.0, %v958
    %v960 = vpop.f32.mrb[0].mxu0
    %v961 = vadd.f32 0.0, %v960
    %962 = vmatprep.mubr.bf16.mxu0 0
    %963 = vmatmul.mubr.bf16.gmra.mrb[0].mxu0 %v747
    %v964 = vpop.f32.mrb[0].mxu0
    %v965 = vadd.f32 0.0, %v964
    %v966 = vpop.f32.mrb[0].mxu0
    %v967 = vadd.f32 0.0, %v966
    %v968 = vpop.f32.mrb[0].mxu0
    %v969 = vadd.f32 0.0, %v968
    %v970 = vpop.f32.mrb[0].mxu0
    %v971 = vadd.f32 0.0, %v970
    %972 = vmatprep.mubr.bf16.mxu0 0
    %973 = vmatmul.mubr.bf16.gmra.mrb[0].mxu0 %v750
    %v974 = vpop.f32.mrb[0].mxu0
    %v975 = vadd.f32 0.0, %v974
    %v976 = vpop.f32.mrb[0].mxu0
    %v977 = vadd.f32 0.0, %v976
    %v978 = vpop.f32.mrb[0].mxu0
    %v979 = vadd.f32 0.0, %v978
    %v980 = vpop.f32.mrb[0].mxu0
    %v981 = vadd.f32 0.0, %v980
    %982 = vmatprep.mubr.bf16.mxu0 0
    %983 = vmatmul.mubr.bf16.gmra.mrb[0].mxu0 %v753
    %v984 = vpop.f32.mrb[0].mxu0
    %v985 = vadd.f32 0.0, %v984
    %v986 = vpop.f32.mrb[0].mxu0
    %v987 = vadd.f32 0.0, %v986
    %v988 = vpop.f32.mrb[0].mxu0
    %v989 = vadd.f32 0.0, %v988
    %v990 = vpop.f32.mrb[0].mxu0
    %v991 = vadd.f32 0.0, %v990
    %992 = vdwg.mxu0
    %v993 = vld [vmem:[%s3] sm:$0xf]
    %v994 = vld [vmem:[%s3 + $0x4] sm:$0xf]
    %v995 = vld [vmem:[%s3 + $0x8] sm:$0xf]
    %v996 = vld [vmem:[%s3 + $0xc] sm:$0xf]
    %v997 = vld [vmem:[%s3 + $0x10] sm:$0xf]
    %v998 = vld [vmem:[%s3 + $0x14] sm:$0xf]
    %v999 = vld [vmem:[%s3 + $0x18] sm:$0xf]
    %v1000 = vld [vmem:[%s3 + $0x1c] sm:$0xf]
    %v1001 = vld [vmem:[%s3 + $0x20] sm:$0xf]
    %v1002 = vld [vmem:[%s3 + $0x24] sm:$0xf]
    %v1003 = vld [vmem:[%s3 + $0x28] sm:$0xf]
    %v1004 = vld [vmem:[%s3 + $0x2c] sm:$0xf]
    %v1005 = vld [vmem:[%s3 + $0x30] sm:$0xf]
    %v1006 = vld [vmem:[%s3 + $0x34] sm:$0xf]
    %v1007 = vld [vmem:[%s3 + $0x38] sm:$0xf]
    %v1008 = vld [vmem:[%s3 + $0x3c] sm:$0xf]
    %v1009 = vld [vmem:[%s10] sm:$0xf]
    %v1010 = vld [vmem:[%s10 + $0x4] sm:$0xf]
    %v1027 = vunpack.c.l.b16 %v993
    %v1028 = vunpack.c.l.b16 %v994
    %v1029 = vunpack.c.l.b16 %v995
    %v1030 = vunpack.c.l.b16 %v996
    %v1031 = vunpack.c.l.b16 %v997
    %v1032 = vunpack.c.l.b16 %v998
    %v1033 = vunpack.c.l.b16 %v999
    %v1034 = vunpack.c.l.b16 %v1000
    %v1035 = vunpack.c.l.b16 %v1001
    %v1036 = vunpack.c.l.b16 %v1002
    %v1037 = vunpack.c.l.b16 %v1003
    %v1038 = vunpack.c.l.b16 %v1004
    %v1039 = vunpack.c.l.b16 %v1005
    %v1040 = vunpack.c.l.b16 %v1006
    %v1041 = vunpack.c.l.b16 %v1007
    %v1042 = vunpack.c.l.b16 %v1008
    %v1043 = vpack.c.b16 %v1028, %v1027
    %v1044 = vpack.c.b16 %v1030, %v1029
    %v1045 = vpack.c.b16 %v1032, %v1031
    %v1046 = vpack.c.b16 %v1034, %v1033
    %v1047 = vpack.c.b16 %v1036, %v1035
    %v1048 = vpack.c.b16 %v1038, %v1037
    %v1049 = vpack.c.b16 %v1040, %v1039
    %v1050 = vpack.c.b16 %v1042, %v1041
    %v1053 = vunpack.c.l.b16 %v1009
    %v1054 = vunpack.c.l.b16 %v1010
    %v1055 = vpack.c.b16 %v1054, %v1053
    %vm1057 = vcmask 130048
    %v1059 = vsel %vm1057, %v1043, 0
    %v1062 = vsel %vm1057, %v1044, 0
    %v1065 = vsel %vm1057, %v1045, 0
    %v1068 = vsel %vm1057, %v1046, 0
    %v1071 = vsel %vm1057, %v1047, 0
    %v1074 = vsel %vm1057, %v1048, 0
    %v1077 = vsel %vm1057, %v1049, 0
    %v1080 = vsel %vm1057, %v1050, 0
    %1082 = vmatprep.subr.bf16.mxu0 0
    %1083 = vmatpush1.bf16.msra.mxu0 %v1055
    %1084 = vmatprep.subr.bf16.mxu0 0
    %1085 = vmatpush1.bf16.msra.mxu0 0
    %1086 = vmatprep.subr.bf16.mxu0 0
    %1087 = vmatpush1.bf16.msra.mxu0 0
    %1088 = vmatprep.subr.bf16.mxu0 0
    %1089 = vmatpush1.bf16.msra.mxu0 0
    %1090 = vmatprep.subr.bf16.mxu0 0
    %1091 = vmatpush1.bf16.msra.mxu0 0
    %1092 = vmatprep.subr.bf16.mxu0 0
    %1093 = vmatpush1.bf16.msra.mxu0 0
    %1094 = vmatprep.subr.bf16.mxu0 0
    %1095 = vmatpush1.bf16.msra.mxu0 0
    %1096 = vmatprep.subr.bf16.mxu0 0
    %1097 = vmatpush1.bf16.msra.mxu0 0
    %1098 = vmatprep.subr.bf16.mxu0 0
    %1099 = vmatpush1.bf16.msra.mxu0 0
    %1100 = vmatprep.subr.bf16.mxu0 0
    %1101 = vmatpush1.bf16.msra.mxu0 0
    %1102 = vmatprep.subr.bf16.mxu0 0
    %1103 = vmatpush1.bf16.msra.mxu0 0
    %1104 = vmatprep.subr.bf16.mxu0 0
    %1105 = vmatpush1.bf16.msra.mxu0 0
    %1106 = vmatprep.subr.bf16.mxu0 0
    %1107 = vmatpush1.bf16.msra.mxu0 0
    %1108 = vmatprep.subr.bf16.mxu0 0
    %1109 = vmatpush1.bf16.msra.mxu0 0
    %1110 = vmatprep.subr.bf16.mxu0 0
    %1111 = vmatpush1.bf16.msra.mxu0 0
    %1112 = vmatprep.subr.bf16.mxu0 0
    %1113 = vmatpush1.bf16.msra.mxu0 0
    %1114 = vmatprep.mubr.bf16.mxu0 0
    %1115 = vmatmul.mubr.bf16.gmra.mrb[0].mxu0 %v1059
    %v1116 = vpop.f32.mrb[0].mxu0
    %v1117 = vadd.f32 0.0, %v1116
    %v1118 = vpop.f32.mrb[0].mxu0
    %v1119 = vpop.f32.mrb[0].mxu0
    %v1120 = vadd.f32 0.0, %v1119
    %v1121 = vpop.f32.mrb[0].mxu0
    %1122 = vmatprep.mubr.bf16.mxu0 0
    %1123 = vmatmul.mubr.bf16.gmra.mrb[0].mxu0 %v1062
    %v1124 = vpop.f32.mrb[0].mxu0
    %v1125 = vadd.f32 0.0, %v1124
    %v1126 = vpop.f32.mrb[0].mxu0
    %v1127 = vpop.f32.mrb[0].mxu0
    %v1128 = vadd.f32 0.0, %v1127
    %v1129 = vpop.f32.mrb[0].mxu0
    %1130 = vmatprep.mubr.bf16.mxu0 0
    %1131 = vmatmul.mubr.bf16.gmra.mrb[0].mxu0 %v1065
    %v1132 = vpop.f32.mrb[0].mxu0
    %v1133 = vadd.f32 0.0, %v1132
    %v1134 = vpop.f32.mrb[0].mxu0
    %v1135 = vpop.f32.mrb[0].mxu0
    %v1136 = vadd.f32 0.0, %v1135
    %v1137 = vpop.f32.mrb[0].mxu0
    %1138 = vmatprep.mubr.bf16.mxu0 0
    %1139 = vmatmul.mubr.bf16.gmra.mrb[0].mxu0 %v1068
    %v1140 = vpop.f32.mrb[0].mxu0
    %v1141 = vadd.f32 0.0, %v1140
    %v1142 = vpop.f32.mrb[0].mxu0
    %v1143 = vpop.f32.mrb[0].mxu0
    %v1144 = vadd.f32 0.0, %v1143
    %v1145 = vpop.f32.mrb[0].mxu0
    %1146 = vmatprep.mubr.bf16.mxu0 0
    %1147 = vmatmul.mubr.bf16.gmra.mrb[0].mxu0 %v1071
    %v1148 = vpop.f32.mrb[0].mxu0
    %v1149 = vadd.f32 0.0, %v1148
    %v1150 = vpop.f32.mrb[0].mxu0
    %v1151 = vpop.f32.mrb[0].mxu0
    %v1152 = vadd.f32 0.0, %v1151
    %v1153 = vpop.f32.mrb[0].mxu0
    %1154 = vmatprep.mubr.bf16.mxu0 0
    %1155 = vmatmul.mubr.bf16.gmra.mrb[0].mxu0 %v1074
    %v1156 = vpop.f32.mrb[0].mxu0
    %v1157 = vadd.f32 0.0, %v1156
    %v1158 = vpop.f32.mrb[0].mxu0
    %v1159 = vpop.f32.mrb[0].mxu0
    %v1160 = vadd.f32 0.0, %v1159
    %v1161 = vpop.f32.mrb[0].mxu0
    %1162 = vmatprep.mubr.bf16.mxu0 0
    %1163 = vmatmul.mubr.bf16.gmra.mrb[0].mxu0 %v1077
    %v1164 = vpop.f32.mrb[0].mxu0
    %v1165 = vadd.f32 0.0, %v1164
    %v1166 = vpop.f32.mrb[0].mxu0
    %v1167 = vpop.f32.mrb[0].mxu0
    %v1168 = vadd.f32 0.0, %v1167
    %v1169 = vpop.f32.mrb[0].mxu0
    %1170 = vmatprep.mubr.bf16.mxu0 0
    %1171 = vmatmul.mubr.bf16.gmra.mrb[0].mxu0 %v1080
    %v1172 = vpop.f32.mrb[0].mxu0
    %v1173 = vadd.f32 0.0, %v1172
    %v1174 = vpop.f32.mrb[0].mxu0
    %v1175 = vpop.f32.mrb[0].mxu0
    %v1176 = vadd.f32 0.0, %v1175
    %v1177 = vpop.f32.mrb[0].mxu0
    %1178 = vdwg.mxu0
    %v1179 = vmul.f32 %v1117, %v657
    %v1180 = vmul.f32 %v1120, %v660
    %v1181 = vmul.f32 %v1125, %v665
    %v1182 = vmul.f32 %v1128, %v668
    %v1183 = vmul.f32 %v1133, %v673
    %v1184 = vmul.f32 %v1136, %v676
    %v1185 = vmul.f32 %v1141, %v681
    %v1186 = vmul.f32 %v1144, %v684
    %v1187 = vmul.f32 %v1149, %v689
    %v1188 = vmul.f32 %v1152, %v692
    %v1189 = vmul.f32 %v1157, %v697
    %v1190 = vmul.f32 %v1160, %v700
    %v1191 = vmul.f32 %v1165, %v705
    %v1192 = vmul.f32 %v1168, %v708
    %v1193 = vmul.f32 %v1173, %v713
    %v1194 = vmul.f32 %v1176, %v716
    %v1195 = vmul.f32 %v1179, %v802
    %v1196 = vmul.f32 %v1180, %v806
    %v1197 = vmul.f32 %v1181, %v812
    %v1198 = vmul.f32 %v1182, %v816
    %v1199 = vmul.f32 %v1183, %v822
    %v1200 = vmul.f32 %v1184, %v826
    %v1201 = vmul.f32 %v1185, %v832
    %v1202 = vmul.f32 %v1186, %v836
    %v1203 = vmul.f32 %v1187, %v842
    %v1204 = vmul.f32 %v1188, %v846
    %v1205 = vmul.f32 %v1189, %v852
    %v1206 = vmul.f32 %v1190, %v856
    %v1207 = vmul.f32 %v1191, %v862
    %v1208 = vmul.f32 %v1192, %v866
    %v1209 = vmul.f32 %v1193, %v872
    %v1210 = vmul.f32 %v1194, %v876
    %v1211 = vpack.c.bf16 %v1196, %v1195
    %v1212 = vpack.c.bf16 %v1198, %v1197
    %v1213 = vpack.c.bf16 %v1200, %v1199
    %v1214 = vpack.c.bf16 %v1202, %v1201
    %v1215 = vpack.c.bf16 %v1204, %v1203
    %v1216 = vpack.c.bf16 %v1206, %v1205
    %v1217 = vpack.c.bf16 %v1208, %v1207
    %v1218 = vpack.c.bf16 %v1210, %v1209
    %1219 = vst [vmem:[#allocation3] sm:$0xff] %v1211
    %1220 = vst [vmem:[#allocation3 + $0x20] sm:$0xff] %v1212
    %1221 = vst [vmem:[#allocation3 + $0x40] sm:$0xff] %v1213
    %1222 = vst [vmem:[#allocation3 + $0x60] sm:$0xff] %v1214
    %1223 = vst [vmem:[#allocation3 + $0x80] sm:$0xff] %v1215
    %1224 = vst [vmem:[#allocation3 + $0xa0] sm:$0xff] %v1216
    %1225 = vst [vmem:[#allocation3 + $0xc0] sm:$0xff] %v1217
    %1226 = vst [vmem:[#allocation3 + $0xe0] sm:$0xff] %v1218
    %v1227 = vld [vmem:[#allocation8] sm:$0xff]
    %v1228 = vld [vmem:[#allocation8 + $0x8] sm:$0xff]
    %v1229 = vld [vmem:[#allocation8 + $0x10] sm:$0xff]
    %v1230 = vld [vmem:[#allocation8 + $0x18] sm:$0xff]
    %v1231 = vld [vmem:[#allocation8 + $0x20] sm:$0xff]
    %v1232 = vld [vmem:[#allocation8 + $0x28] sm:$0xff]
    %v1233 = vld [vmem:[#allocation8 + $0x30] sm:$0xff]
    %v1234 = vld [vmem:[#allocation8 + $0x38] sm:$0xff]
    %v1235 = vld [vmem:[#allocation8 + $0x40] sm:$0xff]
    %v1236 = vld [vmem:[#allocation8 + $0x48] sm:$0xff]
    %v1237 = vld [vmem:[#allocation8 + $0x50] sm:$0xff]
    %v1238 = vld [vmem:[#allocation8 + $0x58] sm:$0xff]
    %v1239 = vld [vmem:[#allocation8 + $0x60] sm:$0xff]
    %v1240 = vld [vmem:[#allocation8 + $0x68] sm:$0xff]
    %v1241 = vld [vmem:[#allocation8 + $0x70] sm:$0xff]
    %v1242 = vld [vmem:[#allocation8 + $0x78] sm:$0xff]
    %v1259 = vunpack.c.l.b16 %v1227
    %v1260 = vunpack.c.h.b16 %v1227
    %v1261 = vunpack.c.l.b16 %v1228
    %v1262 = vunpack.c.h.b16 %v1228
    %v1263 = vunpack.c.l.b16 %v1229
    %v1264 = vunpack.c.h.b16 %v1229
    %v1265 = vunpack.c.l.b16 %v1230
    %v1266 = vunpack.c.h.b16 %v1230
    %v1267 = vunpack.c.l.b16 %v1231
    %v1268 = vunpack.c.h.b16 %v1231
    %v1269 = vunpack.c.l.b16 %v1232
    %v1270 = vunpack.c.h.b16 %v1232
    %v1271 = vunpack.c.l.b16 %v1233
    %v1272 = vunpack.c.h.b16 %v1233
    %v1273 = vunpack.c.l.b16 %v1234
    %v1274 = vunpack.c.h.b16 %v1234
    %v1275 = vunpack.c.l.b16 %v1235
    %v1276 = vunpack.c.h.b16 %v1235
    %v1277 = vunpack.c.l.b16 %v1236
    %v1278 = vunpack.c.h.b16 %v1236
    %v1279 = vunpack.c.l.b16 %v1237
    %v1280 = vunpack.c.h.b16 %v1237
    %v1281 = vunpack.c.l.b16 %v1238
    %v1282 = vunpack.c.h.b16 %v1238
    %v1283 = vunpack.c.l.b16 %v1239
    %v1284 = vunpack.c.h.b16 %v1239
    %v1285 = vunpack.c.l.b16 %v1240
    %v1286 = vunpack.c.h.b16 %v1240
    %v1287 = vunpack.c.l.b16 %v1241
    %v1288 = vunpack.c.h.b16 %v1241
    %v1289 = vunpack.c.l.b16 %v1242
    %v1290 = vunpack.c.h.b16 %v1242
    %v1291 = vpack.c.b16 %v1261, %v1259
    %v1292 = vpack.c.b16 %v1262, %v1260
    %v1293 = vpack.c.b16 %v1265, %v1263
    %v1294 = vpack.c.b16 %v1266, %v1264
    %v1295 = vpack.c.b16 %v1269, %v1267
    %v1296 = vpack.c.b16 %v1270, %v1268
    %v1297 = vpack.c.b16 %v1273, %v1271
    %v1298 = vpack.c.b16 %v1274, %v1272
    %v1299 = vpack.c.b16 %v1277, %v1275
    %v1300 = vpack.c.b16 %v1278, %v1276
    %v1301 = vpack.c.b16 %v1281, %v1279
    %v1302 = vpack.c.b16 %v1282, %v1280
    %v1303 = vpack.c.b16 %v1285, %v1283
    %v1304 = vpack.c.b16 %v1286, %v1284
    %v1305 = vpack.c.b16 %v1289, %v1287
    %v1306 = vpack.c.b16 %v1290, %v1288
    %1323 = vmatprep.subr.bf16.mxu0 %v1292
    %1324 = vmatpush1.bf16.msra.mxu0 %v1291
    %1325 = vmatprep.subr.bf16.mxu0 %v1294
    %1326 = vmatpush1.bf16.msra.mxu0 %v1293
    %1327 = vmatprep.subr.bf16.mxu0 %v1296
    %1328 = vmatpush1.bf16.msra.mxu0 %v1295
    %1329 = vmatprep.subr.bf16.mxu0 %v1298
    %1330 = vmatpush1.bf16.msra.mxu0 %v1297
    %1331 = vmatprep.subr.bf16.mxu0 %v1300
    %1332 = vmatpush1.bf16.msra.mxu0 %v1299
    %1333 = vmatprep.subr.bf16.mxu0 %v1302
    %1334 = vmatpush1.bf16.msra.mxu0 %v1301
    %1335 = vmatprep.subr.bf16.mxu0 %v1304
    %1336 = vmatpush1.bf16.msra.mxu0 %v1303
    %1337 = vmatprep.subr.bf16.mxu0 %v1306
    %1338 = vmatpush1.bf16.msra.mxu0 %v1305
    %1339 = vmatprep.subr.bf16.mxu0 0
    %1340 = vmatpush1.bf16.msra.mxu0 0
    %1341 = vmatprep.subr.bf16.mxu0 0
    %1342 = vmatpush1.bf16.msra.mxu0 0
    %1343 = vmatprep.subr.bf16.mxu0 0
    %1344 = vmatpush1.bf16.msra.mxu0 0
    %1345 = vmatprep.subr.bf16.mxu0 0
    %1346 = vmatpush1.bf16.msra.mxu0 0
    %1347 = vmatprep.subr.bf16.mxu0 0
    %1348 = vmatpush1.bf16.msra.mxu0 0
    %1349 = vmatprep.subr.bf16.mxu0 0
    %1350 = vmatpush1.bf16.msra.mxu0 0
    %1351 = vmatprep.subr.bf16.mxu0 0
    %1352 = vmatpush1.bf16.msra.mxu0 0
    %1353 = vmatprep.subr.bf16.mxu0 0
    %1354 = vmatpush1.bf16.msra.mxu0 0
    %1355 = vmatprep.mubr.bf16.mxu0 0
    %1356 = vmatmul.mubr.bf16.gmra.mrb[0].mxu0 %v1211
    %v1357 = vpop.f32.mrb[0].mxu0
    %v1358 = vadd.f32 0.0, %v1357
    %v1359 = vpop.f32.mrb[0].mxu0
    %v1360 = vadd.f32 0.0, %v1359
    %v1361 = vpop.f32.mrb[0].mxu0
    %v1362 = vadd.f32 0.0, %v1361
    %v1363 = vpop.f32.mrb[0].mxu0
    %v1364 = vadd.f32 0.0, %v1363
    %1365 = vmatprep.mubr.bf16.mxu0 0
    %1366 = vmatmul.mubr.bf16.gmra.mrb[0].mxu0 %v1212
    %v1367 = vpop.f32.mrb[0].mxu0
    %v1368 = vadd.f32 0.0, %v1367
    %v1369 = vpop.f32.mrb[0].mxu0
    %v1370 = vadd.f32 0.0, %v1369
    %v1371 = vpop.f32.mrb[0].mxu0
    %v1372 = vadd.f32 0.0, %v1371
    %v1373 = vpop.f32.mrb[0].mxu0
    %v1374 = vadd.f32 0.0, %v1373
    %1375 = vmatprep.mubr.bf16.mxu0 0
    %1376 = vmatmul.mubr.bf16.gmra.mrb[0].mxu0 %v1213
    %v1377 = vpop.f32.mrb[0].mxu0
    %v1378 = vadd.f32 0.0, %v1377
    %v1379 = vpop.f32.mrb[0].mxu0
    %v1380 = vadd.f32 0.0, %v1379
    %v1381 = vpop.f32.mrb[0].mxu0
    %v1382 = vadd.f32 0.0, %v1381
    %v1383 = vpop.f32.mrb[0].mxu0
    %v1384 = vadd.f32 0.0, %v1383
    %1385 = vmatprep.mubr.bf16.mxu0 0
    %1386 = vmatmul.mubr.bf16.gmra.mrb[0].mxu0 %v1214
    %v1387 = vpop.f32.mrb[0].mxu0
    %v1388 = vadd.f32 0.0, %v1387
    %v1389 = vpop.f32.mrb[0].mxu0
    %v1390 = vadd.f32 0.0, %v1389
    %v1391 = vpop.f32.mrb[0].mxu0
    %v1392 = vadd.f32 0.0, %v1391
    %v1393 = vpop.f32.mrb[0].mxu0
    %v1394 = vadd.f32 0.0, %v1393
    %1395 = vmatprep.mubr.bf16.mxu0 0
    %1396 = vmatmul.mubr.bf16.gmra.mrb[0].mxu0 %v1215
    %v1397 = vpop.f32.mrb[0].mxu0
    %v1398 = vadd.f32 0.0, %v1397
    %v1399 = vpop.f32.mrb[0].mxu0
    %v1400 = vadd.f32 0.0, %v1399
    %v1401 = vpop.f32.mrb[0].mxu0
    %v1402 = vadd.f32 0.0, %v1401
    %v1403 = vpop.f32.mrb[0].mxu0
    %v1404 = vadd.f32 0.0, %v1403
    %1405 = vmatprep.mubr.bf16.mxu0 0
    %1406 = vmatmul.mubr.bf16.gmra.mrb[0].mxu0 %v1216
    %v1407 = vpop.f32.mrb[0].mxu0
    %v1408 = vadd.f32 0.0, %v1407
    %v1409 = vpop.f32.mrb[0].mxu0
    %v1410 = vadd.f32 0.0, %v1409
    %v1411 = vpop.f32.mrb[0].mxu0
    %v1412 = vadd.f32 0.0, %v1411
    %v1413 = vpop.f32.mrb[0].mxu0
    %v1414 = vadd.f32 0.0, %v1413
    %1415 = vmatprep.mubr.bf16.mxu0 0
    %1416 = vmatmul.mubr.bf16.gmra.mrb[0].mxu0 %v1217
    %v1417 = vpop.f32.mrb[0].mxu0
    %v1418 = vadd.f32 0.0, %v1417
    %v1419 = vpop.f32.mrb[0].mxu0
    %v1420 = vadd.f32 0.0, %v1419
    %v1421 = vpop.f32.mrb[0].mxu0
    %v1422 = vadd.f32 0.0, %v1421
    %v1423 = vpop.f32.mrb[0].mxu0
    %v1424 = vadd.f32 0.0, %v1423
    %1425 = vmatprep.mubr.bf16.mxu0 0
    %1426 = vmatmul.mubr.bf16.gmra.mrb[0].mxu0 %v1218
    %v1427 = vpop.f32.mrb[0].mxu0
    %v1428 = vadd.f32 0.0, %v1427
    %v1429 = vpop.f32.mrb[0].mxu0
    %v1430 = vadd.f32 0.0, %v1429
    %v1431 = vpop.f32.mrb[0].mxu0
    %v1432 = vadd.f32 0.0, %v1431
    %v1433 = vpop.f32.mrb[0].mxu0
    %v1434 = vadd.f32 0.0, %v1433
    %1435 = vdwg.mxu0
    %v1436 = vxor.u32 %v1358, 2147483648
    %v1437 = vxor.u32 %v1360, 2147483648
    %v1438 = vxor.u32 %v1362, 2147483648
    %v1439 = vxor.u32 %v1364, 2147483648
    %v1440 = vxor.u32 %v1368, 2147483648
    %v1441 = vxor.u32 %v1370, 2147483648
    %v1442 = vxor.u32 %v1372, 2147483648
    %v1443 = vxor.u32 %v1374, 2147483648
    %v1444 = vxor.u32 %v1378, 2147483648
    %v1445 = vxor.u32 %v1380, 2147483648
    %v1446 = vxor.u32 %v1382, 2147483648
    %v1447 = vxor.u32 %v1384, 2147483648
    %v1448 = vxor.u32 %v1388, 2147483648
    %v1449 = vxor.u32 %v1390, 2147483648
    %v1450 = vxor.u32 %v1392, 2147483648
    %v1451 = vxor.u32 %v1394, 2147483648
    %v1452 = vxor.u32 %v1398, 2147483648
    %v1453 = vxor.u32 %v1400, 2147483648
    %v1454 = vxor.u32 %v1402, 2147483648
    %v1455 = vxor.u32 %v1404, 2147483648
    %v1456 = vxor.u32 %v1408, 2147483648
    %v1457 = vxor.u32 %v1410, 2147483648
    %v1458 = vxor.u32 %v1412, 2147483648
    %v1459 = vxor.u32 %v1414, 2147483648
    %v1460 = vxor.u32 %v1418, 2147483648
    %v1461 = vxor.u32 %v1420, 2147483648
    %v1462 = vxor.u32 %v1422, 2147483648
    %v1463 = vxor.u32 %v1424, 2147483648
    %v1464 = vxor.u32 %v1428, 2147483648
    %v1465 = vxor.u32 %v1430, 2147483648
    %v1466 = vxor.u32 %v1432, 2147483648
    %v1467 = vxor.u32 %v1434, 2147483648
    %v1468 = vmul.f32 %v1436, 1.442695
    %v1469 = vpow.pop %v1468
    %v1470 = vmul.f32 %v1437, 1.442695
    %v1471 = vpow.pop %v1470
    %v1472 = vmul.f32 %v1438, 1.442695
    %v1473 = vpow.pop %v1472
    %v1474 = vmul.f32 %v1439, 1.442695
    %v1475 = vpow.pop %v1474
    %v1476 = vmul.f32 %v1440, 1.442695
    %v1477 = vpow.pop %v1476
    %v1478 = vmul.f32 %v1441, 1.442695
    %v1479 = vpow.pop %v1478
    %v1480 = vmul.f32 %v1442, 1.442695
    %v1481 = vpow.pop %v1480
    %v1482 = vmul.f32 %v1443, 1.442695
    %v1483 = vpow.pop %v1482
    %v1484 = vmul.f32 %v1444, 1.442695
    %v1485 = vpow.pop %v1484
    %v1486 = vmul.f32 %v1445, 1.442695
    %v1487 = vpow.pop %v1486
    %v1488 = vmul.f32 %v1446, 1.442695
    %v1489 = vpow.pop %v1488
    %v1490 = vmul.f32 %v1447, 1.442695
    %v1491 = vpow.pop %v1490
    %v1492 = vmul.f32 %v1448, 1.442695
    %v1493 = vpow.pop %v1492
    %v1494 = vmul.f32 %v1449, 1.442695
    %v1495 = vpow.pop %v1494
    %v1496 = vmul.f32 %v1450, 1.442695
    %v1497 = vpow.pop %v1496
    %v1498 = vmul.f32 %v1451, 1.442695
    %v1499 = vpow.pop %v1498
    %v1500 = vmul.f32 %v1452, 1.442695
    %v1501 = vpow.pop %v1500
    %v1502 = vmul.f32 %v1453, 1.442695
    %v1503 = vpow.pop %v1502
    %v1504 = vmul.f32 %v1454, 1.442695
    %v1505 = vpow.pop %v1504
    %v1506 = vmul.f32 %v1455, 1.442695
    %v1507 = vpow.pop %v1506
    %v1508 = vmul.f32 %v1456, 1.442695
    %v1509 = vpow.pop %v1508
    %v1510 = vmul.f32 %v1457, 1.442695
    %v1511 = vpow.pop %v1510
    %v1512 = vmul.f32 %v1458, 1.442695
    %v1513 = vpow.pop %v1512
    %v1514 = vmul.f32 %v1459, 1.442695
    %v1515 = vpow.pop %v1514
    %v1516 = vmul.f32 %v1460, 1.442695
    %v1517 = vpow.pop %v1516
    %v1518 = vmul.f32 %v1461, 1.442695
    %v1519 = vpow.pop %v1518
    %v1520 = vmul.f32 %v1462, 1.442695
    %v1521 = vpow.pop %v1520
    %v1522 = vmul.f32 %v1463, 1.442695
    %v1523 = vpow.pop %v1522
    %v1524 = vmul.f32 %v1464, 1.442695
    %v1525 = vpow.pop %v1524
    %v1526 = vmul.f32 %v1465, 1.442695
    %v1527 = vpow.pop %v1526
    %v1528 = vmul.f32 %v1466, 1.442695
    %v1529 = vpow.pop %v1528
    %v1530 = vmul.f32 %v1467, 1.442695
    %v1531 = vpow.pop %v1530
    %v1532 = vadd.f32 %v1469, 1.0
    %v1533 = vadd.f32 %v1471, 1.0
    %v1534 = vadd.f32 %v1473, 1.0
    %v1535 = vadd.f32 %v1475, 1.0
    %v1536 = vadd.f32 %v1477, 1.0
    %v1537 = vadd.f32 %v1479, 1.0
    %v1538 = vadd.f32 %v1481, 1.0
    %v1539 = vadd.f32 %v1483, 1.0
    %v1540 = vadd.f32 %v1485, 1.0
    %v1541 = vadd.f32 %v1487, 1.0
    %v1542 = vadd.f32 %v1489, 1.0
    %v1543 = vadd.f32 %v1491, 1.0
    %v1544 = vadd.f32 %v1493, 1.0
    %v1545 = vadd.f32 %v1495, 1.0
    %v1546 = vadd.f32 %v1497, 1.0
    %v1547 = vadd.f32 %v1499, 1.0
    %v1548 = vadd.f32 %v1501, 1.0
    %v1549 = vadd.f32 %v1503, 1.0
    %v1550 = vadd.f32 %v1505, 1.0
    %v1551 = vadd.f32 %v1507, 1.0
    %v1552 = vadd.f32 %v1509, 1.0
    %v1553 = vadd.f32 %v1511, 1.0
    %v1554 = vadd.f32 %v1513, 1.0
    %v1555 = vadd.f32 %v1515, 1.0
    %v1556 = vadd.f32 %v1517, 1.0
    %v1557 = vadd.f32 %v1519, 1.0
    %v1558 = vadd.f32 %v1521, 1.0
    %v1559 = vadd.f32 %v1523, 1.0
    %v1560 = vadd.f32 %v1525, 1.0
    %v1561 = vadd.f32 %v1527, 1.0
    %v1562 = vadd.f32 %v1529, 1.0
    %v1563 = vadd.f32 %v1531, 1.0
    %v1564 = vrcp.pop %v1532
    %v1565 = vmul.f32 1.0, %v1564
    %v1566 = vrcp.pop %v1533
    %v1567 = vmul.f32 1.0, %v1566
    %v1568 = vrcp.pop %v1534
    %v1569 = vmul.f32 1.0, %v1568
    %v1570 = vrcp.pop %v1535
    %v1571 = vmul.f32 1.0, %v1570
    %v1572 = vrcp.pop %v1536
    %v1573 = vmul.f32 1.0, %v1572
    %v1574 = vrcp.pop %v1537
    %v1575 = vmul.f32 1.0, %v1574
    %v1576 = vrcp.pop %v1538
    %v1577 = vmul.f32 1.0, %v1576
    %v1578 = vrcp.pop %v1539
    %v1579 = vmul.f32 1.0, %v1578
    %v1580 = vrcp.pop %v1540
    %v1581 = vmul.f32 1.0, %v1580
    %v1582 = vrcp.pop %v1541
    %v1583 = vmul.f32 1.0, %v1582
    %v1584 = vrcp.pop %v1542
    %v1585 = vmul.f32 1.0, %v1584
    %v1586 = vrcp.pop %v1543
    %v1587 = vmul.f32 1.0, %v1586
    %v1588 = vrcp.pop %v1544
    %v1589 = vmul.f32 1.0, %v1588
    %v1590 = vrcp.pop %v1545
    %v1591 = vmul.f32 1.0, %v1590
    %v1592 = vrcp.pop %v1546
    %v1593 = vmul.f32 1.0, %v1592
    %v1594 = vrcp.pop %v1547
    %v1595 = vmul.f32 1.0, %v1594
    %v1596 = vrcp.pop %v1548
    %v1597 = vmul.f32 1.0, %v1596
    %v1598 = vrcp.pop %v1549
    %v1599 = vmul.f32 1.0, %v1598
    %v1600 = vrcp.pop %v1550
    %v1601 = vmul.f32 1.0, %v1600
    %v1602 = vrcp.pop %v1551
    %v1603 = vmul.f32 1.0, %v1602
    %v1604 = vrcp.pop %v1552
    %v1605 = vmul.f32 1.0, %v1604
    %v1606 = vrcp.pop %v1553
    %v1607 = vmul.f32 1.0, %v1606
    %v1608 = vrcp.pop %v1554
    %v1609 = vmul.f32 1.0, %v1608
    %v1610 = vrcp.pop %v1555
    %v1611 = vmul.f32 1.0, %v1610
    %v1612 = vrcp.pop %v1556
    %v1613 = vmul.f32 1.0, %v1612
    %v1614 = vrcp.pop %v1557
    %v1615 = vmul.f32 1.0, %v1614
    %v1616 = vrcp.pop %v1558
    %v1617 = vmul.f32 1.0, %v1616
    %v1618 = vrcp.pop %v1559
    %v1619 = vmul.f32 1.0, %v1618
    %v1620 = vrcp.pop %v1560
    %v1621 = vmul.f32 1.0, %v1620
    %v1622 = vrcp.pop %v1561
    %v1623 = vmul.f32 1.0, %v1622
    %v1624 = vrcp.pop %v1562
    %v1625 = vmul.f32 1.0, %v1624
    %v1626 = vrcp.pop %v1563
    %v1627 = vmul.f32 1.0, %v1626
    %v1628 = vmul.f32 %v1358, %v1565
    %v1629 = vmul.f32 %v1360, %v1567
    %v1630 = vmul.f32 %v1362, %v1569
    %v1631 = vmul.f32 %v1364, %v1571
    %v1632 = vmul.f32 %v1368, %v1573
    %v1633 = vmul.f32 %v1370, %v1575
    %v1634 = vmul.f32 %v1372, %v1577
    %v1635 = vmul.f32 %v1374, %v1579
    %v1636 = vmul.f32 %v1378, %v1581
    %v1637 = vmul.f32 %v1380, %v1583
    %v1638 = vmul.f32 %v1382, %v1585
    %v1639 = vmul.f32 %v1384, %v1587
    %v1640 = vmul.f32 %v1388, %v1589
    %v1641 = vmul.f32 %v1390, %v1591
    %v1642 = vmul.f32 %v1392, %v1593
    %v1643 = vmul.f32 %v1394, %v1595
    %v1644 = vmul.f32 %v1398, %v1597
    %v1645 = vmul.f32 %v1400, %v1599
    %v1646 = vmul.f32 %v1402, %v1601
    %v1647 = vmul.f32 %v1404, %v1603
    %v1648 = vmul.f32 %v1408, %v1605
    %v1649 = vmul.f32 %v1410, %v1607
    %v1650 = vmul.f32 %v1412, %v1609
    %v1651 = vmul.f32 %v1414, %v1611
    %v1652 = vmul.f32 %v1418, %v1613
    %v1653 = vmul.f32 %v1420, %v1615
    %v1654 = vmul.f32 %v1422, %v1617
    %v1655 = vmul.f32 %v1424, %v1619
    %v1656 = vmul.f32 %v1428, %v1621
    %v1657 = vmul.f32 %v1430, %v1623
    %v1658 = vmul.f32 %v1432, %v1625
    %v1659 = vmul.f32 %v1434, %v1627
    %v1660 = vld [vmem:[%s12] sm:$0xff]
    %v1661 = vld [vmem:[%s12 + $0x8] sm:$0xff]
    %v1662 = vld [vmem:[%s12 + $0x10] sm:$0xff]
    %v1663 = vld [vmem:[%s12 + $0x18] sm:$0xff]
    %v1664 = vld [vmem:[%s12 + $0x20] sm:$0xff]
    %v1665 = vld [vmem:[%s12 + $0x28] sm:$0xff]
    %v1666 = vld [vmem:[%s12 + $0x30] sm:$0xff]
    %v1667 = vld [vmem:[%s12 + $0x38] sm:$0xff]
    %v1668 = vld [vmem:[%s12 + $0x40] sm:$0xff]
    %v1669 = vld [vmem:[%s12 + $0x48] sm:$0xff]
    %v1670 = vld [vmem:[%s12 + $0x50] sm:$0xff]
    %v1671 = vld [vmem:[%s12 + $0x58] sm:$0xff]
    %v1672 = vld [vmem:[%s12 + $0x60] sm:$0xff]
    %v1673 = vld [vmem:[%s12 + $0x68] sm:$0xff]
    %v1674 = vld [vmem:[%s12 + $0x70] sm:$0xff]
    %v1675 = vld [vmem:[%s12 + $0x78] sm:$0xff]
    %v1676 = vld [vmem:[%s12 + $0x80] sm:$0xff]
    %v1677 = vld [vmem:[%s12 + $0x88] sm:$0xff]
    %v1678 = vld [vmem:[%s12 + $0x90] sm:$0xff]
    %v1679 = vld [vmem:[%s12 + $0x98] sm:$0xff]
    %v1680 = vld [vmem:[%s12 + $0xa0] sm:$0xff]
    %v1681 = vld [vmem:[%s12 + $0xa8] sm:$0xff]
    %v1682 = vld [vmem:[%s12 + $0xb0] sm:$0xff]
    %v1683 = vld [vmem:[%s12 + $0xb8] sm:$0xff]
    %v1684 = vld [vmem:[%s12 + $0xc0] sm:$0xff]
    %v1685 = vld [vmem:[%s12 + $0xc8] sm:$0xff]
    %v1686 = vld [vmem:[%s12 + $0xd0] sm:$0xff]
    %v1687 = vld [vmem:[%s12 + $0xd8] sm:$0xff]
    %v1688 = vld [vmem:[%s12 + $0xe0] sm:$0xff]
    %v1689 = vld [vmem:[%s12 + $0xe8] sm:$0xff]
    %v1690 = vld [vmem:[%s12 + $0xf0] sm:$0xff]
    %v1691 = vld [vmem:[%s12 + $0xf8] sm:$0xff]
    %v1692 = vpack.c.bf16 %v1630, %v1628
    %v1693 = vpack.c.bf16 %v1631, %v1629
    %v1694 = vpack.c.bf16 %v1634, %v1632
    %v1695 = vpack.c.bf16 %v1635, %v1633
    %v1696 = vpack.c.bf16 %v1638, %v1636
    %v1697 = vpack.c.bf16 %v1639, %v1637
    %v1698 = vpack.c.bf16 %v1642, %v1640
    %v1699 = vpack.c.bf16 %v1643, %v1641
    %v1700 = vpack.c.bf16 %v1646, %v1644
    %v1701 = vpack.c.bf16 %v1647, %v1645
    %v1702 = vpack.c.bf16 %v1650, %v1648
    %v1703 = vpack.c.bf16 %v1651, %v1649
    %v1704 = vpack.c.bf16 %v1654, %v1652
    %v1705 = vpack.c.bf16 %v1655, %v1653
    %v1706 = vpack.c.bf16 %v1658, %v1656
    %v1707 = vpack.c.bf16 %v1659, %v1657
    %v1740 = vunpack.c.l.b16 %v1660
    %v1741 = vunpack.c.h.b16 %v1660
    %v1742 = vunpack.c.l.b16 %v1661
    %v1743 = vunpack.c.h.b16 %v1661
    %v1744 = vunpack.c.l.b16 %v1662
    %v1745 = vunpack.c.h.b16 %v1662
    %v1746 = vunpack.c.l.b16 %v1663
    %v1747 = vunpack.c.h.b16 %v1663
    %v1748 = vunpack.c.l.b16 %v1664
    %v1749 = vunpack.c.h.b16 %v1664
    %v1750 = vunpack.c.l.b16 %v1665
    %v1751 = vunpack.c.h.b16 %v1665
    %v1752 = vunpack.c.l.b16 %v1666
    %v1753 = vunpack.c.h.b16 %v1666
    %v1754 = vunpack.c.l.b16 %v1667
    %v1755 = vunpack.c.h.b16 %v1667
    %v1756 = vunpack.c.l.b16 %v1668
    %v1757 = vunpack.c.h.b16 %v1668
    %v1758 = vunpack.c.l.b16 %v1669
    %v1759 = vunpack.c.h.b16 %v1669
    %v1760 = vunpack.c.l.b16 %v1670
    %v1761 = vunpack.c.h.b16 %v1670
    %v1762 = vunpack.c.l.b16 %v1671
    %v1763 = vunpack.c.h.b16 %v1671
    %v1764 = vunpack.c.l.b16 %v1672
    %v1765 = vunpack.c.h.b16 %v1672
    %v1766 = vunpack.c.l.b16 %v1673
    %v1767 = vunpack.c.h.b16 %v1673
    %v1768 = vunpack.c.l.b16 %v1674
    %v1769 = vunpack.c.h.b16 %v1674
    %v1770 = vunpack.c.l.b16 %v1675
    %v1771 = vunpack.c.h.b16 %v1675
    %v1772 = vunpack.c.l.b16 %v1676
    %v1773 = vunpack.c.h.b16 %v1676
    %v1774 = vunpack.c.l.b16 %v1677
    %v1775 = vunpack.c.h.b16 %v1677
    %v1776 = vunpack.c.l.b16 %v1678
    %v1777 = vunpack.c.h.b16 %v1678
    %v1778 = vunpack.c.l.b16 %v1679
    %v1779 = vunpack.c.h.b16 %v1679
    %v1780 = vunpack.c.l.b16 %v1680
    %v1781 = vunpack.c.h.b16 %v1680
    %v1782 = vunpack.c.l.b16 %v1681
    %v1783 = vunpack.c.h.b16 %v1681
    %v1784 = vunpack.c.l.b16 %v1682
    %v1785 = vunpack.c.h.b16 %v1682
    %v1786 = vunpack.c.l.b16 %v1683
    %v1787 = vunpack.c.h.b16 %v1683
    %v1788 = vunpack.c.l.b16 %v1684
    %v1789 = vunpack.c.h.b16 %v1684
    %v1790 = vunpack.c.l.b16 %v1685
    %v1791 = vunpack.c.h.b16 %v1685
    %v1792 = vunpack.c.l.b16 %v1686
    %v1793 = vunpack.c.h.b16 %v1686
    %v1794 = vunpack.c.l.b16 %v1687
    %v1795 = vunpack.c.h.b16 %v1687
    %v1796 = vunpack.c.l.b16 %v1688
    %v1797 = vunpack.c.h.b16 %v1688
    %v1798 = vunpack.c.l.b16 %v1689
    %v1799 = vunpack.c.h.b16 %v1689
    %v1800 = vunpack.c.l.b16 %v1690
    %v1801 = vunpack.c.h.b16 %v1690
    %v1802 = vunpack.c.l.b16 %v1691
    %v1803 = vunpack.c.h.b16 %v1691
    %v1804 = vpack.c.b16 %v1742, %v1740
    %v1805 = vpack.c.b16 %v1743, %v1741
    %v1806 = vpack.c.b16 %v1746, %v1744
    %v1807 = vpack.c.b16 %v1747, %v1745
    %v1808 = vpack.c.b16 %v1750, %v1748
    %v1809 = vpack.c.b16 %v1751, %v1749
    %v1810 = vpack.c.b16 %v1754, %v1752
    %v1811 = vpack.c.b16 %v1755, %v1753
    %v1812 = vpack.c.b16 %v1758, %v1756
    %v1813 = vpack.c.b16 %v1759, %v1757
    %v1814 = vpack.c.b16 %v1762, %v1760
    %v1815 = vpack.c.b16 %v1763, %v1761
    %v1816 = vpack.c.b16 %v1766, %v1764
    %v1817 = vpack.c.b16 %v1767, %v1765
    %v1818 = vpack.c.b16 %v1770, %v1768
    %v1819 = vpack.c.b16 %v1771, %v1769
    %v1820 = vpack.c.b16 %v1774, %v1772
    %v1821 = vpack.c.b16 %v1775, %v1773
    %v1822 = vpack.c.b16 %v1778, %v1776
    %v1823 = vpack.c.b16 %v1779, %v1777
    %v1824 = vpack.c.b16 %v1782, %v1780
    %v1825 = vpack.c.b16 %v1783, %v1781
    %v1826 = vpack.c.b16 %v1786, %v1784
    %v1827 = vpack.c.b16 %v1787, %v1785
    %v1828 = vpack.c.b16 %v1790, %v1788
    %v1829 = vpack.c.b16 %v1791, %v1789
    %v1830 = vpack.c.b16 %v1794, %v1792
    %v1831 = vpack.c.b16 %v1795, %v1793
    %v1832 = vpack.c.b16 %v1798, %v1796
    %v1833 = vpack.c.b16 %v1799, %v1797
    %v1834 = vpack.c.b16 %v1802, %v1800
    %v1835 = vpack.c.b16 %v1803, %v1801
    %1868 = vmatprep.subr.bf16.mxu0 %v1805
    %1869 = vmatpush1.bf16.msra.mxu0 %v1804
    %1870 = vmatprep.subr.bf16.mxu0 %v1807
    %1871 = vmatpush1.bf16.msra.mxu0 %v1806
    %1872 = vmatprep.subr.bf16.mxu0 %v1809
    %1873 = vmatpush1.bf16.msra.mxu0 %v1808
    %1874 = vmatprep.subr.bf16.mxu0 %v1811
    %1875 = vmatpush1.bf16.msra.mxu0 %v1810
    %1876 = vmatprep.subr.bf16.mxu0 %v1813
    %1877 = vmatpush1.bf16.msra.mxu0 %v1812
    %1878 = vmatprep.subr.bf16.mxu0 %v1815
    %1879 = vmatpush1.bf16.msra.mxu0 %v1814
    %1880 = vmatprep.subr.bf16.mxu0 %v1817
    %1881 = vmatpush1.bf16.msra.mxu0 %v1816
    %1882 = vmatprep.subr.bf16.mxu0 %v1819
    %1883 = vmatpush1.bf16.msra.mxu0 %v1818
    %1884 = vmatprep.subr.bf16.mxu0 %v1821
    %1885 = vmatpush1.bf16.msra.mxu0 %v1820
    %1886 = vmatprep.subr.bf16.mxu0 %v1823
    %1887 = vmatpush1.bf16.msra.mxu0 %v1822
    %1888 = vmatprep.subr.bf16.mxu0 %v1825
    %1889 = vmatpush1.bf16.msra.mxu0 %v1824
    %1890 = vmatprep.subr.bf16.mxu0 %v1827
    %1891 = vmatpush1.bf16.msra.mxu0 %v1826
    %1892 = vmatprep.subr.bf16.mxu0 %v1829
    %1893 = vmatpush1.bf16.msra.mxu0 %v1828
    %1894 = vmatprep.subr.bf16.mxu0 %v1831
    %1895 = vmatpush1.bf16.msra.mxu0 %v1830
    %1896 = vmatprep.subr.bf16.mxu0 %v1833
    %1897 = vmatpush1.bf16.msra.mxu0 %v1832
    %1898 = vmatprep.subr.bf16.mxu0 %v1835
    %1899 = vmatpush1.bf16.msra.mxu0 %v1834
    %1900 = vmatprep.mubr.bf16.mxu0 %v1693
    %1901 = vmatmul.mubr.bf16.gmra.mrb[0].mxu0 %v1692
    %v1902 = vpop.f32.mrb[0].mxu0
    %v1903 = vadd.f32 0.0, %v1902
    %v1904 = vpop.f32.mrb[0].mxu0
    %v1905 = vadd.f32 0.0, %v1904
    %v1906 = vpop.f32.mrb[0].mxu0
    %v1907 = vadd.f32 0.0, %v1906
    %v1908 = vpop.f32.mrb[0].mxu0
    %v1909 = vadd.f32 0.0, %v1908
    %1910 = vmatprep.mubr.bf16.mxu0 %v1695
    %1911 = vmatmul.mubr.bf16.gmra.mrb[0].mxu0 %v1694
    %v1912 = vpop.f32.mrb[0].mxu0
    %v1913 = vadd.f32 0.0, %v1912
    %v1914 = vpop.f32.mrb[0].mxu0
    %v1915 = vadd.f32 0.0, %v1914
    %v1916 = vpop.f32.mrb[0].mxu0
    %v1917 = vadd.f32 0.0, %v1916
    %v1918 = vpop.f32.mrb[0].mxu0
    %v1919 = vadd.f32 0.0, %v1918
    %1920 = vmatprep.mubr.bf16.mxu0 %v1697
    %1921 = vmatmul.mubr.bf16.gmra.mrb[0].mxu0 %v1696
    %v1922 = vpop.f32.mrb[0].mxu0
    %v1923 = vadd.f32 0.0, %v1922
    %v1924 = vpop.f32.mrb[0].mxu0
    %v1925 = vadd.f32 0.0, %v1924
    %v1926 = vpop.f32.mrb[0].mxu0
    %v1927 = vadd.f32 0.0, %v1926
    %v1928 = vpop.f32.mrb[0].mxu0
    %v1929 = vadd.f32 0.0, %v1928
    %1930 = vmatprep.mubr.bf16.mxu0 %v1699
    %1931 = vmatmul.mubr.bf16.gmra.mrb[0].mxu0 %v1698
    %v1932 = vpop.f32.mrb[0].mxu0
    %v1933 = vadd.f32 0.0, %v1932
    %v1934 = vpop.f32.mrb[0].mxu0
    %v1935 = vadd.f32 0.0, %v1934
    %v1936 = vpop.f32.mrb[0].mxu0
    %v1937 = vadd.f32 0.0, %v1936
    %v1938 = vpop.f32.mrb[0].mxu0
    %v1939 = vadd.f32 0.0, %v1938
    %1940 = vmatprep.mubr.bf16.mxu0 %v1701
    %1941 = vmatmul.mubr.bf16.gmra.mrb[0].mxu0 %v1700
    %v1942 = vpop.f32.mrb[0].mxu0
    %v1943 = vadd.f32 0.0, %v1942
    %v1944 = vpop.f32.mrb[0].mxu0
    %v1945 = vadd.f32 0.0, %v1944
    %v1946 = vpop.f32.mrb[0].mxu0
    %v1947 = vadd.f32 0.0, %v1946
    %v1948 = vpop.f32.mrb[0].mxu0
    %v1949 = vadd.f32 0.0, %v1948
    %1950 = vmatprep.mubr.bf16.mxu0 %v1703
    %1951 = vmatmul.mubr.bf16.gmra.mrb[0].mxu0 %v1702
    %v1952 = vpop.f32.mrb[0].mxu0
    %v1953 = vadd.f32 0.0, %v1952
    %v1954 = vpop.f32.mrb[0].mxu0
    %v1955 = vadd.f32 0.0, %v1954
    %v1956 = vpop.f32.mrb[0].mxu0
    %v1957 = vadd.f32 0.0, %v1956
    %v1958 = vpop.f32.mrb[0].mxu0
    %v1959 = vadd.f32 0.0, %v1958
    %1960 = vmatprep.mubr.bf16.mxu0 %v1705
    %1961 = vmatmul.mubr.bf16.gmra.mrb[0].mxu0 %v1704
    %v1962 = vpop.f32.mrb[0].mxu0
    %v1963 = vadd.f32 0.0, %v1962
    %v1964 = vpop.f32.mrb[0].mxu0
    %v1965 = vadd.f32 0.0, %v1964
    %v1966 = vpop.f32.mrb[0].mxu0
    %v1967 = vadd.f32 0.0, %v1966
    %v1968 = vpop.f32.mrb[0].mxu0
    %v1969 = vadd.f32 0.0, %v1968
    %1970 = vmatprep.mubr.bf16.mxu0 %v1707
    %1971 = vmatmul.mubr.bf16.gmra.mrb[0].mxu0 %v1706
    %v1972 = vpop.f32.mrb[0].mxu0
    %v1973 = vadd.f32 0.0, %v1972
    %v1974 = vpop.f32.mrb[0].mxu0
    %v1975 = vadd.f32 0.0, %v1974
    %v1976 = vpop.f32.mrb[0].mxu0
    %v1977 = vadd.f32 0.0, %v1976
    %v1978 = vpop.f32.mrb[0].mxu0
    %v1979 = vadd.f32 0.0, %v1978
    %1980 = vdwg.mxu0
    %v1981 = vld [vmem:[%s2] sm:$0xff]
    %v1982 = vld [vmem:[%s2 + $0x8] sm:$0xff]
    %v1983 = vld [vmem:[%s2 + $0x10] sm:$0xff]
    %v1984 = vld [vmem:[%s2 + $0x18] sm:$0xff]
    %v1985 = vld [vmem:[%s2 + $0x20] sm:$0xff]
    %v1986 = vld [vmem:[%s2 + $0x28] sm:$0xff]
    %v1987 = vld [vmem:[%s2 + $0x30] sm:$0xff]
    %v1988 = vld [vmem:[%s2 + $0x38] sm:$0xff]
    %v1989 = vld [vmem:[%s2 + $0x40] sm:$0xff]
    %v1990 = vld [vmem:[%s2 + $0x48] sm:$0xff]
    %v1991 = vld [vmem:[%s2 + $0x50] sm:$0xff]
    %v1992 = vld [vmem:[%s2 + $0x58] sm:$0xff]
    %v1993 = vld [vmem:[%s2 + $0x60] sm:$0xff]
    %v1994 = vld [vmem:[%s2 + $0x68] sm:$0xff]
    %v1995 = vld [vmem:[%s2 + $0x70] sm:$0xff]
    %v1996 = vld [vmem:[%s2 + $0x78] sm:$0xff]
    %1998 = vset.pattern.permute.xlu0 0
    %1999 = vperm.xlu0 %1998, %v1981
    %v2000 = vpop.permute.xlu0 %1999
    %2003 = vset.pattern.permute.xlu0 0
    %2004 = vperm.xlu0 %2003, %v1982
    %v2005 = vpop.permute.xlu0 %2004
    %2008 = vset.pattern.permute.xlu0 0
    %2009 = vperm.xlu0 %2008, %v1983
    %v2010 = vpop.permute.xlu0 %2009
    %2013 = vset.pattern.permute.xlu0 0
    %2014 = vperm.xlu0 %2013, %v1984
    %v2015 = vpop.permute.xlu0 %2014
    %2018 = vset.pattern.permute.xlu0 0
    %2019 = vperm.xlu0 %2018, %v1985
    %v2020 = vpop.permute.xlu0 %2019
    %2023 = vset.pattern.permute.xlu0 0
    %2024 = vperm.xlu0 %2023, %v1986
    %v2025 = vpop.permute.xlu0 %2024
    %2028 = vset.pattern.permute.xlu0 0
    %2029 = vperm.xlu0 %2028, %v1987
    %v2030 = vpop.permute.xlu0 %2029
    %2033 = vset.pattern.permute.xlu0 0
    %2034 = vperm.xlu0 %2033, %v1988
    %v2035 = vpop.permute.xlu0 %2034
    %2038 = vset.pattern.permute.xlu0 0
    %2039 = vperm.xlu0 %2038, %v1989
    %v2040 = vpop.permute.xlu0 %2039
    %2043 = vset.pattern.permute.xlu0 0
    %2044 = vperm.xlu0 %2043, %v1990
    %v2045 = vpop.permute.xlu0 %2044
    %2048 = vset.pattern.permute.xlu0 0
    %2049 = vperm.xlu0 %2048, %v1991
    %v2050 = vpop.permute.xlu0 %2049
    %2053 = vset.pattern.permute.xlu0 0
    %2054 = vperm.xlu0 %2053, %v1992
    %v2055 = vpop.permute.xlu0 %2054
    %2058 = vset.pattern.permute.xlu0 0
    %2059 = vperm.xlu0 %2058, %v1993
    %v2060 = vpop.permute.xlu0 %2059
    %2063 = vset.pattern.permute.xlu0 0
    %2064 = vperm.xlu0 %2063, %v1994
    %v2065 = vpop.permute.xlu0 %2064
    %2068 = vset.pattern.permute.xlu0 0
    %2069 = vperm.xlu0 %2068, %v1995
    %v2070 = vpop.permute.xlu0 %2069
    %2073 = vset.pattern.permute.xlu0 0
    %2074 = vperm.xlu0 %2073, %v1996
    %v2075 = vpop.permute.xlu0 %2074
    %v2077 = vmul.f32 %v1903, %v2000
    %v2078 = vmul.f32 %v1907, %v2005
    %v2079 = vmul.f32 %v1913, %v2010
    %v2080 = vmul.f32 %v1917, %v2015
    %v2081 = vmul.f32 %v1923, %v2020
    %v2082 = vmul.f32 %v1927, %v2025
    %v2083 = vmul.f32 %v1933, %v2030
    %v2084 = vmul.f32 %v1937, %v2035
    %v2085 = vmul.f32 %v1943, %v2040
    %v2086 = vmul.f32 %v1947, %v2045
    %v2087 = vmul.f32 %v1953, %v2050
    %v2088 = vmul.f32 %v1957, %v2055
    %v2089 = vmul.f32 %v1963, %v2060
    %v2090 = vmul.f32 %v1967, %v2065
    %v2091 = vmul.f32 %v1973, %v2070
    %v2092 = vmul.f32 %v1977, %v2075
    %v2093 = vmul.f32 %v1905, %v804
    %v2094 = vmul.f32 %v1909, %v808
    %v2095 = vmul.f32 %v1915, %v814
    %v2096 = vmul.f32 %v1919, %v818
    %v2097 = vmul.f32 %v1925, %v824
    %v2098 = vmul.f32 %v1929, %v828
    %v2099 = vmul.f32 %v1935, %v834
    %v2100 = vmul.f32 %v1939, %v838
    %v2101 = vmul.f32 %v1945, %v844
    %v2102 = vmul.f32 %v1949, %v848
    %v2103 = vmul.f32 %v1955, %v854
    %v2104 = vmul.f32 %v1959, %v858
    %v2105 = vmul.f32 %v1965, %v864
    %v2106 = vmul.f32 %v1969, %v868
    %v2107 = vmul.f32 %v1975, %v874
    %v2108 = vmul.f32 %v1979, %v878
    %v2109 = vadd.f32 %v2077, %v2093
    %v2110 = vadd.f32 %v2078, %v2094
    %v2111 = vadd.f32 %v2079, %v2095
    %v2112 = vadd.f32 %v2080, %v2096
    %v2113 = vadd.f32 %v2081, %v2097
    %v2114 = vadd.f32 %v2082, %v2098
    %v2115 = vadd.f32 %v2083, %v2099
    %v2116 = vadd.f32 %v2084, %v2100
    %v2117 = vadd.f32 %v2085, %v2101
    %v2118 = vadd.f32 %v2086, %v2102
    %v2119 = vadd.f32 %v2087, %v2103
    %v2120 = vadd.f32 %v2088, %v2104
    %v2121 = vadd.f32 %v2089, %v2105
    %v2122 = vadd.f32 %v2090, %v2106
    %v2123 = vadd.f32 %v2091, %v2107
    %v2124 = vadd.f32 %v2092, %v2108
    %v2125 = vpack.c.bf16 %v2110, %v2109
    %v2126 = vpack.c.bf16 %v2112, %v2111
    %v2127 = vpack.c.bf16 %v2114, %v2113
    %v2128 = vpack.c.bf16 %v2116, %v2115
    %v2129 = vpack.c.bf16 %v2118, %v2117
    %v2130 = vpack.c.bf16 %v2120, %v2119
    %v2131 = vpack.c.bf16 %v2122, %v2121
    %v2132 = vpack.c.bf16 %v2124, %v2123
    %2133 = vst [vmem:[#allocation3 + $0x8] sm:$0xff] %v2125
    %2134 = vst [vmem:[#allocation3 + $0x28] sm:$0xff] %v2126
    %2135 = vst [vmem:[#allocation3 + $0x48] sm:$0xff] %v2127
    %2136 = vst [vmem:[#allocation3 + $0x68] sm:$0xff] %v2128
    %2137 = vst [vmem:[#allocation3 + $0x88] sm:$0xff] %v2129
    %2138 = vst [vmem:[#allocation3 + $0xa8] sm:$0xff] %v2130
    %2139 = vst [vmem:[#allocation3 + $0xc8] sm:$0xff] %v2131
    %2140 = vst [vmem:[#allocation3 + $0xe8] sm:$0xff] %v2132
    %2141 = vset.pattern.permute.xlu0 1
    %2142 = vperm.xlu0 %2141, %v1981
    %v2143 = vpop.permute.xlu0 %2142
    %2145 = vset.pattern.permute.xlu0 1
    %2146 = vperm.xlu0 %2145, %v1982
    %v2147 = vpop.permute.xlu0 %2146
    %2149 = vset.pattern.permute.xlu0 1
    %2150 = vperm.xlu0 %2149, %v1983
    %v2151 = vpop.permute.xlu0 %2150
    %2153 = vset.pattern.permute.xlu0 1
    %2154 = vperm.xlu0 %2153, %v1984
    %v2155 = vpop.permute.xlu0 %2154
    %2157 = vset.pattern.permute.xlu0 1
    %2158 = vperm.xlu0 %2157, %v1985
    %v2159 = vpop.permute.xlu0 %2158
    %2161 = vset.pattern.permute.xlu0 1
    %2162 = vperm.xlu0 %2161, %v1986
    %v2163 = vpop.permute.xlu0 %2162
    %2165 = vset.pattern.permute.xlu0 1
    %2166 = vperm.xlu0 %2165, %v1987
    %v2167 = vpop.permute.xlu0 %2166
    %2169 = vset.pattern.permute.xlu0 1
    %2170 = vperm.xlu0 %2169, %v1988
    %v2171 = vpop.permute.xlu0 %2170
    %2173 = vset.pattern.permute.xlu0 1
    %2174 = vperm.xlu0 %2173, %v1989
    %v2175 = vpop.permute.xlu0 %2174
    %2177 = vset.pattern.permute.xlu0 1
    %2178 = vperm.xlu0 %2177, %v1990
    %v2179 = vpop.permute.xlu0 %2178
    %2181 = vset.pattern.permute.xlu0 1
    %2182 = vperm.xlu0 %2181, %v1991
    %v2183 = vpop.permute.xlu0 %2182
    %2185 = vset.pattern.permute.xlu0 1
    %2186 = vperm.xlu0 %2185, %v1992
    %v2187 = vpop.permute.xlu0 %2186
    %2189 = vset.pattern.permute.xlu0 1
    %2190 = vperm.xlu0 %2189, %v1993
    %v2191 = vpop.permute.xlu0 %2190
    %2193 = vset.pattern.permute.xlu0 1
    %2194 = vperm.xlu0 %2193, %v1994
    %v2195 = vpop.permute.xlu0 %2194
    %2197 = vset.pattern.permute.xlu0 1
    %2198 = vperm.xlu0 %2197, %v1995
    %v2199 = vpop.permute.xlu0 %2198
    %2201 = vset.pattern.permute.xlu0 1
    %2202 = vperm.xlu0 %2201, %v1996
    %v2203 = vpop.permute.xlu0 %2202
    %v2205 = vmul.f32 %v1903, %v2143
    %v2206 = vmul.f32 %v1907, %v2147
    %v2207 = vmul.f32 %v1913, %v2151
    %v2208 = vmul.f32 %v1917, %v2155
    %v2209 = vmul.f32 %v1923, %v2159
    %v2210 = vmul.f32 %v1927, %v2163
    %v2211 = vmul.f32 %v1933, %v2167
    %v2212 = vmul.f32 %v1937, %v2171
    %v2213 = vmul.f32 %v1943, %v2175
    %v2214 = vmul.f32 %v1947, %v2179
    %v2215 = vmul.f32 %v1953, %v2183
    %v2216 = vmul.f32 %v1957, %v2187
    %v2217 = vmul.f32 %v1963, %v2191
    %v2218 = vmul.f32 %v1967, %v2195
    %v2219 = vmul.f32 %v1973, %v2199
    %v2220 = vmul.f32 %v1977, %v2203
    %v2221 = vmul.f32 %v1905, %v915
    %v2222 = vmul.f32 %v1909, %v919
    %v2223 = vmul.f32 %v1915, %v925
    %v2224 = vmul.f32 %v1919, %v929
    %v2225 = vmul.f32 %v1925, %v935
    %v2226 = vmul.f32 %v1929, %v939
    %v2227 = vmul.f32 %v1935, %v945
    %v2228 = vmul.f32 %v1939, %v949
    %v2229 = vmul.f32 %v1945, %v955
    %v2230 = vmul.f32 %v1949, %v959
    %v2231 = vmul.f32 %v1955, %v965
    %v2232 = vmul.f32 %v1959, %v969
    %v2233 = vmul.f32 %v1965, %v975
    %v2234 = vmul.f32 %v1969, %v979
    %v2235 = vmul.f32 %v1975, %v985
    %v2236 = vmul.f32 %v1979, %v989
    %v2237 = vadd.f32 %v2205, %v2221
    %v2238 = vadd.f32 %v2206, %v2222
    %v2239 = vadd.f32 %v2207, %v2223
    %v2240 = vadd.f32 %v2208, %v2224
    %v2241 = vadd.f32 %v2209, %v2225
    %v2242 = vadd.f32 %v2210, %v2226
    %v2243 = vadd.f32 %v2211, %v2227
    %v2244 = vadd.f32 %v2212, %v2228
    %v2245 = vadd.f32 %v2213, %v2229
    %v2246 = vadd.f32 %v2214, %v2230
    %v2247 = vadd.f32 %v2215, %v2231
    %v2248 = vadd.f32 %v2216, %v2232
    %v2249 = vadd.f32 %v2217, %v2233
    %v2250 = vadd.f32 %v2218, %v2234
    %v2251 = vadd.f32 %v2219, %v2235
    %v2252 = vadd.f32 %v2220, %v2236
    %v2253 = vpack.c.bf16 %v2238, %v2237
    %v2254 = vpack.c.bf16 %v2240, %v2239
    %v2255 = vpack.c.bf16 %v2242, %v2241
    %v2256 = vpack.c.bf16 %v2244, %v2243
    %v2257 = vpack.c.bf16 %v2246, %v2245
    %v2258 = vpack.c.bf16 %v2248, %v2247
    %v2259 = vpack.c.bf16 %v2250, %v2249
    %v2260 = vpack.c.bf16 %v2252, %v2251
    %2261 = vst [vmem:[#allocation3 + $0x10] sm:$0xff] %v2253
    %2262 = vst [vmem:[#allocation3 + $0x30] sm:$0xff] %v2254
    %2263 = vst [vmem:[#allocation3 + $0x50] sm:$0xff] %v2255
    %2264 = vst [vmem:[#allocation3 + $0x70] sm:$0xff] %v2256
    %2265 = vst [vmem:[#allocation3 + $0x90] sm:$0xff] %v2257
    %2266 = vst [vmem:[#allocation3 + $0xb0] sm:$0xff] %v2258
    %2267 = vst [vmem:[#allocation3 + $0xd0] sm:$0xff] %v2259
    %2268 = vst [vmem:[#allocation3 + $0xf0] sm:$0xff] %v2260
    %2269 = vset.pattern.permute.xlu0 2
    %2270 = vperm.xlu0 %2269, %v1981
    %v2271 = vpop.permute.xlu0 %2270
    %2273 = vset.pattern.permute.xlu0 2
    %2274 = vperm.xlu0 %2273, %v1982
    %v2275 = vpop.permute.xlu0 %2274
    %2277 = vset.pattern.permute.xlu0 2
    %2278 = vperm.xlu0 %2277, %v1983
    %v2279 = vpop.permute.xlu0 %2278
    %2281 = vset.pattern.permute.xlu0 2
    %2282 = vperm.xlu0 %2281, %v1984
    %v2283 = vpop.permute.xlu0 %2282
    %2285 = vset.pattern.permute.xlu0 2
    %2286 = vperm.xlu0 %2285, %v1985
    %v2287 = vpop.permute.xlu0 %2286
    %2289 = vset.pattern.permute.xlu0 2
    %2290 = vperm.xlu0 %2289, %v1986
    %v2291 = vpop.permute.xlu0 %2290
    %2293 = vset.pattern.permute.xlu0 2
    %2294 = vperm.xlu0 %2293, %v1987
    %v2295 = vpop.permute.xlu0 %2294
    %2297 = vset.pattern.permute.xlu0 2
    %2298 = vperm.xlu0 %2297, %v1988
    %v2299 = vpop.permute.xlu0 %2298
    %2301 = vset.pattern.permute.xlu0 2
    %2302 = vperm.xlu0 %2301, %v1989
    %v2303 = vpop.permute.xlu0 %2302
    %2305 = vset.pattern.permute.xlu0 2
    %2306 = vperm.xlu0 %2305, %v1990
    %v2307 = vpop.permute.xlu0 %2306
    %2309 = vset.pattern.permute.xlu0 2
    %2310 = vperm.xlu0 %2309, %v1991
    %v2311 = vpop.permute.xlu0 %2310
    %2313 = vset.pattern.permute.xlu0 2
    %2314 = vperm.xlu0 %2313, %v1992
    %v2315 = vpop.permute.xlu0 %2314
    %2317 = vset.pattern.permute.xlu0 2
    %2318 = vperm.xlu0 %2317, %v1993
    %v2319 = vpop.permute.xlu0 %2318
    %2321 = vset.pattern.permute.xlu0 2
    %2322 = vperm.xlu0 %2321, %v1994
    %v2323 = vpop.permute.xlu0 %2322
    %2325 = vset.pattern.permute.xlu0 2
    %2326 = vperm.xlu0 %2325, %v1995
    %v2327 = vpop.permute.xlu0 %2326
    %2329 = vset.pattern.permute.xlu0 2
    %2330 = vperm.xlu0 %2329, %v1996
    %v2331 = vpop.permute.xlu0 %2330
    %v2333 = vmul.f32 %v1903, %v2271
    %v2334 = vmul.f32 %v1907, %v2275
    %v2335 = vmul.f32 %v1913, %v2279
    %v2336 = vmul.f32 %v1917, %v2283
    %v2337 = vmul.f32 %v1923, %v2287
    %v2338 = vmul.f32 %v1927, %v2291
    %v2339 = vmul.f32 %v1933, %v2295
    %v2340 = vmul.f32 %v1937, %v2299
    %v2341 = vmul.f32 %v1943, %v2303
    %v2342 = vmul.f32 %v1947, %v2307
    %v2343 = vmul.f32 %v1953, %v2311
    %v2344 = vmul.f32 %v1957, %v2315
    %v2345 = vmul.f32 %v1963, %v2319
    %v2346 = vmul.f32 %v1967, %v2323
    %v2347 = vmul.f32 %v1973, %v2327
    %v2348 = vmul.f32 %v1977, %v2331
    %v2349 = vmul.f32 %v1905, %v917
    %v2350 = vmul.f32 %v1909, %v921
    %v2351 = vmul.f32 %v1915, %v927
    %v2352 = vmul.f32 %v1919, %v931
    %v2353 = vmul.f32 %v1925, %v937
    %v2354 = vmul.f32 %v1929, %v941
    %v2355 = vmul.f32 %v1935, %v947
    %v2356 = vmul.f32 %v1939, %v951
    %v2357 = vmul.f32 %v1945, %v957
    %v2358 = vmul.f32 %v1949, %v961
    %v2359 = vmul.f32 %v1955, %v967
    %v2360 = vmul.f32 %v1959, %v971
    %v2361 = vmul.f32 %v1965, %v977
    %v2362 = vmul.f32 %v1969, %v981
    %v2363 = vmul.f32 %v1975, %v987
    %v2364 = vmul.f32 %v1979, %v991
    %v2365 = vadd.f32 %v2333, %v2349
    %v2366 = vadd.f32 %v2334, %v2350
    %v2367 = vadd.f32 %v2335, %v2351
    %v2368 = vadd.f32 %v2336, %v2352
    %v2369 = vadd.f32 %v2337, %v2353
    %v2370 = vadd.f32 %v2338, %v2354
    %v2371 = vadd.f32 %v2339, %v2355
    %v2372 = vadd.f32 %v2340, %v2356
    %v2373 = vadd.f32 %v2341, %v2357
    %v2374 = vadd.f32 %v2342, %v2358
    %v2375 = vadd.f32 %v2343, %v2359
    %v2376 = vadd.f32 %v2344, %v2360
    %v2377 = vadd.f32 %v2345, %v2361
    %v2378 = vadd.f32 %v2346, %v2362
    %v2379 = vadd.f32 %v2347, %v2363
    %v2380 = vadd.f32 %v2348, %v2364
    %v2381 = vpack.c.bf16 %v2366, %v2365
    %v2382 = vpack.c.bf16 %v2368, %v2367
    %v2383 = vpack.c.bf16 %v2370, %v2369
    %v2384 = vpack.c.bf16 %v2372, %v2371
    %v2385 = vpack.c.bf16 %v2374, %v2373
    %v2386 = vpack.c.bf16 %v2376, %v2375
    %v2387 = vpack.c.bf16 %v2378, %v2377
    %v2388 = vpack.c.bf16 %v2380, %v2379
    %2389 = vst [vmem:[#allocation3 + $0x18] sm:$0xff] %v2381
    %2390 = vst [vmem:[#allocation3 + $0x38] sm:$0xff] %v2382
    %2391 = vst [vmem:[#allocation3 + $0x58] sm:$0xff] %v2383
    %2392 = vst [vmem:[#allocation3 + $0x78] sm:$0xff] %v2384
    %2393 = vst [vmem:[#allocation3 + $0x98] sm:$0xff] %v2385
    %2394 = vst [vmem:[#allocation3 + $0xb8] sm:$0xff] %v2386
    %2395 = vst [vmem:[#allocation3 + $0xd8] sm:$0xff] %v2387
    %2396 = vst [vmem:[#allocation3 + $0xf8] sm:$0xff] %v2388
    %v2397 = vld [vmem:[#allocation4] sm:$0xff]
    %v2398 = vld [vmem:[#allocation4 + $0x8] sm:$0xff]
    %v2399 = vld [vmem:[#allocation4 + $0x10] sm:$0xff]
    %v2400 = vld [vmem:[#allocation4 + $0x18] sm:$0xff]
    %v2401 = vld [vmem:[#allocation3] sm:$0xff]
    %v2402 = vld [vmem:[#allocation3 + $0x8] sm:$0xff]
    %v2403 = vld [vmem:[#allocation3 + $0x10] sm:$0xff]
    %v2404 = vld [vmem:[#allocation3 + $0x18] sm:$0xff]
    %v2405 = vld [vmem:[#allocation3 + $0x20] sm:$0xff]
    %v2406 = vld [vmem:[#allocation3 + $0x28] sm:$0xff]
    %v2407 = vld [vmem:[#allocation3 + $0x30] sm:$0xff]
    %v2408 = vld [vmem:[#allocation3 + $0x38] sm:$0xff]
    %v2409 = vld [vmem:[#allocation3 + $0x40] sm:$0xff]
    %v2410 = vld [vmem:[#allocation3 + $0x48] sm:$0xff]
    %v2411 = vld [vmem:[#allocation3 + $0x50] sm:$0xff]
    %v2412 = vld [vmem:[#allocation3 + $0x58] sm:$0xff]
    %v2413 = vld [vmem:[#allocation3 + $0x60] sm:$0xff]
    %v2414 = vld [vmem:[#allocation3 + $0x68] sm:$0xff]
    %v2415 = vld [vmem:[#allocation3 + $0x70] sm:$0xff]
    %v2416 = vld [vmem:[#allocation3 + $0x78] sm:$0xff]
    %v2417 = vld [vmem:[#allocation3 + $0x80] sm:$0xff]
    %v2418 = vld [vmem:[#allocation3 + $0x88] sm:$0xff]
    %v2419 = vld [vmem:[#allocation3 + $0x90] sm:$0xff]
    %v2420 = vld [vmem:[#allocation3 + $0x98] sm:$0xff]
    %v2421 = vld [vmem:[#allocation3 + $0xa0] sm:$0xff]
    %v2422 = vld [vmem:[#allocation3 + $0xa8] sm:$0xff]
    %v2423 = vld [vmem:[#allocation3 + $0xb0] sm:$0xff]
    %v2424 = vld [vmem:[#allocation3 + $0xb8] sm:$0xff]
    %v2425 = vld [vmem:[#allocation3 + $0xc0] sm:$0xff]
    %v2426 = vld [vmem:[#allocation3 + $0xc8] sm:$0xff]
    %v2427 = vld [vmem:[#allocation3 + $0xd0] sm:$0xff]
    %v2428 = vld [vmem:[#allocation3 + $0xd8] sm:$0xff]
    %v2429 = vld [vmem:[#allocation3 + $0xe0] sm:$0xff]
    %v2430 = vld [vmem:[#allocation3 + $0xe8] sm:$0xff]
    %v2431 = vld [vmem:[#allocation3 + $0xf0] sm:$0xff]
    %v2432 = vld [vmem:[#allocation3 + $0xf8] sm:$0xff]
    %2433 = vmatprep.subr.bf16.mxu0 %v2402
    %2434 = vmatpush1.bf16.msra.mxu0 %v2401
    %2435 = vmatprep.subr.bf16.mxu0 %v2406
    %2436 = vmatpush1.bf16.msra.mxu0 %v2405
    %2437 = vmatprep.subr.bf16.mxu0 %v2410
    %2438 = vmatpush1.bf16.msra.mxu0 %v2409
    %2439 = vmatprep.subr.bf16.mxu0 %v2414
    %2440 = vmatpush1.bf16.msra.mxu0 %v2413
    %2441 = vmatprep.subr.bf16.mxu0 %v2418
    %2442 = vmatpush1.bf16.msra.mxu0 %v2417
    %2443 = vmatprep.subr.bf16.mxu0 %v2422
    %2444 = vmatpush1.bf16.msra.mxu0 %v2421
    %2445 = vmatprep.subr.bf16.mxu0 %v2426
    %2446 = vmatpush1.bf16.msra.mxu0 %v2425
    %2447 = vmatprep.subr.bf16.mxu0 %v2430
    %2448 = vmatpush1.bf16.msra.mxu0 %v2429
    %2449 = vmatprep.subr.bf16.mxu0 0
    %2450 = vmatpush1.bf16.msra.mxu0 0
    %2451 = vmatprep.subr.bf16.mxu0 0
    %2452 = vmatpush1.bf16.msra.mxu0 0
    %2453 = vmatprep.subr.bf16.mxu0 0
    %2454 = vmatpush1.bf16.msra.mxu0 0
    %2455 = vmatprep.subr.bf16.mxu0 0
    %2456 = vmatpush1.bf16.msra.mxu0 0
    %2457 = vmatprep.subr.bf16.mxu0 0
    %2458 = vmatpush1.bf16.msra.mxu0 0
    %2459 = vmatprep.subr.bf16.mxu0 0
    %2460 = vmatpush1.bf16.msra.mxu0 0
    %2461 = vmatprep.subr.bf16.mxu0 0
    %2462 = vmatpush1.bf16.msra.mxu0 0
    %2463 = vmatprep.subr.bf16.mxu0 0
    %2464 = vmatpush1.bf16.msra.mxu0 0
    %2465 = vmatprep.mubr.bf16.mxu0 0
    %2466 = vmatmul.mubr.bf16.gmra.mrb[0].mxu0 %v591
    %v2467 = vpop.f32.mrb[0].mxu0
    %v2468 = vadd.f32 0.0, %v2467
    %v2469 = vpop.f32.mrb[0].mxu0
    %v2470 = vadd.f32 0.0, %v2469
    %v2471 = vpop.f32.mrb[0].mxu0
    %v2472 = vpop.f32.mrb[0].mxu0
    %2473 = vdwg.mxu0
    %2474 = vmatprep.subr.bf16.mxu0 %v2404
    %2475 = vmatpush1.bf16.msra.mxu0 %v2403
    %2476 = vmatprep.subr.bf16.mxu0 %v2408
    %2477 = vmatpush1.bf16.msra.mxu0 %v2407
    %2478 = vmatprep.subr.bf16.mxu0 %v2412
    %2479 = vmatpush1.bf16.msra.mxu0 %v2411
    %2480 = vmatprep.subr.bf16.mxu0 %v2416
    %2481 = vmatpush1.bf16.msra.mxu0 %v2415
    %2482 = vmatprep.subr.bf16.mxu0 %v2420
    %2483 = vmatpush1.bf16.msra.mxu0 %v2419
    %2484 = vmatprep.subr.bf16.mxu0 %v2424
    %2485 = vmatpush1.bf16.msra.mxu0 %v2423
    %2486 = vmatprep.subr.bf16.mxu0 %v2428
    %2487 = vmatpush1.bf16.msra.mxu0 %v2427
    %2488 = vmatprep.subr.bf16.mxu0 %v2432
    %2489 = vmatpush1.bf16.msra.mxu0 %v2431
    %2490 = vmatprep.subr.bf16.mxu0 0
    %2491 = vmatpush1.bf16.msra.mxu0 0
    %2492 = vmatprep.subr.bf16.mxu0 0
    %2493 = vmatpush1.bf16.msra.mxu0 0
    %2494 = vmatprep.subr.bf16.mxu0 0
    %2495 = vmatpush1.bf16.msra.mxu0 0
    %2496 = vmatprep.subr.bf16.mxu0 0
    %2497 = vmatpush1.bf16.msra.mxu0 0
    %2498 = vmatprep.subr.bf16.mxu0 0
    %2499 = vmatpush1.bf16.msra.mxu0 0
    %2500 = vmatprep.subr.bf16.mxu0 0
    %2501 = vmatpush1.bf16.msra.mxu0 0
    %2502 = vmatprep.subr.bf16.mxu0 0
    %2503 = vmatpush1.bf16.msra.mxu0 0
    %2504 = vmatprep.subr.bf16.mxu0 0
    %2505 = vmatpush1.bf16.msra.mxu0 0
    %2506 = vmatprep.mubr.bf16.mxu0 0
    %2507 = vmatmul.mubr.bf16.gmra.mrb[0].mxu0 %v591
    %v2508 = vpop.f32.mrb[0].mxu0
    %v2509 = vadd.f32 0.0, %v2508
    %v2510 = vpop.f32.mrb[0].mxu0
    %v2511 = vadd.f32 0.0, %v2510
    %v2512 = vpop.f32.mrb[0].mxu0
    %v2513 = vpop.f32.mrb[0].mxu0
    %2514 = vdwg.mxu0
    %v2515 = vadd.f32 %v2397, %v2468
    %v2516 = vadd.f32 %v2398, %v2470
    %v2517 = vadd.f32 %v2399, %v2509
    %v2518 = vadd.f32 %v2400, %v2511
    %2519 = vst [vmem:[#allocation4] sm:$0xff] %v2515
    %2520 = vst [vmem:[#allocation4 + $0x8] sm:$0xff] %v2516
    %2521 = vst [vmem:[#allocation4 + $0x10] sm:$0xff] %v2517
    %2522 = vst [vmem:[#allocation4 + $0x18] sm:$0xff] %v2518
    // Predicated region
    $region74: #{tpu_custom_call.1} parent=1 // pred_check
      %p2523 = pneg %p90
    $region75: #{tpu_custom_call.1} parent=1 // pred_check_branch
      %2525 = sbr.rel (%p2523) target = $region77
    $region76: #{tpu_custom_call.1} parent=1 // pred_region
      %v2526 = vld [vmem:[#allocation4] sm:$0xff]
      %v2527 = vld [vmem:[#allocation4 + $0x8] sm:$0xff]
      %v2528 = vld [vmem:[#allocation4 + $0x10] sm:$0xff]
      %v2529 = vld [vmem:[#allocation4 + $0x18] sm:$0xff]
      %v2530 = vld [vmem:[%s0] sm:$0xff]
      %v2531 = vadd.f32 %v2530, %v2526
      %v2532 = vld [vmem:[%s1] sm:$0xff]
      %v2533 = vld [vmem:[%s1 + $0x8] sm:$0xff]
      %v2534 = vld [vmem:[%s1 + $0x10] sm:$0xff]
      %v2535 = vadd.f32 %v2532, %v2527
      %v2536 = vadd.f32 %v2533, %v2528
      %v2537 = vadd.f32 %v2534, %v2529
      %v2538 = vld [vmem:[#allocation10] sm:$0xff]
      %v2539 = vld [vmem:[#allocation10 + $0x8] sm:$0xf]
      %v2540 = vld [vmem:[#allocation10 + $0xc] sm:$0xff]
      %v2541 = vld [vmem:[#allocation10 + $0x14] sm:$0xf]
      %v2542 = vld [vmem:[#allocation10 + $0x18] sm:$0xff]
      %v2543 = vld [vmem:[#allocation10 + $0x20] sm:$0xf]
      %v2544 = vld [vmem:[#allocation10 + $0x24] sm:$0xff]
      %v2545 = vld [vmem:[#allocation10 + $0x2c] sm:$0xf]
      %v2546 = vld [vmem:[#allocation10 + $0x30] sm:$0xff]
      %v2547 = vld [vmem:[#allocation10 + $0x38] sm:$0xf]
      %v2548 = vld [vmem:[#allocation10 + $0x3c] sm:$0xff]
      %v2549 = vld [vmem:[#allocation10 + $0x44] sm:$0xf]
      %v2550 = vld [vmem:[#allocation10 + $0x48] sm:$0xff]
      %v2551 = vld [vmem:[#allocation10 + $0x50] sm:$0xf]
      %v2552 = vld [vmem:[#allocation10 + $0x54] sm:$0xff]
      %v2553 = vld [vmem:[#allocation10 + $0x5c] sm:$0xf]
      %v2554 = vld [vmem:[#allocation10 + $0x60] sm:$0xff]
      %v2555 = vld [vmem:[#allocation10 + $0x68] sm:$0xf]
      %v2556 = vld [vmem:[#allocation10 + $0x6c] sm:$0xff]
      %v2557 = vld [vmem:[#allocation10 + $0x74] sm:$0xf]
      %v2558 = vld [vmem:[#allocation10 + $0x78] sm:$0xff]
      %v2559 = vld [vmem:[#allocation10 + $0x80] sm:$0xf]
      %v2560 = vld [vmem:[#allocation10 + $0x84] sm:$0xff]
      %v2561 = vld [vmem:[#allocation10 + $0x8c] sm:$0xf]
      %v2562 = vld [vmem:[#allocation10 + $0x90] sm:$0xff]
      %v2563 = vld [vmem:[#allocation10 + $0x98] sm:$0xf]
      %v2564 = vld [vmem:[#allocation10 + $0x9c] sm:$0xff]
      %v2565 = vld [vmem:[#allocation10 + $0xa4] sm:$0xf]
      %v2566 = vld [vmem:[#allocation10 + $0xa8] sm:$0xff]
      %v2567 = vld [vmem:[#allocation10 + $0xb0] sm:$0xf]
      %v2568 = vld [vmem:[#allocation10 + $0xb4] sm:$0xff]
      %v2569 = vld [vmem:[#allocation10 + $0xbc] sm:$0xf]
      %v2570 = vld [vmem:[#allocation10 + $0xc0] sm:$0xff]
      %v2571 = vld [vmem:[#allocation10 + $0xc8] sm:$0xf]
      %v2572 = vld [vmem:[#allocation10 + $0xcc] sm:$0xff]
      %v2573 = vld [vmem:[#allocation10 + $0xd4] sm:$0xf]
      %v2574 = vld [vmem:[#allocation10 + $0xd8] sm:$0xff]
      %v2575 = vld [vmem:[#allocation10 + $0xe0] sm:$0xf]
      %v2576 = vld [vmem:[#allocation10 + $0xe4] sm:$0xff]
      %v2577 = vld [vmem:[#allocation10 + $0xec] sm:$0xf]
      %v2578 = vld [vmem:[#allocation10 + $0xf0] sm:$0xff]
      %v2579 = vld [vmem:[#allocation10 + $0xf8] sm:$0xf]
      %v2580 = vld [vmem:[#allocation10 + $0xfc] sm:$0xff]
      %v2581 = vld [vmem:[#allocation10 + $0x104] sm:$0xf]
      %v2582 = vld [vmem:[#allocation10 + $0x108] sm:$0xff]
      %v2583 = vld [vmem:[#allocation10 + $0x110] sm:$0xf]
      %v2584 = vld [vmem:[#allocation10 + $0x114] sm:$0xff]
      %v2585 = vld [vmem:[#allocation10 + $0x11c] sm:$0xf]
      %v2586 = vld [vmem:[#allocation10 + $0x120] sm:$0xff]
      %v2587 = vld [vmem:[#allocation10 + $0x128] sm:$0xf]
      %v2588 = vld [vmem:[#allocation10 + $0x12c] sm:$0xff]
      %v2589 = vld [vmem:[#allocation10 + $0x134] sm:$0xf]
      %v2590 = vld [vmem:[#allocation10 + $0x138] sm:$0xff]
      %v2591 = vld [vmem:[#allocation10 + $0x140] sm:$0xf]
      %v2592 = vld [vmem:[#allocation10 + $0x144] sm:$0xff]
      %v2593 = vld [vmem:[#allocation10 + $0x14c] sm:$0xf]
      %v2594 = vld [vmem:[#allocation10 + $0x150] sm:$0xff]
      %v2595 = vld [vmem:[#allocation10 + $0x158] sm:$0xf]
      %v2596 = vld [vmem:[#allocation10 + $0x15c] sm:$0xff]
      %v2597 = vld [vmem:[#allocation10 + $0x164] sm:$0xf]
      %v2598 = vld [vmem:[#allocation10 + $0x168] sm:$0xff]
      %v2599 = vld [vmem:[#allocation10 + $0x170] sm:$0xf]
      %v2600 = vld [vmem:[#allocation10 + $0x174] sm:$0xff]
      %v2601 = vld [vmem:[#allocation10 + $0x17c] sm:$0xf]
      %v2602 = vld [vmem:[#allocation10 + $0x180] sm:$0xff]
      %v2603 = vld [vmem:[#allocation10 + $0x188] sm:$0xf]
      %v2604 = vld [vmem:[#allocation10 + $0x18c] sm:$0xff]
      %v2605 = vld [vmem:[#allocation10 + $0x194] sm:$0xf]
      %v2606 = vld [vmem:[#allocation10 + $0x198] sm:$0xff]
      %v2607 = vld [vmem:[#allocation10 + $0x1a0] sm:$0xf]
      %v2608 = vld [vmem:[#allocation10 + $0x1a4] sm:$0xff]
      %v2609 = vld [vmem:[#allocation10 + $0x1ac] sm:$0xf]
      %v2610 = vld [vmem:[#allocation10 + $0x1b0] sm:$0xff]
      %v2611 = vld [vmem:[#allocation10 + $0x1b8] sm:$0xf]
      %v2612 = vld [vmem:[#allocation10 + $0x1bc] sm:$0xff]
      %v2613 = vld [vmem:[#allocation10 + $0x1c4] sm:$0xf]
      %v2614 = vld [vmem:[#allocation10 + $0x1c8] sm:$0xff]
      %v2615 = vld [vmem:[#allocation10 + $0x1d0] sm:$0xf]
      %v2616 = vld [vmem:[#allocation10 + $0x1d4] sm:$0xff]
      %v2617 = vld [vmem:[#allocation10 + $0x1dc] sm:$0xf]
      %v2618 = vld [vmem:[#allocation10 + $0x1e0] sm:$0xff]
      %v2619 = vld [vmem:[#allocation10 + $0x1e8] sm:$0xf]
      %v2620 = vld [vmem:[#allocation10 + $0x1ec] sm:$0xff]
      %v2621 = vld [vmem:[#allocation10 + $0x1f4] sm:$0xf]
      %v2622 = vld [vmem:[#allocation10 + $0x1f8] sm:$0xff]
      %v2623 = vld [vmem:[#allocation10 + $0x200] sm:$0xf]
      %v2624 = vld [vmem:[#allocation10 + $0x204] sm:$0xff]
      %v2625 = vld [vmem:[#allocation10 + $0x20c] sm:$0xf]
      %v2626 = vld [vmem:[#allocation10 + $0x210] sm:$0xff]
      %v2627 = vld [vmem:[#allocation10 + $0x218] sm:$0xf]
      %v2628 = vld [vmem:[#allocation10 + $0x21c] sm:$0xff]
      %v2629 = vld [vmem:[#allocation10 + $0x224] sm:$0xf]
      %v2630 = vld [vmem:[#allocation10 + $0x228] sm:$0xff]
      %v2631 = vld [vmem:[#allocation10 + $0x230] sm:$0xf]
      %v2632 = vld [vmem:[#allocation10 + $0x234] sm:$0xff]
      %v2633 = vld [vmem:[#allocation10 + $0x23c] sm:$0xf]
      %v2634 = vpack.c.bf16 %v2535, %v2535
      %v2635 = vpack.c.bf16 %v2536, %v2536
      %v2636 = vpack.c.bf16 %v2537, %v2537
      %v2733 = vunpack.c.l.b16 %v2538
      %v2734 = vunpack.c.h.b16 %v2538
      %v2735 = vunpack.c.l.b16 %v2539
      %v2736 = vunpack.c.l.b16 %v2540
      %v2737 = vunpack.c.h.b16 %v2540
      %v2738 = vunpack.c.l.b16 %v2541
      %v2739 = vunpack.c.l.b16 %v2542
      %v2740 = vunpack.c.h.b16 %v2542
      %v2741 = vunpack.c.l.b16 %v2543
      %v2742 = vunpack.c.l.b16 %v2544
      %v2743 = vunpack.c.h.b16 %v2544
      %v2744 = vunpack.c.l.b16 %v2545
      %v2745 = vunpack.c.l.b16 %v2546
      %v2746 = vunpack.c.h.b16 %v2546
      %v2747 = vunpack.c.l.b16 %v2547
      %v2748 = vunpack.c.l.b16 %v2548
      %v2749 = vunpack.c.h.b16 %v2548
      %v2750 = vunpack.c.l.b16 %v2549
      %v2751 = vunpack.c.l.b16 %v2550
      %v2752 = vunpack.c.h.b16 %v2550
      %v2753 = vunpack.c.l.b16 %v2551
      %v2754 = vunpack.c.l.b16 %v2552
      %v2755 = vunpack.c.h.b16 %v2552
      %v2756 = vunpack.c.l.b16 %v2553
      %v2757 = vunpack.c.l.b16 %v2554
      %v2758 = vunpack.c.h.b16 %v2554
      %v2759 = vunpack.c.l.b16 %v2555
      %v2760 = vunpack.c.l.b16 %v2556
      %v2761 = vunpack.c.h.b16 %v2556
      %v2762 = vunpack.c.l.b16 %v2557
      %v2763 = vunpack.c.l.b16 %v2558
      %v2764 = vunpack.c.h.b16 %v2558
      %v2765 = vunpack.c.l.b16 %v2559
      %v2766 = vunpack.c.l.b16 %v2560
      %v2767 = vunpack.c.h.b16 %v2560
      %v2768 = vunpack.c.l.b16 %v2561
      %v2769 = vunpack.c.l.b16 %v2562
      %v2770 = vunpack.c.h.b16 %v2562
      %v2771 = vunpack.c.l.b16 %v2563
      %v2772 = vunpack.c.l.b16 %v2564
      %v2773 = vunpack.c.h.b16 %v2564
      %v2774 = vunpack.c.l.b16 %v2565
      %v2775 = vunpack.c.l.b16 %v2566
      %v2776 = vunpack.c.h.b16 %v2566
      %v2777 = vunpack.c.l.b16 %v2567
      %v2778 = vunpack.c.l.b16 %v2568
      %v2779 = vunpack.c.h.b16 %v2568
      %v2780 = vunpack.c.l.b16 %v2569
      %v2781 = vunpack.c.l.b16 %v2570
      %v2782 = vunpack.c.h.b16 %v2570
      %v2783 = vunpack.c.l.b16 %v2571
      %v2784 = vunpack.c.l.b16 %v2572
      %v2785 = vunpack.c.h.b16 %v2572
      %v2786 = vunpack.c.l.b16 %v2573
      %v2787 = vunpack.c.l.b16 %v2574
      %v2788 = vunpack.c.h.b16 %v2574
      %v2789 = vunpack.c.l.b16 %v2575
      %v2790 = vunpack.c.l.b16 %v2576
      %v2791 = vunpack.c.h.b16 %v2576
      %v2792 = vunpack.c.l.b16 %v2577
      %v2793 = vunpack.c.l.b16 %v2578
      %v2794 = vunpack.c.h.b16 %v2578
      %v2795 = vunpack.c.l.b16 %v2579
      %v2796 = vunpack.c.l.b16 %v2580
      %v2797 = vunpack.c.h.b16 %v2580
      %v2798 = vunpack.c.l.b16 %v2581
      %v2799 = vunpack.c.l.b16 %v2582
      %v2800 = vunpack.c.h.b16 %v2582
      %v2801 = vunpack.c.l.b16 %v2583
      %v2802 = vunpack.c.l.b16 %v2584
      %v2803 = vunpack.c.h.b16 %v2584
      %v2804 = vunpack.c.l.b16 %v2585
      %v2805 = vunpack.c.l.b16 %v2586
      %v2806 = vunpack.c.h.b16 %v2586
      %v2807 = vunpack.c.l.b16 %v2587
      %v2808 = vunpack.c.l.b16 %v2588
      %v2809 = vunpack.c.h.b16 %v2588
      %v2810 = vunpack.c.l.b16 %v2589
      %v2811 = vunpack.c.l.b16 %v2590
      %v2812 = vunpack.c.h.b16 %v2590
      %v2813 = vunpack.c.l.b16 %v2591
      %v2814 = vunpack.c.l.b16 %v2592
      %v2815 = vunpack.c.h.b16 %v2592
      %v2816 = vunpack.c.l.b16 %v2593
      %v2817 = vunpack.c.l.b16 %v2594
      %v2818 = vunpack.c.h.b16 %v2594
      %v2819 = vunpack.c.l.b16 %v2595
      %v2820 = vunpack.c.l.b16 %v2596
      %v2821 = vunpack.c.h.b16 %v2596
      %v2822 = vunpack.c.l.b16 %v2597
      %v2823 = vunpack.c.l.b16 %v2598
      %v2824 = vunpack.c.h.b16 %v2598
      %v2825 = vunpack.c.l.b16 %v2599
      %v2826 = vunpack.c.l.b16 %v2600
      %v2827 = vunpack.c.h.b16 %v2600
      %v2828 = vunpack.c.l.b16 %v2601
      %v2829 = vunpack.c.l.b16 %v2602
      %v2830 = vunpack.c.h.b16 %v2602
      %v2831 = vunpack.c.l.b16 %v2603
      %v2832 = vunpack.c.l.b16 %v2604
      %v2833 = vunpack.c.h.b16 %v2604
      %v2834 = vunpack.c.l.b16 %v2605
      %v2835 = vunpack.c.l.b16 %v2606
      %v2836 = vunpack.c.h.b16 %v2606
      %v2837 = vunpack.c.l.b16 %v2607
      %v2838 = vunpack.c.l.b16 %v2608
      %v2839 = vunpack.c.h.b16 %v2608
      %v2840 = vunpack.c.l.b16 %v2609
      %v2841 = vunpack.c.l.b16 %v2610
      %v2842 = vunpack.c.h.b16 %v2610
      %v2843 = vunpack.c.l.b16 %v2611
      %v2844 = vunpack.c.l.b16 %v2612
      %v2845 = vunpack.c.h.b16 %v2612
      %v2846 = vunpack.c.l.b16 %v2613
      %v2847 = vunpack.c.l.b16 %v2614
      %v2848 = vunpack.c.h.b16 %v2614
      %v2849 = vunpack.c.l.b16 %v2615
      %v2850 = vunpack.c.l.b16 %v2616
      %v2851 = vunpack.c.h.b16 %v2616
      %v2852 = vunpack.c.l.b16 %v2617
      %v2853 = vunpack.c.l.b16 %v2618
      %v2854 = vunpack.c.h.b16 %v2618
      %v2855 = vunpack.c.l.b16 %v2619
      %v2856 = vunpack.c.l.b16 %v2620
      %v2857 = vunpack.c.h.b16 %v2620
      %v2858 = vunpack.c.l.b16 %v2621
      %v2859 = vunpack.c.l.b16 %v2622
      %v2860 = vunpack.c.h.b16 %v2622
      %v2861 = vunpack.c.l.b16 %v2623
      %v2862 = vunpack.c.l.b16 %v2624
      %v2863 = vunpack.c.h.b16 %v2624
      %v2864 = vunpack.c.l.b16 %v2625
      %v2865 = vunpack.c.l.b16 %v2626
      %v2866 = vunpack.c.h.b16 %v2626
      %v2867 = vunpack.c.l.b16 %v2627
      %v2868 = vunpack.c.l.b16 %v2628
      %v2869 = vunpack.c.h.b16 %v2628
      %v2870 = vunpack.c.l.b16 %v2629
      %v2871 = vunpack.c.l.b16 %v2630
      %v2872 = vunpack.c.h.b16 %v2630
      %v2873 = vunpack.c.l.b16 %v2631
      %v2874 = vunpack.c.l.b16 %v2632
      %v2875 = vunpack.c.h.b16 %v2632
      %v2876 = vunpack.c.l.b16 %v2633
      %v2877 = vpack.c.b16 %v2736, %v2733
      %v2878 = vpack.c.b16 %v2737, %v2734
      %v2879 = vpack.c.b16 %v2738, %v2735
      %v2880 = vpack.c.b16 %v2742, %v2739
      %v2881 = vpack.c.b16 %v2743, %v2740
      %v2882 = vpack.c.b16 %v2744, %v2741
      %v2883 = vpack.c.b16 %v2748, %v2745
      %v2884 = vpack.c.b16 %v2749, %v2746
      %v2885 = vpack.c.b16 %v2750, %v2747
      %v2886 = vpack.c.b16 %v2754, %v2751
      %v2887 = vpack.c.b16 %v2755, %v2752
      %v2888 = vpack.c.b16 %v2756, %v2753
      %v2889 = vpack.c.b16 %v2760, %v2757
      %v2890 = vpack.c.b16 %v2761, %v2758
      %v2891 = vpack.c.b16 %v2762, %v2759
      %v2892 = vpack.c.b16 %v2766, %v2763
      %v2893 = vpack.c.b16 %v2767, %v2764
      %v2894 = vpack.c.b16 %v2768, %v2765
      %v2895 = vpack.c.b16 %v2772, %v2769
      %v2896 = vpack.c.b16 %v2773, %v2770
      %v2897 = vpack.c.b16 %v2774, %v2771
      %v2898 = vpack.c.b16 %v2778, %v2775
      %v2899 = vpack.c.b16 %v2779, %v2776
      %v2900 = vpack.c.b16 %v2780, %v2777
      %v2901 = vpack.c.b16 %v2784, %v2781
      %v2902 = vpack.c.b16 %v2785, %v2782
      %v2903 = vpack.c.b16 %v2786, %v2783
      %v2904 = vpack.c.b16 %v2790, %v2787
      %v2905 = vpack.c.b16 %v2791, %v2788
      %v2906 = vpack.c.b16 %v2792, %v2789
      %v2907 = vpack.c.b16 %v2796, %v2793
      %v2908 = vpack.c.b16 %v2797, %v2794
      %v2909 = vpack.c.b16 %v2798, %v2795
      %v2910 = vpack.c.b16 %v2802, %v2799
      %v2911 = vpack.c.b16 %v2803, %v2800
      %v2912 = vpack.c.b16 %v2804, %v2801
      %v2913 = vpack.c.b16 %v2808, %v2805
      %v2914 = vpack.c.b16 %v2809, %v2806
      %v2915 = vpack.c.b16 %v2810, %v2807
      %v2916 = vpack.c.b16 %v2814, %v2811
      %v2917 = vpack.c.b16 %v2815, %v2812
      %v2918 = vpack.c.b16 %v2816, %v2813
      %v2919 = vpack.c.b16 %v2820, %v2817
      %v2920 = vpack.c.b16 %v2821, %v2818
      %v2921 = vpack.c.b16 %v2822, %v2819
      %v2922 = vpack.c.b16 %v2826, %v2823
      %v2923 = vpack.c.b16 %v2827, %v2824
      %v2924 = vpack.c.b16 %v2828, %v2825
      %v2925 = vpack.c.b16 %v2832, %v2829
      %v2926 = vpack.c.b16 %v2833, %v2830
      %v2927 = vpack.c.b16 %v2834, %v2831
      %v2928 = vpack.c.b16 %v2838, %v2835
      %v2929 = vpack.c.b16 %v2839, %v2836
      %v2930 = vpack.c.b16 %v2840, %v2837
      %v2931 = vpack.c.b16 %v2844, %v2841
      %v2932 = vpack.c.b16 %v2845, %v2842
      %v2933 = vpack.c.b16 %v2846, %v2843
      %v2934 = vpack.c.b16 %v2850, %v2847
      %v2935 = vpack.c.b16 %v2851, %v2848
      %v2936 = vpack.c.b16 %v2852, %v2849
      %v2937 = vpack.c.b16 %v2856, %v2853
      %v2938 = vpack.c.b16 %v2857, %v2854
      %v2939 = vpack.c.b16 %v2858, %v2855
      %v2940 = vpack.c.b16 %v2862, %v2859
      %v2941 = vpack.c.b16 %v2863, %v2860
      %v2942 = vpack.c.b16 %v2864, %v2861
      %v2943 = vpack.c.b16 %v2868, %v2865
      %v2944 = vpack.c.b16 %v2869, %v2866
      %v2945 = vpack.c.b16 %v2870, %v2867
      %v2946 = vpack.c.b16 %v2874, %v2871
      %v2947 = vpack.c.b16 %v2875, %v2872
      %v2948 = vpack.c.b16 %v2876, %v2873
      %3021 = vmatprep.subr.bf16.mxu0 %v2878
      %3022 = vmatpush1.bf16.msra.mxu0 %v2877
      %3023 = vmatprep.subr.bf16.mxu0 %v2881
      %3024 = vmatpush1.bf16.msra.mxu0 %v2880
      %3025 = vmatprep.subr.bf16.mxu0 %v2884
      %3026 = vmatpush1.bf16.msra.mxu0 %v2883
      %3027 = vmatprep.subr.bf16.mxu0 %v2887
      %3028 = vmatpush1.bf16.msra.mxu0 %v2886
      %3029 = vmatprep.subr.bf16.mxu0 %v2890
      %3030 = vmatpush1.bf16.msra.mxu0 %v2889
      %3031 = vmatprep.subr.bf16.mxu0 %v2893
      %3032 = vmatpush1.bf16.msra.mxu0 %v2892
      %3033 = vmatprep.subr.bf16.mxu0 %v2896
      %3034 = vmatpush1.bf16.msra.mxu0 %v2895
      %3035 = vmatprep.subr.bf16.mxu0 %v2899
      %3036 = vmatpush1.bf16.msra.mxu0 %v2898
      %3037 = vmatprep.subr.bf16.mxu0 %v2902
      %3038 = vmatpush1.bf16.msra.mxu0 %v2901
      %3039 = vmatprep.subr.bf16.mxu0 %v2905
      %3040 = vmatpush1.bf16.msra.mxu0 %v2904
      %3041 = vmatprep.subr.bf16.mxu0 %v2908
      %3042 = vmatpush1.bf16.msra.mxu0 %v2907
      %3043 = vmatprep.subr.bf16.mxu0 %v2911
      %3044 = vmatpush1.bf16.msra.mxu0 %v2910
      %3045 = vmatprep.subr.bf16.mxu0 %v2914
      %3046 = vmatpush1.bf16.msra.mxu0 %v2913
      %3047 = vmatprep.subr.bf16.mxu0 %v2917
      %3048 = vmatpush1.bf16.msra.mxu0 %v2916
      %3049 = vmatprep.subr.bf16.mxu0 %v2920
      %3050 = vmatpush1.bf16.msra.mxu0 %v2919
      %3051 = vmatprep.subr.bf16.mxu0 %v2923
      %3052 = vmatpush1.bf16.msra.mxu0 %v2922
      %3053 = vmatprep.mubr.bf16.mxu0 %v2635
      %3054 = vmatmul.mubr.bf16.gmra.mrb[0].mxu0 %v2634
      %v3055 = vpop.f32.mrb[0].mxu0
      %v3056 = vadd.f32 0.0, %v3055
      %v3057 = vpop.f32.mrb[0].mxu0
      %v3058 = vadd.f32 0.0, %v3057
      %v3059 = vpop.f32.mrb[0].mxu0
      %v3060 = vpop.f32.mrb[0].mxu0
      %3061 = vdwg.mxu0
      %3062 = vmatprep.subr.bf16.mxu0 %v2926
      %3063 = vmatpush1.bf16.msra.mxu0 %v2925
      %3064 = vmatprep.subr.bf16.mxu0 %v2929
      %3065 = vmatpush1.bf16.msra.mxu0 %v2928
      %3066 = vmatprep.subr.bf16.mxu0 %v2932
      %3067 = vmatpush1.bf16.msra.mxu0 %v2931
      %3068 = vmatprep.subr.bf16.mxu0 %v2935
      %3069 = vmatpush1.bf16.msra.mxu0 %v2934
      %3070 = vmatprep.subr.bf16.mxu0 %v2938
      %3071 = vmatpush1.bf16.msra.mxu0 %v2937
      %3072 = vmatprep.subr.bf16.mxu0 %v2941
      %3073 = vmatpush1.bf16.msra.mxu0 %v2940
      %3074 = vmatprep.subr.bf16.mxu0 %v2944
      %3075 = vmatpush1.bf16.msra.mxu0 %v2943
      %3076 = vmatprep.subr.bf16.mxu0 %v2947
      %3077 = vmatpush1.bf16.msra.mxu0 %v2946
      %3078 = vmatprep.subr.bf16.mxu0 0
      %3079 = vmatpush1.bf16.msra.mxu0 0
      %3080 = vmatprep.subr.bf16.mxu0 0
      %3081 = vmatpush1.bf16.msra.mxu0 0
      %3082 = vmatprep.subr.bf16.mxu0 0
      %3083 = vmatpush1.bf16.msra.mxu0 0
      %3084 = vmatprep.subr.bf16.mxu0 0
      %3085 = vmatpush1.bf16.msra.mxu0 0
      %3086 = vmatprep.subr.bf16.mxu0 0
      %3087 = vmatpush1.bf16.msra.mxu0 0
      %3088 = vmatprep.subr.bf16.mxu0 0
      %3089 = vmatpush1.bf16.msra.mxu0 0
      %3090 = vmatprep.subr.bf16.mxu0 0
      %3091 = vmatpush1.bf16.msra.mxu0 0
      %3092 = vmatprep.subr.bf16.mxu0 0
      %3093 = vmatpush1.bf16.msra.mxu0 0
      %3094 = vmatprep.mubr.bf16.mxu0 0
      %3095 = vmatmul.mubr.bf16.gmra.mrb[0].mxu0 %v2636
      %v3096 = vpop.f32.mrb[0].mxu0
      %v3097 = vadd.f32 %v3056, %v3096
      %v3098 = vpop.f32.mrb[0].mxu0
      %v3099 = vadd.f32 %v3058, %v3098
      %v3100 = vpop.f32.mrb[0].mxu0
      %v3101 = vpop.f32.mrb[0].mxu0
      %3102 = vdwg.mxu0
      %3103 = vmatprep.subr.bf16.mxu0 0
      %3104 = vmatpush1.bf16.msra.mxu0 %v2879
      %3105 = vmatprep.subr.bf16.mxu0 0
      %3106 = vmatpush1.bf16.msra.mxu0 %v2882
      %3107 = vmatprep.subr.bf16.mxu0 0
      %3108 = vmatpush1.bf16.msra.mxu0 %v2885
      %3109 = vmatprep.subr.bf16.mxu0 0
      %3110 = vmatpush1.bf16.msra.mxu0 %v2888
      %3111 = vmatprep.subr.bf16.mxu0 0
      %3112 = vmatpush1.bf16.msra.mxu0 %v2891
      %3113 = vmatprep.subr.bf16.mxu0 0
      %3114 = vmatpush1.bf16.msra.mxu0 %v2894
      %3115 = vmatprep.subr.bf16.mxu0 0
      %3116 = vmatpush1.bf16.msra.mxu0 %v2897
      %3117 = vmatprep.subr.bf16.mxu0 0
      %3118 = vmatpush1.bf16.msra.mxu0 %v2900
      %3119 = vmatprep.subr.bf16.mxu0 0
      %3120 = vmatpush1.bf16.msra.mxu0 %v2903
      %3121 = vmatprep.subr.bf16.mxu0 0
      %3122 = vmatpush1.bf16.msra.mxu0 %v2906
      %3123 = vmatprep.subr.bf16.mxu0 0
      %3124 = vmatpush1.bf16.msra.mxu0 %v2909
      %3125 = vmatprep.subr.bf16.mxu0 0
      %3126 = vmatpush1.bf16.msra.mxu0 %v2912
      %3127 = vmatprep.subr.bf16.mxu0 0
      %3128 = vmatpush1.bf16.msra.mxu0 %v2915
      %3129 = vmatprep.subr.bf16.mxu0 0
      %3130 = vmatpush1.bf16.msra.mxu0 %v2918
      %3131 = vmatprep.subr.bf16.mxu0 0
      %3132 = vmatpush1.bf16.msra.mxu0 %v2921
      %3133 = vmatprep.subr.bf16.mxu0 0
      %3134 = vmatpush1.bf16.msra.mxu0 %v2924
      %3135 = vmatprep.mubr.bf16.mxu0 %v2635
      %3136 = vmatmul.mubr.bf16.gmra.mrb[0].mxu0 %v2634
      %v3137 = vpop.f32.mrb[0].mxu0
      %v3138 = vadd.f32 0.0, %v3137
      %v3139 = vpop.f32.mrb[0].mxu0
      %v3140 = vpop.f32.mrb[0].mxu0
      %v3141 = vpop.f32.mrb[0].mxu0
      %3142 = vdwg.mxu0
      %3143 = vmatprep.subr.bf16.mxu0 0
      %3144 = vmatpush1.bf16.msra.mxu0 %v2927
      %3145 = vmatprep.subr.bf16.mxu0 0
      %3146 = vmatpush1.bf16.msra.mxu0 %v2930
      %3147 = vmatprep.subr.bf16.mxu0 0
      %3148 = vmatpush1.bf16.msra.mxu0 %v2933
      %3149 = vmatprep.subr.bf16.mxu0 0
      %3150 = vmatpush1.bf16.msra.mxu0 %v2936
      %3151 = vmatprep.subr.bf16.mxu0 0
      %3152 = vmatpush1.bf16.msra.mxu0 %v2939
      %3153 = vmatprep.subr.bf16.mxu0 0
      %3154 = vmatpush1.bf16.msra.mxu0 %v2942
      %3155 = vmatprep.subr.bf16.mxu0 0
      %3156 = vmatpush1.bf16.msra.mxu0 %v2945
      %3157 = vmatprep.subr.bf16.mxu0 0
      %3158 = vmatpush1.bf16.msra.mxu0 %v2948
      %3159 = vmatprep.subr.bf16.mxu0 0
      %3160 = vmatpush1.bf16.msra.mxu0 0
      %3161 = vmatprep.subr.bf16.mxu0 0
      %3162 = vmatpush1.bf16.msra.mxu0 0
      %3163 = vmatprep.subr.bf16.mxu0 0
      %3164 = vmatpush1.bf16.msra.mxu0 0
      %3165 = vmatprep.subr.bf16.mxu0 0
      %3166 = vmatpush1.bf16.msra.mxu0 0
      %3167 = vmatprep.subr.bf16.mxu0 0
      %3168 = vmatpush1.bf16.msra.mxu0 0
      %3169 = vmatprep.subr.bf16.mxu0 0
      %3170 = vmatpush1.bf16.msra.mxu0 0
      %3171 = vmatprep.subr.bf16.mxu0 0
      %3172 = vmatpush1.bf16.msra.mxu0 0
      %3173 = vmatprep.subr.bf16.mxu0 0
      %3174 = vmatpush1.bf16.msra.mxu0 0
      %3175 = vmatprep.mubr.bf16.mxu0 0
      %3176 = vmatmul.mubr.bf16.gmra.mrb[0].mxu0 %v2636
      %v3177 = vpop.f32.mrb[0].mxu0
      %v3178 = vadd.f32 %v3138, %v3177
      %v3179 = vpop.f32.mrb[0].mxu0
      %v3180 = vpop.f32.mrb[0].mxu0
      %v3181 = vpop.f32.mrb[0].mxu0
      %3182 = vdwg.mxu0
      %v3183 = vmul.f32 %v2535, %v3097
      %v3184 = vmul.f32 %v2536, %v3099
      %v3185 = vmul.f32 %v2537, %v3178
      %v3186 = vadd.f32 %v3183, %v3184
      %v3187 = vadd.f32 %v3186, %v3185
      %v3188 = vadd.f32 %v2531, %v3187
      %3189 = vst [vmem:[#allocation11] sm:$0xff] %v3188
      %3190 = vst [vmem:[#allocation11 + $0x8] sm:$0xff] %v2535
      %3191 = vst [vmem:[#allocation11 + $0x10] sm:$0xff] %v2536
      %3192 = vst [vmem:[#allocation11 + $0x18] sm:$0xff] %v2537
    $region77: #{tpu_custom_call.1} parent=1 // pred_fallthru
      _
    // Predicated region
    $region78: #{tpu_custom_call.1} parent=1 // pred_check
      _
    $region79: #{tpu_custom_call.1} parent=1 // pred_check_branch
      %3194 = sbr.rel (0) target = $region81
    $region80: #{tpu_custom_call.1} parent=1 // pred_region
      %s3196 = ssub.s32 512, 512
      %3197 = vsyncadd [#allocation7], %s3196
      %s3199 = sshll.u32 [#allocation11], 4
      %s3200 = int_to_ptr.vmem [resolvable:$true] %s3199
      %3202 = dma.vmem_to_hbm [thread:$0]  %s3200, 512, %s14, [#allocation7]
    $region81: #{tpu_custom_call.1} parent=1 // pred_fallthru
      _
    // Predicated region
    $region82: #{tpu_custom_call.1} parent=1 // pred_check
      _
    $region83: #{tpu_custom_call.1} parent=1 // pred_check_branch
      %3204 = sbr.rel (0) target = $region85
    $region84: #{tpu_custom_call.1} parent=1 // pred_region
      %3205 = dma.done [#allocation7], 512
    $region85: #{tpu_custom_call.1} parent=1 // pred_fallthru
      _
    %3206 = vsyncpa [#allocation6], 1
    %3207 = vsyncpa [#allocation9], 1
    %3208 = vsyncpa [#allocation7], 1

</llo_original>
